<compile_context>
chip_gen: v7x
topology: tpu7x:2x2x1
jax: 0.10.0
libtpu: 0.0.40
codegen_flags: <defaults>
</compile_context>

<pallas_src>
import numpy as np
import jax
import jax.numpy as jnp
from jax.experimental import pallas as pl
from jax.experimental.pallas import tpu as pltpu


def _conv3x3_im2col(xpad, w_packed, r_out, width, cin):
    """3x3 'valid' conv on an already-padded window, as one fat MXU matmul.

    xpad     : (r_out + 2, width + 2, cin) bf16  (rows/cols already padded)
    w_packed : (9 * cin, cout) bf16  -- HWIO weights reshaped (dy, dx, cin)
               major-to-minor, with the folded BN scale baked in.
    returns  : (r_out, width, cout) f32
    """
    parts = []
    for dy in range(3):
        for dx in range(3):
            parts.append(xpad[dy:dy + r_out, dx:dx + width, :])
    # lane-aligned concat (each part is a multiple of 128 lanes) -> K = 9*cin
    patch = jnp.concatenate(parts, axis=-1)               # (r_out, width, 9*cin)
    cout = w_packed.shape[-1]
    acc = jnp.dot(patch.reshape(r_out * width, 9 * cin), w_packed,
                  preferred_element_type=jnp.float32)     # single MXU matmul
    return acc.reshape(r_out, width, cout)


def basic_block_kernel(xc_ref, xt_ref, xb_ref, w1_ref, w2_ref, b1_ref, b2_ref,
                       out_ref, xpad_ref, mid_ref):
    # xc_ref : (1, TH, W, C)  current row tile (doubles as the residual)
    # xt_ref : (1, 2,  W, C)  two rows directly above the tile (clamped)
    # xb_ref : (1, 2,  W, C)  two rows directly below the tile (clamped)
    # w*_ref : (9*C, C)       bf16 packed conv weights (BN scale folded in)
    # b*_ref : (1, 1, 1, C)   f32 folded BN bias
    # out_ref: (1, TH, W, C)
    # xpad_ref: (TH+4, W+2, C) bf16 scratch -- padded conv1 input window
    # mid_ref : (TH+2, W+2, C) bf16 scratch -- padded conv2 input window
    _, th, width, c = xc_ref.shape
    t = pl.program_id(1)
    nt = pl.num_programs(1)

    cur = xc_ref[0]                                        # (TH, W, C) f32

    # ---- stage conv1's padded input window (zero only the 1-px halo ring) --
    zcol = jnp.zeros((th + 4, 1, c), jnp.bfloat16)
    xpad_ref[:, 0:1, :] = zcol
    xpad_ref[:, width + 1:width + 2, :] = zcol
    # halo rows that fall outside the image are conv1's zero padding.
    top = xt_ref[0] * jnp.where(t == 0, 0.0, 1.0)
    bot = xb_ref[0] * jnp.where(t == nt - 1, 0.0, 1.0)
    xpad_ref[0:2, 1:width + 1, :] = top.astype(jnp.bfloat16)
    xpad_ref[2:th + 2, 1:width + 1, :] = cur.astype(jnp.bfloat16)
    xpad_ref[th + 2:th + 4, 1:width + 1, :] = bot.astype(jnp.bfloat16)

    # ---- conv1 (BN1 scale folded) + bias + ReLU, over TH+2 rows ------------
    h1 = _conv3x3_im2col(xpad_ref[...], w1_ref[...], th + 2, width, c)
    h1 = jnp.maximum(h1 + b1_ref[0, 0], 0.0)               # (TH+2, W, C) f32

    # intermediate rows outside the image are conv2's zero padding
    # (NOT conv1 applied to padded input) -> mask them out.
    row = jax.lax.broadcasted_iota(jnp.int32, (th + 2, 1, 1), 0)
    keep = jnp.logical_and(jnp.logical_or(t > 0, row > 0),
                           jnp.logical_or(t < nt - 1, row < th + 1))
    mid = jnp.where(keep, h1, 0.0).astype(jnp.bfloat16)

    # ---- stage conv2's padded input (ring zeroed, interior overwritten) ----
    zcol2 = jnp.zeros((th + 2, 1, c), jnp.bfloat16)
    mid_ref[:, 0:1, :] = zcol2
    mid_ref[:, width + 1:width + 2, :] = zcol2
    mid_ref[:, 1:width + 1, :] = mid

    # ---- conv2 (BN2 scale folded) + bias + residual + ReLU -----------------
    h2 = _conv3x3_im2col(mid_ref[...], w2_ref[...], th, width, c)
    out_ref[0] = jnp.maximum(h2 + b2_ref[0, 0] + cur, 0.0)


def _fold_bn(gamma, beta, mean, var, eps=1e-5):
    scale = gamma / jnp.sqrt(var + eps)
    bias = beta - mean * scale
    return scale, bias


def basic_block_pallas(x_nchw, params, *, tile_h=8):
    """BasicBlock forward.  x_nchw: (N, C, H, W) f32 -> (N, C, H, W) f32."""
    N, C, H, W = x_nchw.shape
    cout, cin = params["conv1_w"].shape[:2]
    assert cin == C and cout == C, (
        "kernel covers the default BasicBlock: stride=1, inplanes == planes")
    assert tile_h >= 2 and tile_h % 2 == 0 and H % tile_h == 0
    # TODO(synk): stride > 1 / downsample residual path of BasicBlock is not
    # implemented (default construction uses stride=1, identity residual).

    # NCHW -> NHWC (lane dim = channels).  Under jit these transposes fuse
    # with neighbouring ops; an NHWC model would skip them entirely.
    x = jnp.transpose(x_nchw, (0, 2, 3, 1))                 # (N, H, W, C)

    # Fold inference-mode BN into the convs: scale -> weights, bias -> add.
    w1 = jnp.transpose(params["conv1_w"], (2, 3, 1, 0))     # OIHW -> HWIO
    w2 = jnp.transpose(params["conv2_w"], (2, 3, 1, 0))
    s1, b1 = _fold_bn(params["bn1_g"], params["bn1_b"],
                      params["bn1_m"], params["bn1_v"])
    s2, b2 = _fold_bn(params["bn2_g"], params["bn2_b"],
                      params["bn2_m"], params["bn2_v"])
    w1p = (w1 * s1).reshape(9 * C, C).astype(jnp.bfloat16)  # (dy,dx,cin)-major
    w2p = (w2 * s2).reshape(9 * C, C).astype(jnp.bfloat16)
    b1 = b1.reshape(1, 1, 1, C).astype(jnp.float32)
    b2 = b2.reshape(1, 1, 1, C).astype(jnp.float32)

    grid = (N, H // tile_h)

    def cur_map(b, t):
        return (b, t, 0, 0)

    def top_map(b, t):   # 2-row block right above the tile (clamped; masked at t==0)
        return (b, jnp.maximum(t * (tile_h // 2) - 1, 0), 0, 0)

    def bot_map(b, t):   # 2-row block right below the tile (clamped; masked at last t)
        return (b, jnp.minimum((t + 1) * (tile_h // 2), H // 2 - 1), 0, 0)

    def whole2(b, t):
        return (0, 0)

    def whole4(b, t):
        return (0, 0, 0, 0)

    out = pl.pallas_call(
        basic_block_kernel,
        out_shape=jax.ShapeDtypeStruct((N, H, W, C), jnp.float32),
        grid=grid,
        in_specs=[
            pl.BlockSpec((1, tile_h, W, C), cur_map),   # current tile / residual
            pl.BlockSpec((1, 2, W, C), top_map),        # top halo rows
            pl.BlockSpec((1, 2, W, C), bot_map),        # bottom halo rows
            pl.BlockSpec((9 * C, C), whole2),           # packed conv1 weights
            pl.BlockSpec((9 * C, C), whole2),           # packed conv2 weights
            pl.BlockSpec((1, 1, 1, C), whole4),         # folded BN1 bias
            pl.BlockSpec((1, 1, 1, C), whole4),         # folded BN2 bias
        ],
        out_specs=pl.BlockSpec((1, tile_h, W, C), cur_map),
        scratch_shapes=[
            pltpu.VMEM((tile_h + 4, W + 2, C), jnp.bfloat16),
            pltpu.VMEM((tile_h + 2, W + 2, C), jnp.bfloat16),
        ],
        compiler_params=pltpu.CompilerParams(
            dimension_semantics=("parallel", "parallel"),
            vmem_limit_bytes=32 * 1024 * 1024),         # safe on v5e/v6e/v7x
    )(x, x, x, w1p, w2p, b1, b2)

    return jnp.transpose(out, (0, 3, 1, 2))             # back to NCHW


def basic_block_reference(x_nchw, params):
    """Pure-JAX f32 reference (inference-mode BN), for correctness checking."""
    x = jnp.transpose(x_nchw, (0, 2, 3, 1))
    w1 = jnp.transpose(params["conv1_w"], (2, 3, 1, 0))
    w2 = jnp.transpose(params["conv2_w"], (2, 3, 1, 0))
    s1, b1 = _fold_bn(params["bn1_g"], params["bn1_b"],
                      params["bn1_m"], params["bn1_v"])
    s2, b2 = _fold_bn(params["bn2_g"], params["bn2_b"],
                      params["bn2_m"], params["bn2_v"])

    def conv(inp, w):
        return jax.lax.conv_general_dilated(
            inp, w, (1, 1), "SAME",
            dimension_numbers=("NHWC", "HWIO", "NHWC"))

    out = jnp.maximum(conv(x, w1) * s1 + b1, 0.0)
    out = conv(out, w2) * s2 + b2
    out = jnp.maximum(out + x, 0.0)
    return jnp.transpose(out, (0, 3, 1, 2))


def make_params(key, inplanes, planes):
    ks = jax.random.split(key, 8)
    fan1 = inplanes * 9
    fan2 = planes * 9
    return {
        "conv1_w": jax.random.normal(ks[0], (planes, inplanes, 3, 3),
                                     jnp.float32) / np.sqrt(fan1),
        "conv2_w": jax.random.normal(ks[1], (planes, planes, 3, 3),
                                     jnp.float32) / np.sqrt(fan2),
        "bn1_g": 1.0 + 0.1 * jax.random.normal(ks[2], (planes,), jnp.float32),
        "bn1_b": 0.1 * jax.random.normal(ks[3], (planes,), jnp.float32),
        "bn1_m": 0.1 * jax.random.normal(ks[4], (planes,), jnp.float32),
        "bn1_v": jnp.abs(jax.random.normal(ks[5], (planes,), jnp.float32)) + 0.5,
        "bn2_g": 1.0 + 0.1 * jax.random.normal(ks[6], (planes,), jnp.float32),
        "bn2_b": 0.1 * jax.random.normal(ks[7], (planes,), jnp.float32),
        "bn2_m": jnp.zeros((planes,), jnp.float32),
        "bn2_v": jnp.ones((planes,), jnp.float32),
    }


if __name__ == "__main__":
    key = jax.random.PRNGKey(0)
    kx, kp = jax.random.split(key)

    # Small but lane-friendly BasicBlock: inplanes == planes == 128 (a real
    # HRNet branch width), 16x16 spatial, batch 2, 8-row tiles -> grid (2, 2).
    N, C, H, W = 2, 128, 16, 16
    x = jax.random.normal(kx, (N, C, H, W), jnp.float32)
    params = make_params(kp, C, C)

    fwd = jax.jit(basic_block_pallas)
    out = jax.block_until_ready(fwd(x, params))

    ref = basic_block_reference(x, params)
    # bf16 MXU operands with f32 accumulation -> small drift vs f32 reference.
    np.testing.assert_allclose(np.asarray(out), np.asarray(ref),
                               rtol=3e-2, atol=3e-2)
    print("KERNEL_OK")
</pallas_src>

<mosaic_0001>
module attributes {stable_mosaic.version = 11 : i64} {
  func.func @basic_block_kernel(%arg0: i32, %arg1: i32, %arg2: memref<1x8x16x128xf32, #tpu.memory_space<vmem>>, %arg3: memref<1x2x16x128xf32, #tpu.memory_space<vmem>>, %arg4: memref<1x2x16x128xf32, #tpu.memory_space<vmem>>, %arg5: memref<1152x128xbf16, #tpu.memory_space<vmem>>, %arg6: memref<1152x128xbf16, #tpu.memory_space<vmem>>, %arg7: memref<1x1x1x128xf32, #tpu.memory_space<vmem>>, %arg8: memref<1x1x1x128xf32, #tpu.memory_space<vmem>>, %arg9: memref<1x8x16x128xf32, #tpu.memory_space<vmem>>, %arg10: memref<12x18x128xbf16, #tpu.memory_space<vmem>>, %arg11: memref<10x18x128xbf16, #tpu.memory_space<vmem>>) attributes {dimension_semantics = [#tpu.dimension_semantics<parallel>, #tpu.dimension_semantics<parallel>], iteration_bounds = array<i64: 2, 2>, scalar_prefetch = 0 : i64, scratch_operands = 2 : i64, tpu.core_type = #tpu.core_type<tc>, window_params = [{transform_indices = @transform_0, window_bounds = array<i64: 1, 8, 16, 128>}, {transform_indices = @transform_1, window_bounds = array<i64: 1, 2, 16, 128>}, {transform_indices = @transform_2, window_bounds = array<i64: 1, 2, 16, 128>}, {pipeline_mode = #tpu.pipeline_mode<synchronous>, transform_indices = @transform_3, window_bounds = array<i64: 1152, 128>}, {pipeline_mode = #tpu.pipeline_mode<synchronous>, transform_indices = @transform_4, window_bounds = array<i64: 1152, 128>}, {pipeline_mode = #tpu.pipeline_mode<synchronous>, transform_indices = @transform_5, window_bounds = array<i64: 1, 1, 1, 128>}, {pipeline_mode = #tpu.pipeline_mode<synchronous>, transform_indices = @transform_6, window_bounds = array<i64: 1, 1, 1, 128>}, {transform_indices = @transform_7, window_bounds = array<i64: 1, 8, 16, 128>}]} {
    %c0 = arith.constant 0 : index
    %c0_0 = arith.constant 0 : index
    %c0_1 = arith.constant 0 : index
    %c0_2 = arith.constant 0 : index
    %0 = vector.load %arg2[%c0, %c0_0, %c0_1, %c0_2] : memref<1x8x16x128xf32, #tpu.memory_space<vmem>>, vector<1x8x16x128xf32>
    %1 = vector.shape_cast %0 : vector<1x8x16x128xf32> to vector<8x16x128xf32>
    %cst = arith.constant 0.000000e+00 : bf16
    %2 = vector.broadcast %cst : bf16 to vector<12x1x128xbf16>
    %c0_3 = arith.constant 0 : index
    %c0_4 = arith.constant 0 : index
    %c0_5 = arith.constant 0 : index
    %3 = vector.load %arg10[%c0_3, %c0_4, %c0_5] : memref<12x18x128xbf16, #tpu.memory_space<vmem>>, vector<12x1x128xbf16>
    tpu.vector_store %arg10[%c0_3, %c0_4, %c0_5], %2 {strides = array<i32>} : memref<12x18x128xbf16, #tpu.memory_space<vmem>>, vector<12x1x128xbf16>,
    %c0_6 = arith.constant 0 : index
    %c17 = arith.constant 17 : index
    %c0_7 = arith.constant 0 : index
    %4 = vector.load %arg10[%c0_6, %c17, %c0_7] : memref<12x18x128xbf16, #tpu.memory_space<vmem>>, vector<12x1x128xbf16>
    tpu.vector_store %arg10[%c0_6, %c17, %c0_7], %2 {strides = array<i32>} : memref<12x18x128xbf16, #tpu.memory_space<vmem>>, vector<12x1x128xbf16>,
    %c0_8 = arith.constant 0 : index
    %c0_9 = arith.constant 0 : index
    %c0_10 = arith.constant 0 : index
    %c0_11 = arith.constant 0 : index
    %5 = vector.load %arg3[%c0_8, %c0_9, %c0_10, %c0_11] : memref<1x2x16x128xf32, #tpu.memory_space<vmem>>, vector<1x2x16x128xf32>
    %6 = vector.shape_cast %5 : vector<1x2x16x128xf32> to vector<2x16x128xf32>
    %c0_i32 = arith.constant 0 : i32
    %7 = arith.cmpi eq, %arg1, %c0_i32 : i32
    %cst_12 = arith.constant 0.000000e+00 : f32
    %cst_13 = arith.constant 1.000000e+00 : f32
    %8 = arith.select %7, %cst_12, %cst_13 : f32
    %9 = vector.broadcast %8 : f32 to vector<2x16x128xf32>
    %10 = arith.mulf %6, %9 : vector<2x16x128xf32>
    %c0_14 = arith.constant 0 : index
    %c0_15 = arith.constant 0 : index
    %c0_16 = arith.constant 0 : index
    %c0_17 = arith.constant 0 : index
    %11 = vector.load %arg4[%c0_14, %c0_15, %c0_16, %c0_17] : memref<1x2x16x128xf32, #tpu.memory_space<vmem>>, vector<1x2x16x128xf32>
    %12 = vector.shape_cast %11 : vector<1x2x16x128xf32> to vector<2x16x128xf32>
    %c1_i32 = arith.constant 1 : i32
    %13 = arith.cmpi eq, %arg1, %c1_i32 : i32
    %cst_18 = arith.constant 0.000000e+00 : f32
    %cst_19 = arith.constant 1.000000e+00 : f32
    %14 = arith.select %13, %cst_18, %cst_19 : f32
    %15 = vector.broadcast %14 : f32 to vector<2x16x128xf32>
    %16 = arith.mulf %12, %15 : vector<2x16x128xf32>
    %17 = arith.truncf %10 : vector<2x16x128xf32> to vector<2x16x128xbf16>
    %c0_20 = arith.constant 0 : index
    %c1 = arith.constant 1 : index
    %c0_21 = arith.constant 0 : index
    %18 = vector.load %arg10[%c0_20, %c1, %c0_21] : memref<12x18x128xbf16, #tpu.memory_space<vmem>>, vector<2x16x128xbf16>
    tpu.vector_store %arg10[%c0_20, %c1, %c0_21], %17 {strides = array<i32>} : memref<12x18x128xbf16, #tpu.memory_space<vmem>>, vector<2x16x128xbf16>,
    %19 = arith.truncf %1 : vector<8x16x128xf32> to vector<8x16x128xbf16>
    %c2 = arith.constant 2 : index
    %c1_22 = arith.constant 1 : index
    %c0_23 = arith.constant 0 : index
    %20 = vector.load %arg10[%c2, %c1_22, %c0_23] : memref<12x18x128xbf16, #tpu.memory_space<vmem>>, vector<8x16x128xbf16>
    tpu.vector_store %arg10[%c2, %c1_22, %c0_23], %19 {strides = array<i32>} : memref<12x18x128xbf16, #tpu.memory_space<vmem>>, vector<8x16x128xbf16>,
    %21 = arith.truncf %16 : vector<2x16x128xf32> to vector<2x16x128xbf16>
    %c10 = arith.constant 10 : index
    %c1_24 = arith.constant 1 : index
    %c0_25 = arith.constant 0 : index
    %22 = vector.load %arg10[%c10, %c1_24, %c0_25] : memref<12x18x128xbf16, #tpu.memory_space<vmem>>, vector<2x16x128xbf16>
    tpu.vector_store %arg10[%c10, %c1_24, %c0_25], %21 {strides = array<i32>} : memref<12x18x128xbf16, #tpu.memory_space<vmem>>, vector<2x16x128xbf16>,
    %c0_26 = arith.constant 0 : index
    %c0_27 = arith.constant 0 : index
    %c0_28 = arith.constant 0 : index
    %23 = vector.load %arg10[%c0_26, %c0_27, %c0_28] : memref<12x18x128xbf16, #tpu.memory_space<vmem>>, vector<12x18x128xbf16>
    %c0_29 = arith.constant 0 : index
    %c0_30 = arith.constant 0 : index
    %24 = vector.load %arg5[%c0_29, %c0_30] : memref<1152x128xbf16, #tpu.memory_space<vmem>>, vector<1152x128xbf16>
    %25 = vector.extract_strided_slice %23 {offsets = [0, 0, 0], sizes = [10, 16, 128], strides = [1, 1, 1]} : vector<12x18x128xbf16> to vector<10x16x128xbf16>
    %26 = vector.extract_strided_slice %23 {offsets = [0, 1, 0], sizes = [10, 16, 128], strides = [1, 1, 1]} : vector<12x18x128xbf16> to vector<10x16x128xbf16>
    %27 = vector.extract_strided_slice %23 {offsets = [0, 2, 0], sizes = [10, 16, 128], strides = [1, 1, 1]} : vector<12x18x128xbf16> to vector<10x16x128xbf16>
    %28 = vector.extract_strided_slice %23 {offsets = [1, 0, 0], sizes = [10, 16, 128], strides = [1, 1, 1]} : vector<12x18x128xbf16> to vector<10x16x128xbf16>
    %29 = vector.extract_strided_slice %23 {offsets = [1, 1, 0], sizes = [10, 16, 128], strides = [1, 1, 1]} : vector<12x18x128xbf16> to vector<10x16x128xbf16>
    %30 = vector.extract_strided_slice %23 {offsets = [1, 2, 0], sizes = [10, 16, 128], strides = [1, 1, 1]} : vector<12x18x128xbf16> to vector<10x16x128xbf16>
    %31 = vector.extract_strided_slice %23 {offsets = [2, 0, 0], sizes = [10, 16, 128], strides = [1, 1, 1]} : vector<12x18x128xbf16> to vector<10x16x128xbf16>
    %32 = vector.extract_strided_slice %23 {offsets = [2, 1, 0], sizes = [10, 16, 128], strides = [1, 1, 1]} : vector<12x18x128xbf16> to vector<10x16x128xbf16>
    %33 = vector.extract_strided_slice %23 {offsets = [2, 2, 0], sizes = [10, 16, 128], strides = [1, 1, 1]} : vector<12x18x128xbf16> to vector<10x16x128xbf16>
    %34 = tpu.concatenate %25, %26, %27, %28, %29, %30, %31, %32, %33 in 2 : vector<10x16x128xbf16>, vector<10x16x128xbf16>, vector<10x16x128xbf16>, vector<10x16x128xbf16>, vector<10x16x128xbf16>, vector<10x16x128xbf16>, vector<10x16x128xbf16>, vector<10x16x128xbf16>, vector<10x16x128xbf16> -> vector<10x16x1152xbf16>
    %35 = vector.shape_cast %34 : vector<10x16x1152xbf16> to vector<160x1152xbf16>
    %cst_31 = arith.constant dense<0.000000e+00> : vector<160x128xf32>
    %36 = tpu.matmul %35, %24, %cst_31 {dimension_numbers = #tpu.dot_dimension_numbers<[1], [0], [0], [1], [0, 0, 1, 1], [], []>} : vector<160x1152xbf16>, vector<1152x128xbf16>, vector<160x128xf32> -> vector<160x128xf32>
    %37 = vector.shape_cast %36 : vector<160x128xf32> to vector<10x16x128xf32>
    %c0_32 = arith.constant 0 : index
    %c0_33 = arith.constant 0 : index
    %c0_34 = arith.constant 0 : index
    %c0_35 = arith.constant 0 : index
    %38 = vector.load %arg7[%c0_32, %c0_33, %c0_34, %c0_35] : memref<1x1x1x128xf32, #tpu.memory_space<vmem>>, vector<1x1x1x128xf32>
    %39 = vector.shape_cast %38 : vector<1x1x1x128xf32> to vector<1x128xf32>
    %40 = vector.shape_cast %39 : vector<1x128xf32> to vector<1x1x128xf32>
    %41 = vector.broadcast %40 : vector<1x1x128xf32> to vector<10x16x128xf32>
    %42 = arith.addf %37, %41 : vector<10x16x128xf32>
    %cst_36 = arith.constant 0.000000e+00 : f32
    %43 = vector.broadcast %cst_36 : f32 to vector<10x16x128xf32>
    %44 = arith.maximumf %42, %43 : vector<10x16x128xf32>
    %45 = tpu.iota {dimensions = array<i32: 0>} : vector<10x1x1xi32>
    %c0_i32_37 = arith.constant 0 : i32
    %46 = arith.cmpi sgt, %arg1, %c0_i32_37 : i32
    %c0_i32_38 = arith.constant 0 : i32
    %47 = vector.broadcast %c0_i32_38 : i32 to vector<10x1x1xi32>
    %48 = arith.cmpi sgt, %45, %47 : vector<10x1x1xi32>
    %49 = vector.broadcast %46 : i1 to vector<10x1x1xi1>
    %50 = arith.ori %49, %48 : vector<10x1x1xi1>
    %c1_i32_39 = arith.constant 1 : i32
    %51 = arith.cmpi slt, %arg1, %c1_i32_39 : i32
    %c9_i32 = arith.constant 9 : i32
    %52 = vector.broadcast %c9_i32 : i32 to vector<10x1x1xi32>
    %53 = arith.cmpi slt, %45, %52 : vector<10x1x1xi32>
    %54 = vector.broadcast %51 : i1 to vector<10x1x1xi1>
    %55 = arith.ori %54, %53 : vector<10x1x1xi1>
    %56 = arith.andi %50, %55 : vector<10x1x1xi1>
    %cst_40 = arith.constant 0.000000e+00 : f32
    %57 = vector.shape_cast %56 : vector<10x1x1xi1> to vector<10x1x1xi1>
    %58 = vector.broadcast %57 : vector<10x1x1xi1> to vector<10x16x128xi1>
    %59 = vector.broadcast %cst_40 : f32 to vector<10x16x128xf32>
    %60 = arith.select %58, %44, %59 : vector<10x16x128xi1>, vector<10x16x128xf32>
    %61 = arith.truncf %60 : vector<10x16x128xf32> to vector<10x16x128xbf16>
    %cst_41 = arith.constant 0.000000e+00 : bf16
    %62 = vector.broadcast %cst_41 : bf16 to vector<10x1x128xbf16>
    %c0_42 = arith.constant 0 : index
    %c0_43 = arith.constant 0 : index
    %c0_44 = arith.constant 0 : index
    %63 = vector.load %arg11[%c0_42, %c0_43, %c0_44] : memref<10x18x128xbf16, #tpu.memory_space<vmem>>, vector<10x1x128xbf16>
    tpu.vector_store %arg11[%c0_42, %c0_43, %c0_44], %62 {strides = array<i32>} : memref<10x18x128xbf16, #tpu.memory_space<vmem>>, vector<10x1x128xbf16>,
    %c0_45 = arith.constant 0 : index
    %c17_46 = arith.constant 17 : index
    %c0_47 = arith.constant 0 : index
    %64 = vector.load %arg11[%c0_45, %c17_46, %c0_47] : memref<10x18x128xbf16, #tpu.memory_space<vmem>>, vector<10x1x128xbf16>
    tpu.vector_store %arg11[%c0_45, %c17_46, %c0_47], %62 {strides = array<i32>} : memref<10x18x128xbf16, #tpu.memory_space<vmem>>, vector<10x1x128xbf16>,
    %c0_48 = arith.constant 0 : index
    %c1_49 = arith.constant 1 : index
    %c0_50 = arith.constant 0 : index
    %65 = vector.load %arg11[%c0_48, %c1_49, %c0_50] : memref<10x18x128xbf16, #tpu.memory_space<vmem>>, vector<10x16x128xbf16>
    tpu.vector_store %arg11[%c0_48, %c1_49, %c0_50], %61 {strides = array<i32>} : memref<10x18x128xbf16, #tpu.memory_space<vmem>>, vector<10x16x128xbf16>,
    %c0_51 = arith.constant 0 : index
    %c0_52 = arith.constant 0 : index
    %c0_53 = arith.constant 0 : index
    %66 = vector.load %arg11[%c0_51, %c0_52, %c0_53] : memref<10x18x128xbf16, #tpu.memory_space<vmem>>, vector<10x18x128xbf16>
    %c0_54 = arith.constant 0 : index
    %c0_55 = arith.constant 0 : index
    %67 = vector.load %arg6[%c0_54, %c0_55] : memref<1152x128xbf16, #tpu.memory_space<vmem>>, vector<1152x128xbf16>
    %68 = vector.extract_strided_slice %66 {offsets = [0, 0, 0], sizes = [8, 16, 128], strides = [1, 1, 1]} : vector<10x18x128xbf16> to vector<8x16x128xbf16>
    %69 = vector.extract_strided_slice %66 {offsets = [0, 1, 0], sizes = [8, 16, 128], strides = [1, 1, 1]} : vector<10x18x128xbf16> to vector<8x16x128xbf16>
    %70 = vector.extract_strided_slice %66 {offsets = [0, 2, 0], sizes = [8, 16, 128], strides = [1, 1, 1]} : vector<10x18x128xbf16> to vector<8x16x128xbf16>
    %71 = vector.extract_strided_slice %66 {offsets = [1, 0, 0], sizes = [8, 16, 128], strides = [1, 1, 1]} : vector<10x18x128xbf16> to vector<8x16x128xbf16>
    %72 = vector.extract_strided_slice %66 {offsets = [1, 1, 0], sizes = [8, 16, 128], strides = [1, 1, 1]} : vector<10x18x128xbf16> to vector<8x16x128xbf16>
    %73 = vector.extract_strided_slice %66 {offsets = [1, 2, 0], sizes = [8, 16, 128], strides = [1, 1, 1]} : vector<10x18x128xbf16> to vector<8x16x128xbf16>
    %74 = vector.extract_strided_slice %66 {offsets = [2, 0, 0], sizes = [8, 16, 128], strides = [1, 1, 1]} : vector<10x18x128xbf16> to vector<8x16x128xbf16>
    %75 = vector.extract_strided_slice %66 {offsets = [2, 1, 0], sizes = [8, 16, 128], strides = [1, 1, 1]} : vector<10x18x128xbf16> to vector<8x16x128xbf16>
    %76 = vector.extract_strided_slice %66 {offsets = [2, 2, 0], sizes = [8, 16, 128], strides = [1, 1, 1]} : vector<10x18x128xbf16> to vector<8x16x128xbf16>
    %77 = tpu.concatenate %68, %69, %70, %71, %72, %73, %74, %75, %76 in 2 : vector<8x16x128xbf16>, vector<8x16x128xbf16>, vector<8x16x128xbf16>, vector<8x16x128xbf16>, vector<8x16x128xbf16>, vector<8x16x128xbf16>, vector<8x16x128xbf16>, vector<8x16x128xbf16>, vector<8x16x128xbf16> -> vector<8x16x1152xbf16>
    %78 = vector.shape_cast %77 : vector<8x16x1152xbf16> to vector<128x1152xbf16>
    %cst_56 = arith.constant dense<0.000000e+00> : vector<128x128xf32>
    %79 = tpu.matmul %78, %67, %cst_56 {dimension_numbers = #tpu.dot_dimension_numbers<[1], [0], [0], [1], [0, 0, 1, 1], [], []>} : vector<128x1152xbf16>, vector<1152x128xbf16>, vector<128x128xf32> -> vector<128x128xf32>
    %80 = vector.shape_cast %79 : vector<128x128xf32> to vector<8x16x128xf32>
    %c0_57 = arith.constant 0 : index
    %c0_58 = arith.constant 0 : index
    %c0_59 = arith.constant 0 : index
    %c0_60 = arith.constant 0 : index
    %81 = vector.load %arg8[%c0_57, %c0_58, %c0_59, %c0_60] : memref<1x1x1x128xf32, #tpu.memory_space<vmem>>, vector<1x1x1x128xf32>
    %82 = vector.shape_cast %81 : vector<1x1x1x128xf32> to vector<1x128xf32>
    %83 = vector.shape_cast %82 : vector<1x128xf32> to vector<1x1x128xf32>
    %84 = vector.broadcast %83 : vector<1x1x128xf32> to vector<8x16x128xf32>
    %85 = arith.addf %80, %84 : vector<8x16x128xf32>
    %86 = arith.addf %85, %1 : vector<8x16x128xf32>
    %cst_61 = arith.constant 0.000000e+00 : f32
    %87 = vector.broadcast %cst_61 : f32 to vector<8x16x128xf32>
    %88 = arith.maximumf %86, %87 : vector<8x16x128xf32>
    %c0_62 = arith.constant 0 : index
    %c0_63 = arith.constant 0 : index
    %c0_64 = arith.constant 0 : index
    %c0_65 = arith.constant 0 : index
    %89 = vector.load %arg9[%c0_62, %c0_63, %c0_64, %c0_65] : memref<1x8x16x128xf32, #tpu.memory_space<vmem>>, vector<1x8x16x128xf32>
    %90 = vector.shape_cast %89 : vector<1x8x16x128xf32> to vector<8x16x128xf32>
    %91 = vector.shape_cast %88 : vector<8x16x128xf32> to vector<1x8x16x128xf32>
    tpu.vector_store %arg9[%c0_62, %c0_63, %c0_64, %c0_65], %91 {strides = array<i32>} : memref<1x8x16x128xf32, #tpu.memory_space<vmem>>, vector<1x8x16x128xf32>,
    return
  }
  func.func @transform_0(%arg0: i32, %arg1: i32) -> (i32, i32, i32, i32) {
    %c0_i32 = arith.constant 0 : i32
    %c0_i32_0 = arith.constant 0 : i32
    %c0_i32_1 = arith.constant 0 : i32
    return %arg0, %arg1, %c0_i32, %c0_i32_0 : i32, i32, i32, i32
  }
  func.func @transform_1(%arg0: i32, %arg1: i32) -> (i32, i32, i32, i32) {
    %c4_i32 = arith.constant 4 : i32
    %0 = arith.muli %arg1, %c4_i32 : i32
    %c1_i32 = arith.constant 1 : i32
    %1 = arith.subi %0, %c1_i32 : i32
    %c0_i32 = arith.constant 0 : i32
    %2 = arith.maxsi %1, %c0_i32 : i32
    %c0_i32_0 = arith.constant 0 : i32
    %c0_i32_1 = arith.constant 0 : i32
    %c0_i32_2 = arith.constant 0 : i32
    return %arg0, %2, %c0_i32_0, %c0_i32_1 : i32, i32, i32, i32
  }
  func.func @transform_2(%arg0: i32, %arg1: i32) -> (i32, i32, i32, i32) {
    %c1_i32 = arith.constant 1 : i32
    %0 = arith.addi %arg1, %c1_i32 : i32
    %c4_i32 = arith.constant 4 : i32
    %1 = arith.muli %0, %c4_i32 : i32
    %c7_i32 = arith.constant 7 : i32
    %2 = arith.minsi %1, %c7_i32 : i32
    %c0_i32 = arith.constant 0 : i32
    %c0_i32_0 = arith.constant 0 : i32
    %c0_i32_1 = arith.constant 0 : i32
    return %arg0, %2, %c0_i32, %c0_i32_0 : i32, i32, i32, i32
  }
  func.func @transform_3(%arg0: i32, %arg1: i32) -> (i32, i32) {
    %c0_i32 = arith.constant 0 : i32
    %c0_i32_0 = arith.constant 0 : i32
    %c0_i32_1 = arith.constant 0 : i32
    return %c0_i32, %c0_i32_0 : i32, i32
  }
  func.func @transform_4(%arg0: i32, %arg1: i32) -> (i32, i32) {
    %c0_i32 = arith.constant 0 : i32
    %c0_i32_0 = arith.constant 0 : i32
    %c0_i32_1 = arith.constant 0 : i32
    return %c0_i32, %c0_i32_0 : i32, i32
  }
  func.func @transform_5(%arg0: i32, %arg1: i32) -> (i32, i32, i32, i32) {
    %c0_i32 = arith.constant 0 : i32
    %c0_i32_0 = arith.constant 0 : i32
    %c0_i32_1 = arith.constant 0 : i32
    %c0_i32_2 = arith.constant 0 : i32
    %c0_i32_3 = arith.constant 0 : i32
    return %c0_i32, %c0_i32_0, %c0_i32_1, %c0_i32_2 : i32, i32, i32, i32
  }
  func.func @transform_6(%arg0: i32, %arg1: i32) -> (i32, i32, i32, i32) {
    %c0_i32 = arith.constant 0 : i32
    %c0_i32_0 = arith.constant 0 : i32
    %c0_i32_1 = arith.constant 0 : i32
    %c0_i32_2 = arith.constant 0 : i32
    %c0_i32_3 = arith.constant 0 : i32
    return %c0_i32, %c0_i32_0, %c0_i32_1, %c0_i32_2 : i32, i32, i32, i32
  }
  func.func @transform_7(%arg0: i32, %arg1: i32) -> (i32, i32, i32, i32) {
    %c0_i32 = arith.constant 0 : i32
    %c0_i32_0 = arith.constant 0 : i32
    %c0_i32_1 = arith.constant 0 : i32
    return %arg0, %arg1, %c0_i32, %c0_i32_0 : i32, i32, i32, i32
  }
}

</mosaic_0001>

<llo_original>
// kernel: basic_block_pallas.1
$region0: #{basic_block_pallas.1}
  #allocation0 [shape = 'u32[]', space=smem, size = 0x4, offset = 0x4, fixed_abs, tag = 'smem constant byte address 0x4 - core index']
  #allocation1 [shape = 'u32[144,128]{1,0:T(1,128)}', space=vmem, size = 0x12000, scoped, tag = 'internal scratch']
  #allocation2 [shape = 'bf16[12,18,128]{2,1,0:T(8,128)(2,1)}', space=vmem, size = 0x12000, scoped, tag = 'scratch operand']
  #allocation3 [shape = 'bf16[10,18,128]{2,1,0:T(8,128)(2,1)}', space=vmem, size = 0xf000, scoped, tag = 'scratch operand']
  %s0 = inlined_call_operand.vmem [shape: f32[2,16,16,128], index: 0, kind: input, shape index: {}, may-alias: {0,1,2}]
  %s1 = inlined_call_operand.vmem [shape: f32[2,16,16,128], index: 1, kind: input, shape index: {}, may-alias: {0,1,2}]
  %s2 = inlined_call_operand.vmem [shape: f32[2,16,16,128], index: 2, kind: input, shape index: {}, may-alias: {0,1,2}]
  %s3 = inlined_call_operand.vmem [shape: bf16[1152,128], index: 3, kind: input, shape index: {}]
  %s4 = inlined_call_operand.vmem [shape: bf16[1152,128], index: 4, kind: input, shape index: {}]
  %s5 = inlined_call_operand.vmem [shape: f32[1,1,1,128], index: 5, kind: input, shape index: {}]
  %s6 = inlined_call_operand.vmem [shape: f32[1,1,1,128], index: 6, kind: input, shape index: {}]
  %s7 = inlined_call_operand.hbm [shape: f32[2,16,16,128], index: 7, kind: output, shape index: {}]
  %s8 = sld [smem:[#allocation0]]
  $region61: #{basic_block_pallas.1} parent=0
    _
  %s10 = ssub.s32 1, %s8
  %s11 = scalar_select 0, %s10, %s8
  $region1: #{basic_block_pallas.1} parent=0
    #allocation4 [shape = 'u8[131072]{0}', space=vmem, size = 0x20000, scoped, tag = 'output window, operand 0']
    #allocation5 [shape = 's32[2]{0}', space=sflag, size = 0x8, scoped, tag = 'scoped memory for basic_block_pallas.1']
    %12 = vsyncpa [#allocation5], 0
    %s13 = scalar_lea.sflag [#allocation5], 1
    %14 = vsyncpa %s13, 0
    loop: start=0, step=1, limit=6
    $region2: #{basic_block_pallas.1} parent=1 // loop_pre_header
      _
    $region3: #{basic_block_pallas.1} parent=1 // loop_header
      %s16 = sphi 0, %s20
      %p17 = scmp.ge.s32.totalorder %s16, 6
      %s23 = sphi 0, %s35
      %s24 = sphi 0, %s31
      %s25 = sphi 0, %s23
      %s26 = sphi 0, %s24
      %s27 = sphi 0, %s25
      %s28 = sphi 0, %s26
      %s40 = sphi 0, %s42
      %s43 = sphi 0, %s40
      %s44 = sphi 0, %s43
      %s60 = sphi 0, %s44
      %s76 = sphi 0, %s78
      %s79 = sphi 0, %s76
      %s80 = sphi 0, %s79
      %s96 = sphi 0, %s80
      %s112 = sphi 0, %s114
      %s115 = sphi 0, %s112
      %s116 = sphi 0, %s115
      %s132 = sphi 0, %s116
      %s136 = sphi 0, %s136
      %s138 = sphi 0, %s136
      %s139 = sphi 0, %s138
      %s153 = sphi 0, %s139
      %s157 = sphi 0, %s157
      %s159 = sphi 0, %s157
      %s160 = sphi 0, %s159
      %s174 = sphi 0, %s160
      %s178 = sphi 0, %s178
      %s180 = sphi 0, %s178
      %s181 = sphi 0, %s180
      %s195 = sphi 0, %s181
      %s199 = sphi 0, %s199
      %s201 = sphi 0, %s199
      %s202 = sphi 0, %s201
      %s216 = sphi 0, %s202
      %s224 = sphi 0, %s226
      %s227 = sphi 0, %s224
      %s228 = sphi 0, %s227
      %s244 = sphi 0, %s228
    $region4: #{basic_block_pallas.1} parent=1 // loop_header_branch
      %19 = sbr.rel (%p17) target = $region8
    $region5: #{basic_block_pallas.1} parent=1 // loop_body
      %s21 = ssub.s32 %s16, 1
      %s22 = ssub.s32 %s16, 2
      %s29 = sadd.s32 1, %s24
      %p30 = scmp.ge.s32.totalorder %s29, 2
      %s31 = scalar_select %p30, 0, %s29
      %s32 = sadd.s32 1, %s23
      %s33 = scalar_select %p30, %s32, %s23
      %p34 = scmp.ge.s32.totalorder %s33, 2
      %s35 = scalar_select %p34, 0, %s33
      %s36 = ssub.s32 %s23, %s35
      %s37 = ssub.s32 %s24, %s31
      %s38 = sor.u32 %s36, %s37
      %p39 = scmp.eq.s32.totalorder %s38, 0
      %s41 = sadd.s32 %s40, 1
      %s42 = scalar_select %p39, %s40, %s41
      %p45 = pneg %p39
      %p46 = scmp.eq.s32.totalorder %s16, 3
      %p47 = por %p45, %p46
      %p48 = scmp.ne.s32.totalorder %s40, %s43
      %p49 = scmp.eq.s32.totalorder %s16, 0
      %p50 = por %p48, %p49
      %p51 = scmp.ne.s32.totalorder %s40, %s43
      %p52 = scmp.eq.s32.totalorder %s21, 3
      %p53 = por %p51, %p52
      %p54 = scmp.ne.s32.totalorder %s43, %s44
      %p55 = scmp.eq.s32.totalorder %s21, 0
      %p56 = por %p54, %p55
      %p57 = scmp.ne.s32.totalorder %s43, %s44
      %p58 = scmp.eq.s32.totalorder %s22, 3
      %p59 = por %p57, %p58
      %p61 = scmp.ne.s32.totalorder %s44, %s60
      %p62 = scmp.eq.s32.totalorder %s22, 0
      %p63 = por %p61, %p62
      %s64 = smul.u32 %s24, 4
      %s65 = ssub.s32 %s64, 1
      %p66 = scmp.gt.s32.totalorder %s65, 0
      %s67 = scalar_select %p66, %s65, 0
      %s68 = smul.u32 %s31, 4
      %s69 = ssub.s32 %s68, 1
      %p70 = scmp.gt.s32.totalorder %s69, 0
      %s71 = scalar_select %p70, %s69, 0
      %s72 = ssub.s32 %s23, %s35
      %s73 = ssub.s32 %s67, %s71
      %s74 = sor.u32 %s72, %s73
      %p75 = scmp.eq.s32.totalorder %s74, 0
      %s77 = sadd.s32 %s76, 1
      %s78 = scalar_select %p75, %s76, %s77
      %p81 = pneg %p75
      %p82 = scmp.eq.s32.totalorder %s16, 3
      %p83 = por %p81, %p82
      %p84 = scmp.ne.s32.totalorder %s76, %s79
      %p85 = scmp.eq.s32.totalorder %s16, 0
      %p86 = por %p84, %p85
      %p87 = scmp.ne.s32.totalorder %s76, %s79
      %p88 = scmp.eq.s32.totalorder %s21, 3
      %p89 = por %p87, %p88
      %p90 = scmp.ne.s32.totalorder %s79, %s80
      %p91 = scmp.eq.s32.totalorder %s21, 0
      %p92 = por %p90, %p91
      %p93 = scmp.ne.s32.totalorder %s79, %s80
      %p94 = scmp.eq.s32.totalorder %s22, 3
      %p95 = por %p93, %p94
      %p97 = scmp.ne.s32.totalorder %s80, %s96
      %p98 = scmp.eq.s32.totalorder %s22, 0
      %p99 = por %p97, %p98
      %s100 = sadd.s32 %s24, 1
      %s101 = smul.u32 %s100, 4
      %p102 = scmp.lt.s32.totalorder %s101, 7
      %s103 = scalar_select %p102, %s101, 7
      %s104 = sadd.s32 %s31, 1
      %s105 = smul.u32 %s104, 4
      %p106 = scmp.lt.s32.totalorder %s105, 7
      %s107 = scalar_select %p106, %s105, 7
      %s108 = ssub.s32 %s23, %s35
      %s109 = ssub.s32 %s103, %s107
      %s110 = sor.u32 %s108, %s109
      %p111 = scmp.eq.s32.totalorder %s110, 0
      %s113 = sadd.s32 %s112, 1
      %s114 = scalar_select %p111, %s112, %s113
      %p117 = pneg %p111
      %p118 = scmp.eq.s32.totalorder %s16, 3
      %p119 = por %p117, %p118
      %p120 = scmp.ne.s32.totalorder %s112, %s115
      %p121 = scmp.eq.s32.totalorder %s16, 0
      %p122 = por %p120, %p121
      %p123 = scmp.ne.s32.totalorder %s112, %s115
      %p124 = scmp.eq.s32.totalorder %s21, 3
      %p125 = por %p123, %p124
      %p126 = scmp.ne.s32.totalorder %s115, %s116
      %p127 = scmp.eq.s32.totalorder %s21, 0
      %p128 = por %p126, %p127
      %p129 = scmp.ne.s32.totalorder %s115, %s116
      %p130 = scmp.eq.s32.totalorder %s22, 3
      %p131 = por %p129, %p130
      %p133 = scmp.ne.s32.totalorder %s116, %s132
      %p134 = scmp.eq.s32.totalorder %s22, 0
      %p135 = por %p133, %p134
      %s137 = sadd.s32 %s136, 1
      %p140 = scmp.eq.s32.totalorder %s16, 3
      %p141 = scmp.ne.s32.totalorder %s136, %s138
      %p142 = scmp.eq.s32.totalorder %s16, 0
      %p143 = por %p141, %p142
      %p144 = scmp.ne.s32.totalorder %s136, %s138
      %p145 = scmp.eq.s32.totalorder %s21, 3
      %p146 = por %p144, %p145
      %p147 = scmp.ne.s32.totalorder %s138, %s139
      %p148 = scmp.eq.s32.totalorder %s21, 0
      %p149 = por %p147, %p148
      %p150 = scmp.ne.s32.totalorder %s138, %s139
      %p151 = scmp.eq.s32.totalorder %s22, 3
      %p152 = por %p150, %p151
      %p154 = scmp.ne.s32.totalorder %s139, %s153
      %p155 = scmp.eq.s32.totalorder %s22, 0
      %p156 = por %p154, %p155
      %s158 = sadd.s32 %s157, 1
      %p161 = scmp.eq.s32.totalorder %s16, 3
      %p162 = scmp.ne.s32.totalorder %s157, %s159
      %p163 = scmp.eq.s32.totalorder %s16, 0
      %p164 = por %p162, %p163
      %p165 = scmp.ne.s32.totalorder %s157, %s159
      %p166 = scmp.eq.s32.totalorder %s21, 3
      %p167 = por %p165, %p166
      %p168 = scmp.ne.s32.totalorder %s159, %s160
      %p169 = scmp.eq.s32.totalorder %s21, 0
      %p170 = por %p168, %p169
      %p171 = scmp.ne.s32.totalorder %s159, %s160
      %p172 = scmp.eq.s32.totalorder %s22, 3
      %p173 = por %p171, %p172
      %p175 = scmp.ne.s32.totalorder %s160, %s174
      %p176 = scmp.eq.s32.totalorder %s22, 0
      %p177 = por %p175, %p176
      %s179 = sadd.s32 %s178, 1
      %p182 = scmp.eq.s32.totalorder %s16, 3
      %p183 = scmp.ne.s32.totalorder %s178, %s180
      %p184 = scmp.eq.s32.totalorder %s16, 0
      %p185 = por %p183, %p184
      %p186 = scmp.ne.s32.totalorder %s178, %s180
      %p187 = scmp.eq.s32.totalorder %s21, 3
      %p188 = por %p186, %p187
      %p189 = scmp.ne.s32.totalorder %s180, %s181
      %p190 = scmp.eq.s32.totalorder %s21, 0
      %p191 = por %p189, %p190
      %p192 = scmp.ne.s32.totalorder %s180, %s181
      %p193 = scmp.eq.s32.totalorder %s22, 3
      %p194 = por %p192, %p193
      %p196 = scmp.ne.s32.totalorder %s181, %s195
      %p197 = scmp.eq.s32.totalorder %s22, 0
      %p198 = por %p196, %p197
      %s200 = sadd.s32 %s199, 1
      %p203 = scmp.eq.s32.totalorder %s16, 3
      %p204 = scmp.ne.s32.totalorder %s199, %s201
      %p205 = scmp.eq.s32.totalorder %s16, 0
      %p206 = por %p204, %p205
      %p207 = scmp.ne.s32.totalorder %s199, %s201
      %p208 = scmp.eq.s32.totalorder %s21, 3
      %p209 = por %p207, %p208
      %p210 = scmp.ne.s32.totalorder %s201, %s202
      %p211 = scmp.eq.s32.totalorder %s21, 0
      %p212 = por %p210, %p211
      %p213 = scmp.ne.s32.totalorder %s201, %s202
      %p214 = scmp.eq.s32.totalorder %s22, 3
      %p215 = por %p213, %p214
      %p217 = scmp.ne.s32.totalorder %s202, %s216
      %p218 = scmp.eq.s32.totalorder %s22, 0
      %p219 = por %p217, %p218
      %s220 = ssub.s32 %s23, %s35
      %s221 = ssub.s32 %s24, %s31
      %s222 = sor.u32 %s220, %s221
      %p223 = scmp.eq.s32.totalorder %s222, 0
      %s225 = sadd.s32 %s224, 1
      %s226 = scalar_select %p223, %s224, %s225
      %p229 = pneg %p223
      %p230 = scmp.eq.s32.totalorder %s16, 3
      %p231 = por %p229, %p230
      %p232 = scmp.ne.s32.totalorder %s224, %s227
      %p233 = scmp.eq.s32.totalorder %s16, 0
      %p234 = por %p232, %p233
      %p235 = scmp.ne.s32.totalorder %s224, %s227
      %p236 = scmp.eq.s32.totalorder %s21, 3
      %p237 = por %p235, %p236
      %p238 = scmp.ne.s32.totalorder %s227, %s228
      %p239 = scmp.eq.s32.totalorder %s21, 0
      %p240 = por %p238, %p239
      %p241 = scmp.ne.s32.totalorder %s227, %s228
      %p242 = scmp.eq.s32.totalorder %s22, 3
      %p243 = por %p241, %p242
      %p245 = scmp.ne.s32.totalorder %s228, %s244
      %p246 = scmp.eq.s32.totalorder %s22, 0
      %p247 = por %p245, %p246
      %p248 = scmp.le.s32.totalorder 1, %s16
      %p249 = scmp.lt.s32.totalorder %s16, 5
      %p250 = pnand %p248, %p249
      %p251 = pneg %p250
      // Predicated region
      $region9: #{basic_block_pallas.1} parent=5 // pred_check
        _
      $region10: #{basic_block_pallas.1} parent=5 // pred_check_branch
        %253 = sbr.rel (%p250) target = $region12
      $region11: #{basic_block_pallas.1} parent=5 // pred_region
        %s254 = ssub.s32 %s16, 1
        // Predicated region
        $region13: #{basic_block_pallas.1} parent=11 // pred_check
          %p255 = pneg %p149
        $region14: #{basic_block_pallas.1} parent=11 // pred_check_branch
          %257 = sbr.rel (%p255) target = $region16
        $region15: #{basic_block_pallas.1} parent=11 // pred_region
          _
        $region16: #{basic_block_pallas.1} parent=11 // pred_fallthru
          _
        // Predicated region
        $region17: #{basic_block_pallas.1} parent=11 // pred_check
          %p258 = pneg %p170
        $region18: #{basic_block_pallas.1} parent=11 // pred_check_branch
          %260 = sbr.rel (%p258) target = $region20
        $region19: #{basic_block_pallas.1} parent=11 // pred_region
          _
        $region20: #{basic_block_pallas.1} parent=11 // pred_fallthru
          _
        // Predicated region
        $region21: #{basic_block_pallas.1} parent=11 // pred_check
          %p261 = pneg %p191
        $region22: #{basic_block_pallas.1} parent=11 // pred_check_branch
          %263 = sbr.rel (%p261) target = $region24
        $region23: #{basic_block_pallas.1} parent=11 // pred_region
          _
        $region24: #{basic_block_pallas.1} parent=11 // pred_fallthru
          _
        // Predicated region
        $region25: #{basic_block_pallas.1} parent=11 // pred_check
          %p264 = pneg %p212
        $region26: #{basic_block_pallas.1} parent=11 // pred_check_branch
          %266 = sbr.rel (%p264) target = $region28
        $region27: #{basic_block_pallas.1} parent=11 // pred_region
          _
        $region28: #{basic_block_pallas.1} parent=11 // pred_fallthru
          _
      $region12: #{basic_block_pallas.1} parent=5 // pred_fallthru
        _
      %p267 = scmp.lt.s32.totalorder %s16, 4
      // Predicated region
      $region29: #{basic_block_pallas.1} parent=5 // pred_check
        %p268 = pneg %p267
      $region30: #{basic_block_pallas.1} parent=5 // pred_check_branch
        %270 = sbr.rel (%p268) target = $region32
      $region31: #{basic_block_pallas.1} parent=5 // pred_region
        // Predicated region
        $region33: #{basic_block_pallas.1} parent=31 // pred_check
          %p271 = pneg %p50
        $region34: #{basic_block_pallas.1} parent=31 // pred_check_branch
          %273 = sbr.rel (%p271) target = $region36
        $region35: #{basic_block_pallas.1} parent=31 // pred_region
          %s274 = smul.u32 8, %s24
          %p275 = scmp.lt.s32.totalorder %s23, 1
          %s276 = scalar_select %p275, %s23, 1
          %p277 = scmp.lt.s32.totalorder %s274, 15
          %s278 = scalar_select %p277, %s274, 15
          %s279 = smul.addr %s278, 2
          %s280 = smul.addr %s276, 32
          %s281 = sadd.s32 %s279, %s280
          %s282 = smul.addr %s281, 8
          %s283 = scalar_lea.vmem %s0, %s282
          %s284 = smul.u32 8, %s24
        $region36: #{basic_block_pallas.1} parent=31 // pred_fallthru
          _
        // Predicated region
        $region37: #{basic_block_pallas.1} parent=31 // pred_check
          %p285 = pneg %p86
        $region38: #{basic_block_pallas.1} parent=31 // pred_check_branch
          %287 = sbr.rel (%p285) target = $region40
        $region39: #{basic_block_pallas.1} parent=31 // pred_region
          %s288 = smul.u32 %s24, 4
          %s289 = ssub.s32 %s288, 1
          %p290 = scmp.gt.s32.totalorder %s289, 0
          %s291 = scalar_select %p290, %s289, 0
          %s292 = smul.u32 2, %s291
          %p293 = scmp.lt.s32.totalorder %s23, 1
          %s294 = scalar_select %p293, %s23, 1
          %p295 = scmp.lt.s32.totalorder %s292, 15
          %s296 = scalar_select %p295, %s292, 15
          %s297 = smul.addr %s296, 2
          %s298 = smul.addr %s294, 32
          %s299 = sadd.s32 %s297, %s298
          %s300 = smul.addr %s299, 8
          %s301 = scalar_lea.vmem %s1, %s300
          %s302 = smul.u32 %s24, 4
          %s303 = ssub.s32 %s302, 1
          %p304 = scmp.gt.s32.totalorder %s303, 0
          %s305 = scalar_select %p304, %s303, 0
          %s306 = smul.u32 2, %s305
        $region40: #{basic_block_pallas.1} parent=31 // pred_fallthru
          _
        // Predicated region
        $region41: #{basic_block_pallas.1} parent=31 // pred_check
          %p307 = pneg %p122
        $region42: #{basic_block_pallas.1} parent=31 // pred_check_branch
          %309 = sbr.rel (%p307) target = $region44
        $region43: #{basic_block_pallas.1} parent=31 // pred_region
          %s310 = sadd.s32 %s24, 1
          %s311 = smul.u32 %s310, 4
          %p312 = scmp.lt.s32.totalorder %s311, 7
          %s313 = scalar_select %p312, %s311, 7
          %s314 = smul.u32 2, %s313
          %p315 = scmp.lt.s32.totalorder %s23, 1
          %s316 = scalar_select %p315, %s23, 1
          %p317 = scmp.lt.s32.totalorder %s314, 15
          %s318 = scalar_select %p317, %s314, 15
          %s319 = smul.addr %s318, 2
          %s320 = smul.addr %s316, 32
          %s321 = sadd.s32 %s319, %s320
          %s322 = smul.addr %s321, 8
          %s323 = scalar_lea.vmem %s2, %s322
          %s324 = sadd.s32 %s24, 1
          %s325 = smul.u32 %s324, 4
          %p326 = scmp.lt.s32.totalorder %s325, 7
          %s327 = scalar_select %p326, %s325, 7
          %s328 = smul.u32 2, %s327
        $region44: #{basic_block_pallas.1} parent=31 // pred_fallthru
          _
      $region32: #{basic_block_pallas.1} parent=5 // pred_fallthru
        _
      %p329 = scmp.le.s32.totalorder 1, %s16
      %p330 = scmp.lt.s32.totalorder %s16, 5
      %p331 = pnand %p329, %p330
      %p332 = pneg %p331
      // Predicated region
      $region45: #{basic_block_pallas.1} parent=5 // pred_check
        _
      $region46: #{basic_block_pallas.1} parent=5 // pred_check_branch
        %334 = sbr.rel (%p331) target = $region48
      $region47: #{basic_block_pallas.1} parent=5 // pred_region
        %s335 = ssub.s32 %s16, 1
        %s336 = smul.u32 8, %s26
        %p337 = scmp.lt.s32.totalorder %s25, 1
        %s338 = scalar_select %p337, %s25, 1
        %p339 = scmp.lt.s32.totalorder %s336, 15
        %s340 = scalar_select %p339, %s336, 15
        %s341 = smul.addr %s340, 2
        %s342 = smul.addr %s338, 32
        %s343 = sadd.s32 %s341, %s342
        %s344 = smul.addr %s343, 8
        %s345 = scalar_lea.vmem %s0, %s344
        %p346 = pneg %p56
        %p347 = pneg %p53
        %s348 = smul.u32 %s26, 4
        %s349 = ssub.s32 %s348, 1
        %p350 = scmp.gt.s32.totalorder %s349, 0
        %s351 = scalar_select %p350, %s349, 0
        %s352 = smul.u32 2, %s351
        %p353 = scmp.lt.s32.totalorder %s25, 1
        %s354 = scalar_select %p353, %s25, 1
        %p355 = scmp.lt.s32.totalorder %s352, 15
        %s356 = scalar_select %p355, %s352, 15
        %s357 = smul.addr %s356, 2
        %s358 = smul.addr %s354, 32
        %s359 = sadd.s32 %s357, %s358
        %s360 = smul.addr %s359, 8
        %s361 = scalar_lea.vmem %s1, %s360
        %p362 = pneg %p92
        %p363 = pneg %p89
        %s364 = sadd.s32 %s26, 1
        %s365 = smul.u32 %s364, 4
        %p366 = scmp.lt.s32.totalorder %s365, 7
        %s367 = scalar_select %p366, %s365, 7
        %s368 = smul.u32 2, %s367
        %p369 = scmp.lt.s32.totalorder %s25, 1
        %s370 = scalar_select %p369, %s25, 1
        %p371 = scmp.lt.s32.totalorder %s368, 15
        %s372 = scalar_select %p371, %s368, 15
        %s373 = smul.addr %s372, 2
        %s374 = smul.addr %s370, 32
        %s375 = sadd.s32 %s373, %s374
        %s376 = smul.addr %s375, 8
        %s377 = scalar_lea.vmem %s2, %s376
        %p378 = pneg %p128
        %p379 = pneg %p125
        %p380 = pneg %p149
        %p381 = pneg %p146
        %p382 = pneg %p170
        %p383 = pneg %p167
        %p384 = pneg %p191
        %p385 = pneg %p188
        %p386 = pneg %p212
        %p387 = pneg %p209
        %p388 = pneg %p240
        %p389 = pneg %p237
        %s390 = sand.u32 %s227, 1
        %s391 = scalar_lea.sflag [#allocation5], %s390
        %s392 = sand.u32 %s227, 1
        %s393 = smul.addr %s392, 128
        %s394 = scalar_lea.vmem [#allocation4], %s393
        %s395 = smul.u32 8, %s26
        %p396 = scmp.lt.s32.totalorder %s25, 1
        %s397 = scalar_select %p396, %s25, 1
        %p398 = scmp.lt.s32.totalorder %s395, 15
        %s399 = scalar_select %p398, %s395, 15
        %s400 = smul.addr %s399, 2
        %s401 = smul.addr %s397, 32
        %s402 = sadd.s32 %s400, %s401
        %s403 = smul.addr %s402, 8
        %s404 = scalar_lea.vmem %s0, %s403
        %s405 = smul.u32 8, %s26
        %s406 = smul.u32 %s26, 4
        %s407 = ssub.s32 %s406, 1
        %p408 = scmp.gt.s32.totalorder %s407, 0
        %s409 = scalar_select %p408, %s407, 0
        %s410 = smul.u32 2, %s409
        %p411 = scmp.lt.s32.totalorder %s25, 1
        %s412 = scalar_select %p411, %s25, 1
        %p413 = scmp.lt.s32.totalorder %s410, 15
        %s414 = scalar_select %p413, %s410, 15
        %s415 = smul.addr %s414, 2
        %s416 = smul.addr %s412, 32
        %s417 = sadd.s32 %s415, %s416
        %s418 = smul.addr %s417, 8
        %s419 = scalar_lea.vmem %s1, %s418
        %s420 = smul.u32 %s26, 4
        %s421 = ssub.s32 %s420, 1
        %p422 = scmp.gt.s32.totalorder %s421, 0
        %s423 = scalar_select %p422, %s421, 0
        %s424 = smul.u32 2, %s423
        %s425 = sadd.s32 %s26, 1
        %s426 = smul.u32 %s425, 4
        %p427 = scmp.lt.s32.totalorder %s426, 7
        %s428 = scalar_select %p427, %s426, 7
        %s429 = smul.u32 2, %s428
        %p430 = scmp.lt.s32.totalorder %s25, 1
        %s431 = scalar_select %p430, %s25, 1
        %p432 = scmp.lt.s32.totalorder %s429, 15
        %s433 = scalar_select %p432, %s429, 15
        %s434 = smul.addr %s433, 2
        %s435 = smul.addr %s431, 32
        %s436 = sadd.s32 %s434, %s435
        %s437 = smul.addr %s436, 8
        %s438 = scalar_lea.vmem %s2, %s437
        %s439 = sadd.s32 %s26, 1
        %s440 = smul.u32 %s439, 4
        %p441 = scmp.lt.s32.totalorder %s440, 7
        %s442 = scalar_select %p441, %s440, 7
        %s443 = smul.u32 2, %s442
        %s444 = smul.u32 8, %s26
        %v446 = vld [vmem:[%s404] sm:$0xff]
        %v447 = vld [vmem:[%s404 + $0x8] sm:$0xff]
        %v448 = vld [vmem:[%s404 + $0x10] sm:$0xff]
        %v449 = vld [vmem:[%s404 + $0x18] sm:$0xff]
        %v450 = vld [vmem:[%s404 + $0x20] sm:$0xff]
        %v451 = vld [vmem:[%s404 + $0x28] sm:$0xff]
        %v452 = vld [vmem:[%s404 + $0x30] sm:$0xff]
        %v453 = vld [vmem:[%s404 + $0x38] sm:$0xff]
        %v454 = vld [vmem:[%s404 + $0x40] sm:$0xff]
        %v455 = vld [vmem:[%s404 + $0x48] sm:$0xff]
        %v456 = vld [vmem:[%s404 + $0x50] sm:$0xff]
        %v457 = vld [vmem:[%s404 + $0x58] sm:$0xff]
        %v458 = vld [vmem:[%s404 + $0x60] sm:$0xff]
        %v459 = vld [vmem:[%s404 + $0x68] sm:$0xff]
        %v460 = vld [vmem:[%s404 + $0x70] sm:$0xff]
        %v461 = vld [vmem:[%s404 + $0x78] sm:$0xff]
        %vm462 = vcmask 1040384
        %vm463 = vsmask.f32 256
        %vm464 = vmand %vm462, %vm463
        %v465 = vld [vmem:[#allocation2] sm:$0x1]
        %v466 = vsel %vm464, 0, %v465
        %467 = vst [vmem:[#allocation2] sm:$0x1] %v466
        %v468 = vld [vmem:[#allocation2 + $0xc] sm:$0x1]
        %v469 = vsel %vm464, 0, %v468
        %470 = vst [vmem:[#allocation2 + $0xc] sm:$0x1] %v469
        %v471 = vld [vmem:[#allocation2 + $0x18] sm:$0x1]
        %v472 = vsel %vm464, 0, %v471
        %473 = vst [vmem:[#allocation2 + $0x18] sm:$0x1] %v472
        %v474 = vld [vmem:[#allocation2 + $0x24] sm:$0x1]
        %v475 = vsel %vm464, 0, %v474
        %476 = vst [vmem:[#allocation2 + $0x24] sm:$0x1] %v475
        %v477 = vld [vmem:[#allocation2 + $0x30] sm:$0x1]
        %v478 = vsel %vm464, 0, %v477
        %479 = vst [vmem:[#allocation2 + $0x30] sm:$0x1] %v478
        %v480 = vld [vmem:[#allocation2 + $0x3c] sm:$0x1]
        %v481 = vsel %vm464, 0, %v480
        %482 = vst [vmem:[#allocation2 + $0x3c] sm:$0x1] %v481
        %v483 = vld [vmem:[#allocation2 + $0x48] sm:$0x1]
        %v484 = vsel %vm464, 0, %v483
        %485 = vst [vmem:[#allocation2 + $0x48] sm:$0x1] %v484
        %v486 = vld [vmem:[#allocation2 + $0x54] sm:$0x1]
        %v487 = vsel %vm464, 0, %v486
        %488 = vst [vmem:[#allocation2 + $0x54] sm:$0x1] %v487
        %v489 = vld [vmem:[#allocation2 + $0x60] sm:$0x1]
        %v490 = vsel %vm464, 0, %v489
        %491 = vst [vmem:[#allocation2 + $0x60] sm:$0x1] %v490
        %v492 = vld [vmem:[#allocation2 + $0x6c] sm:$0x1]
        %v493 = vsel %vm464, 0, %v492
        %494 = vst [vmem:[#allocation2 + $0x6c] sm:$0x1] %v493
        %v495 = vld [vmem:[#allocation2 + $0x78] sm:$0x1]
        %v496 = vsel %vm464, 0, %v495
        %497 = vst [vmem:[#allocation2 + $0x78] sm:$0x1] %v496
        %v498 = vld [vmem:[#allocation2 + $0x84] sm:$0x1]
        %v499 = vsel %vm464, 0, %v498
        %500 = vst [vmem:[#allocation2 + $0x84] sm:$0x1] %v499
        %vm501 = vsmask.f32 7938
        %vm502 = vmand %vm462, %vm501
        %v503 = vld [vmem:[#allocation2 + $0x8] sm:$0x1]
        %v504 = vsel %vm502, 0, %v503
        %505 = vst [vmem:[#allocation2 + $0x8] sm:$0x1] %v504
        %v506 = vld [vmem:[#allocation2 + $0x14] sm:$0x1]
        %v507 = vsel %vm502, 0, %v506
        %508 = vst [vmem:[#allocation2 + $0x14] sm:$0x1] %v507
        %v509 = vld [vmem:[#allocation2 + $0x20] sm:$0x1]
        %v510 = vsel %vm502, 0, %v509
        %511 = vst [vmem:[#allocation2 + $0x20] sm:$0x1] %v510
        %v512 = vld [vmem:[#allocation2 + $0x2c] sm:$0x1]
        %v513 = vsel %vm502, 0, %v512
        %514 = vst [vmem:[#allocation2 + $0x2c] sm:$0x1] %v513
        %v515 = vld [vmem:[#allocation2 + $0x38] sm:$0x1]
        %v516 = vsel %vm502, 0, %v515
        %517 = vst [vmem:[#allocation2 + $0x38] sm:$0x1] %v516
        %v518 = vld [vmem:[#allocation2 + $0x44] sm:$0x1]
        %v519 = vsel %vm502, 0, %v518
        %520 = vst [vmem:[#allocation2 + $0x44] sm:$0x1] %v519
        %v521 = vld [vmem:[#allocation2 + $0x50] sm:$0x1]
        %v522 = vsel %vm502, 0, %v521
        %523 = vst [vmem:[#allocation2 + $0x50] sm:$0x1] %v522
        %v524 = vld [vmem:[#allocation2 + $0x5c] sm:$0x1]
        %v525 = vsel %vm502, 0, %v524
        %526 = vst [vmem:[#allocation2 + $0x5c] sm:$0x1] %v525
        %v527 = vld [vmem:[#allocation2 + $0x68] sm:$0x1]
        %v528 = vsel %vm502, 0, %v527
        %529 = vst [vmem:[#allocation2 + $0x68] sm:$0x1] %v528
        %v530 = vld [vmem:[#allocation2 + $0x74] sm:$0x1]
        %v531 = vsel %vm502, 0, %v530
        %532 = vst [vmem:[#allocation2 + $0x74] sm:$0x1] %v531
        %v533 = vld [vmem:[#allocation2 + $0x80] sm:$0x1]
        %v534 = vsel %vm502, 0, %v533
        %535 = vst [vmem:[#allocation2 + $0x80] sm:$0x1] %v534
        %v536 = vld [vmem:[#allocation2 + $0x8c] sm:$0x1]
        %v537 = vsel %vm502, 0, %v536
        %538 = vst [vmem:[#allocation2 + $0x8c] sm:$0x1] %v537
        %v539 = vld [vmem:[%s419] sm:$0xff]
        %v540 = vld [vmem:[%s419 + $0x8] sm:$0xff]
        %v541 = vld [vmem:[%s419 + $0x10] sm:$0xff]
        %v542 = vld [vmem:[%s419 + $0x18] sm:$0xff]
        %p543 = scmp.eq.s32.totalorder %s26, 0
        %s544 = scalar_select %p543, 0.0, 1.0
        %v545 = vstv %s544
        %v546 = vmul.f32 %v539, %v545
        %v547 = vmul.f32 %v540, %v545
        %v548 = vmul.f32 %v541, %v545
        %v549 = vmul.f32 %v542, %v545
        %v550 = vld [vmem:[%s438] sm:$0xff]
        %v551 = vld [vmem:[%s438 + $0x8] sm:$0xff]
        %v552 = vld [vmem:[%s438 + $0x10] sm:$0xff]
        %v553 = vld [vmem:[%s438 + $0x18] sm:$0xff]
        %p554 = scmp.eq.s32.totalorder %s26, 1
        %s555 = scalar_select %p554, 0.0, 1.0
        %v556 = vstv %s555
        %v557 = vmul.f32 %v550, %v556
        %v558 = vmul.f32 %v551, %v556
        %v559 = vmul.f32 %v552, %v556
        %v560 = vmul.f32 %v553, %v556
        %v561 = vpack.c.bf16 %v547, %v546
        %v562 = vpack.c.bf16 %v549, %v548
        %v565 = vunpack.c.l.b16 %v561
        %v566 = vunpack.c.h.b16 %v561
        %v567 = vunpack.c.l.b16 %v562
        %v568 = vunpack.c.h.b16 %v562
        %v569 = vpack.c.b16 %v565, %v565
        %v570 = vpack.c.b16 %v566, %v566
        %v571 = vpack.c.b16 %v567, %v567
        %v572 = vpack.c.b16 %v568, %v568
        %vm573 = vsmask.f32 4368
        %vm574 = vmor %vm463, %vm573
        %v576 = vshrl.u32 %v569, 16
        %v578 = vrot.slane %v576, 7
        %v579 = vshll.u32 %v569, 16
        %v581 = vor.u32 %v578, %v579
        %v582 = vrot.slane %v578, 4
        %v584 = vshrl.u32 %v570, 16
        %v586 = vrot.slane %v584, 7
        %v587 = vshll.u32 %v570, 16
        %v589 = vor.u32 %v586, %v587
        %v590 = vsel %vm574, %v582, %v589
        %v591 = vrot.slane %v586, 4
        %v593 = vshrl.u32 %v571, 16
        %v595 = vrot.slane %v593, 7
        %v596 = vshll.u32 %v571, 16
        %v598 = vor.u32 %v595, %v596
        %v599 = vrot.slane %v595, 4
        %v601 = vshrl.u32 %v572, 16
        %v603 = vrot.slane %v601, 7
        %v604 = vshll.u32 %v572, 16
        %v606 = vor.u32 %v603, %v604
        %v607 = vsel %vm574, %v599, %v606
        %v608 = vrot.slane %v603, 4
        %vm615 = vcmask 1043456
        %vm616 = vmand %vm615, %vm501
        %v617 = vld [vmem:[#allocation2] sm:$0xf]
        %v618 = vsel %vm616, %v581, %v617
        %619 = vst [vmem:[#allocation2] sm:$0xf] %v618
        %620 = vst [vmem:[#allocation2 + $0x4] sm:$0xf] %v590
        %v621 = vld [vmem:[#allocation2 + $0x8] sm:$0x1]
        %v622 = vsel %vm464, %v591, %v621
        %623 = vst [vmem:[#allocation2 + $0x8] sm:$0x1] %v622
        %v624 = vld [vmem:[#allocation2 + $0xc] sm:$0xf]
        %v625 = vsel %vm616, %v598, %v624
        %626 = vst [vmem:[#allocation2 + $0xc] sm:$0xf] %v625
        %627 = vst [vmem:[#allocation2 + $0x10] sm:$0xf] %v607
        %v628 = vld [vmem:[#allocation2 + $0x14] sm:$0x1]
        %v629 = vsel %vm464, %v608, %v628
        %630 = vst [vmem:[#allocation2 + $0x14] sm:$0x1] %v629
        %v631 = vpack.c.bf16 %v447, %v446
        %v632 = vpack.c.bf16 %v449, %v448
        %v633 = vpack.c.bf16 %v451, %v450
        %v634 = vpack.c.bf16 %v453, %v452
        %v635 = vpack.c.bf16 %v455, %v454
        %v636 = vpack.c.bf16 %v457, %v456
        %v637 = vpack.c.bf16 %v459, %v458
        %v638 = vpack.c.bf16 %v461, %v460
        %v647 = vunpack.c.l.b16 %v631
        %v648 = vunpack.c.h.b16 %v631
        %v649 = vunpack.c.l.b16 %v632
        %v650 = vunpack.c.h.b16 %v632
        %v651 = vunpack.c.l.b16 %v633
        %v652 = vunpack.c.h.b16 %v633
        %v653 = vunpack.c.l.b16 %v634
        %v654 = vunpack.c.h.b16 %v634
        %v655 = vunpack.c.l.b16 %v635
        %v656 = vunpack.c.h.b16 %v635
        %v657 = vunpack.c.l.b16 %v636
        %v658 = vunpack.c.h.b16 %v636
        %v659 = vunpack.c.l.b16 %v637
        %v660 = vunpack.c.h.b16 %v637
        %v661 = vunpack.c.l.b16 %v638
        %v662 = vunpack.c.h.b16 %v638
        %v663 = vpack.c.b16 %v647, %v647
        %v664 = vpack.c.b16 %v648, %v648
        %v665 = vpack.c.b16 %v649, %v649
        %v666 = vpack.c.b16 %v650, %v650
        %v667 = vpack.c.b16 %v651, %v651
        %v668 = vpack.c.b16 %v652, %v652
        %v669 = vpack.c.b16 %v653, %v653
        %v670 = vpack.c.b16 %v654, %v654
        %v671 = vpack.c.b16 %v655, %v655
        %v672 = vpack.c.b16 %v656, %v656
        %v673 = vpack.c.b16 %v657, %v657
        %v674 = vpack.c.b16 %v658, %v658
        %v675 = vpack.c.b16 %v659, %v659
        %v676 = vpack.c.b16 %v660, %v660
        %v677 = vpack.c.b16 %v661, %v661
        %v678 = vpack.c.b16 %v662, %v662
        %v680 = vshrl.u32 %v663, 16
        %v682 = vrot.slane %v680, 7
        %v683 = vshll.u32 %v663, 16
        %v685 = vor.u32 %v682, %v683
        %v686 = vrot.slane %v682, 4
        %v688 = vshrl.u32 %v664, 16
        %v690 = vrot.slane %v688, 7
        %v691 = vshll.u32 %v664, 16
        %v693 = vor.u32 %v690, %v691
        %v694 = vsel %vm574, %v686, %v693
        %v695 = vrot.slane %v690, 4
        %v697 = vshrl.u32 %v665, 16
        %v699 = vrot.slane %v697, 7
        %v700 = vshll.u32 %v665, 16
        %v702 = vor.u32 %v699, %v700
        %v703 = vrot.slane %v699, 4
        %v705 = vshrl.u32 %v666, 16
        %v707 = vrot.slane %v705, 7
        %v708 = vshll.u32 %v666, 16
        %v710 = vor.u32 %v707, %v708
        %v711 = vsel %vm574, %v703, %v710
        %v712 = vrot.slane %v707, 4
        %v714 = vshrl.u32 %v667, 16
        %v716 = vrot.slane %v714, 7
        %v717 = vshll.u32 %v667, 16
        %v719 = vor.u32 %v716, %v717
        %v720 = vrot.slane %v716, 4
        %v722 = vshrl.u32 %v668, 16
        %v724 = vrot.slane %v722, 7
        %v725 = vshll.u32 %v668, 16
        %v727 = vor.u32 %v724, %v725
        %v728 = vsel %vm574, %v720, %v727
        %v729 = vrot.slane %v724, 4
        %v731 = vshrl.u32 %v669, 16
        %v733 = vrot.slane %v731, 7
        %v734 = vshll.u32 %v669, 16
        %v736 = vor.u32 %v733, %v734
        %v737 = vrot.slane %v733, 4
        %v739 = vshrl.u32 %v670, 16
        %v741 = vrot.slane %v739, 7
        %v742 = vshll.u32 %v670, 16
        %v744 = vor.u32 %v741, %v742
        %v745 = vsel %vm574, %v737, %v744
        %v746 = vrot.slane %v741, 4
        %v748 = vshrl.u32 %v671, 16
        %v750 = vrot.slane %v748, 7
        %v751 = vshll.u32 %v671, 16
        %v753 = vor.u32 %v750, %v751
        %v754 = vrot.slane %v750, 4
        %v756 = vshrl.u32 %v672, 16
        %v758 = vrot.slane %v756, 7
        %v759 = vshll.u32 %v672, 16
        %v761 = vor.u32 %v758, %v759
        %v762 = vsel %vm574, %v754, %v761
        %v763 = vrot.slane %v758, 4
        %v765 = vshrl.u32 %v673, 16
        %v767 = vrot.slane %v765, 7
        %v768 = vshll.u32 %v673, 16
        %v770 = vor.u32 %v767, %v768
        %v771 = vrot.slane %v767, 4
        %v773 = vshrl.u32 %v674, 16
        %v775 = vrot.slane %v773, 7
        %v776 = vshll.u32 %v674, 16
        %v778 = vor.u32 %v775, %v776
        %v779 = vsel %vm574, %v771, %v778
        %v780 = vrot.slane %v775, 4
        %v782 = vshrl.u32 %v675, 16
        %v784 = vrot.slane %v782, 7
        %v785 = vshll.u32 %v675, 16
        %v787 = vor.u32 %v784, %v785
        %v788 = vrot.slane %v784, 4
        %v790 = vshrl.u32 %v676, 16
        %v792 = vrot.slane %v790, 7
        %v793 = vshll.u32 %v676, 16
        %v795 = vor.u32 %v792, %v793
        %v796 = vsel %vm574, %v788, %v795
        %v797 = vrot.slane %v792, 4
        %v799 = vshrl.u32 %v677, 16
        %v801 = vrot.slane %v799, 7
        %v802 = vshll.u32 %v677, 16
        %v804 = vor.u32 %v801, %v802
        %v805 = vrot.slane %v801, 4
        %v807 = vshrl.u32 %v678, 16
        %v809 = vrot.slane %v807, 7
        %v810 = vshll.u32 %v678, 16
        %v812 = vor.u32 %v809, %v810
        %v813 = vsel %vm574, %v805, %v812
        %v814 = vrot.slane %v809, 4
        %s839 = scalar_lea.vmem [#allocation2], 24
        %v840 = vld [vmem:[%s839] sm:$0xf]
        %v841 = vsel %vm616, %v685, %v840
        %842 = vst [vmem:[%s839] sm:$0xf] %v841
        %843 = vst [vmem:[%s839 + $0x4] sm:$0xf] %v694
        %v844 = vld [vmem:[%s839 + $0x8] sm:$0x1]
        %v845 = vsel %vm464, %v695, %v844
        %846 = vst [vmem:[%s839 + $0x8] sm:$0x1] %v845
        %v847 = vld [vmem:[%s839 + $0xc] sm:$0xf]
        %v848 = vsel %vm616, %v702, %v847
        %849 = vst [vmem:[%s839 + $0xc] sm:$0xf] %v848
        %850 = vst [vmem:[%s839 + $0x10] sm:$0xf] %v711
        %v851 = vld [vmem:[%s839 + $0x14] sm:$0x1]
        %v852 = vsel %vm464, %v712, %v851
        %853 = vst [vmem:[%s839 + $0x14] sm:$0x1] %v852
        %v854 = vld [vmem:[%s839 + $0x18] sm:$0xf]
        %v855 = vsel %vm616, %v719, %v854
        %856 = vst [vmem:[%s839 + $0x18] sm:$0xf] %v855
        %857 = vst [vmem:[%s839 + $0x1c] sm:$0xf] %v728
        %v858 = vld [vmem:[%s839 + $0x20] sm:$0x1]
        %v859 = vsel %vm464, %v729, %v858
        %860 = vst [vmem:[%s839 + $0x20] sm:$0x1] %v859
        %v861 = vld [vmem:[%s839 + $0x24] sm:$0xf]
        %v862 = vsel %vm616, %v736, %v861
        %863 = vst [vmem:[%s839 + $0x24] sm:$0xf] %v862
        %864 = vst [vmem:[%s839 + $0x28] sm:$0xf] %v745
        %v865 = vld [vmem:[%s839 + $0x2c] sm:$0x1]
        %v866 = vsel %vm464, %v746, %v865
        %867 = vst [vmem:[%s839 + $0x2c] sm:$0x1] %v866
        %v868 = vld [vmem:[%s839 + $0x30] sm:$0xf]
        %v869 = vsel %vm616, %v753, %v868
        %870 = vst [vmem:[%s839 + $0x30] sm:$0xf] %v869
        %871 = vst [vmem:[%s839 + $0x34] sm:$0xf] %v762
        %v872 = vld [vmem:[%s839 + $0x38] sm:$0x1]
        %v873 = vsel %vm464, %v763, %v872
        %874 = vst [vmem:[%s839 + $0x38] sm:$0x1] %v873
        %v875 = vld [vmem:[%s839 + $0x3c] sm:$0xf]
        %v876 = vsel %vm616, %v770, %v875
        %877 = vst [vmem:[%s839 + $0x3c] sm:$0xf] %v876
        %878 = vst [vmem:[%s839 + $0x40] sm:$0xf] %v779
        %v879 = vld [vmem:[%s839 + $0x44] sm:$0x1]
        %v880 = vsel %vm464, %v780, %v879
        %881 = vst [vmem:[%s839 + $0x44] sm:$0x1] %v880
        %v882 = vld [vmem:[%s839 + $0x48] sm:$0xf]
        %v883 = vsel %vm616, %v787, %v882
        %884 = vst [vmem:[%s839 + $0x48] sm:$0xf] %v883
        %885 = vst [vmem:[%s839 + $0x4c] sm:$0xf] %v796
        %v886 = vld [vmem:[%s839 + $0x50] sm:$0x1]
        %v887 = vsel %vm464, %v797, %v886
        %888 = vst [vmem:[%s839 + $0x50] sm:$0x1] %v887
        %v889 = vld [vmem:[%s839 + $0x54] sm:$0xf]
        %v890 = vsel %vm616, %v804, %v889
        %891 = vst [vmem:[%s839 + $0x54] sm:$0xf] %v890
        %892 = vst [vmem:[%s839 + $0x58] sm:$0xf] %v813
        %v893 = vld [vmem:[%s839 + $0x5c] sm:$0x1]
        %v894 = vsel %vm464, %v814, %v893
        %895 = vst [vmem:[%s839 + $0x5c] sm:$0x1] %v894
        %v896 = vpack.c.bf16 %v558, %v557
        %v897 = vpack.c.bf16 %v560, %v559
        %v900 = vunpack.c.l.b16 %v896
        %v901 = vunpack.c.h.b16 %v896
        %v902 = vunpack.c.l.b16 %v897
        %v903 = vunpack.c.h.b16 %v897
        %v904 = vpack.c.b16 %v900, %v900
        %v905 = vpack.c.b16 %v901, %v901
        %v906 = vpack.c.b16 %v902, %v902
        %v907 = vpack.c.b16 %v903, %v903
        %v909 = vshrl.u32 %v904, 16
        %v911 = vrot.slane %v909, 7
        %v912 = vshll.u32 %v904, 16
        %v914 = vor.u32 %v911, %v912
        %v915 = vrot.slane %v911, 4
        %v917 = vshrl.u32 %v905, 16
        %v919 = vrot.slane %v917, 7
        %v920 = vshll.u32 %v905, 16
        %v922 = vor.u32 %v919, %v920
        %v923 = vsel %vm574, %v915, %v922
        %v924 = vrot.slane %v919, 4
        %v926 = vshrl.u32 %v906, 16
        %v928 = vrot.slane %v926, 7
        %v929 = vshll.u32 %v906, 16
        %v931 = vor.u32 %v928, %v929
        %v932 = vrot.slane %v928, 4
        %v934 = vshrl.u32 %v907, 16
        %v936 = vrot.slane %v934, 7
        %v937 = vshll.u32 %v907, 16
        %v939 = vor.u32 %v936, %v937
        %v940 = vsel %vm574, %v932, %v939
        %v941 = vrot.slane %v936, 4
        %s948 = scalar_lea.vmem [#allocation2], 120
        %v949 = vld [vmem:[%s948] sm:$0xf]
        %v950 = vsel %vm616, %v914, %v949
        %951 = vst [vmem:[%s948] sm:$0xf] %v950
        %952 = vst [vmem:[%s948 + $0x4] sm:$0xf] %v923
        %v953 = vld [vmem:[%s948 + $0x8] sm:$0x1]
        %v954 = vsel %vm464, %v924, %v953
        %955 = vst [vmem:[%s948 + $0x8] sm:$0x1] %v954
        %v956 = vld [vmem:[%s948 + $0xc] sm:$0xf]
        %v957 = vsel %vm616, %v931, %v956
        %958 = vst [vmem:[%s948 + $0xc] sm:$0xf] %v957
        %959 = vst [vmem:[%s948 + $0x10] sm:$0xf] %v940
        %v960 = vld [vmem:[%s948 + $0x14] sm:$0x1]
        %v961 = vsel %vm464, %v941, %v960
        %962 = vst [vmem:[%s948 + $0x14] sm:$0x1] %v961
        %v963 = vld [vmem:[#allocation2] sm:$0xf]
        %v964 = vld [vmem:[#allocation2 + $0x4] sm:$0xf]
        %v965 = vld [vmem:[#allocation2 + $0x8] sm:$0x1]
        %v966 = vld [vmem:[#allocation2 + $0xc] sm:$0xf]
        %v967 = vld [vmem:[#allocation2 + $0x10] sm:$0xf]
        %v968 = vld [vmem:[#allocation2 + $0x14] sm:$0x1]
        %v969 = vld [vmem:[#allocation2 + $0x18] sm:$0xf]
        %v970 = vld [vmem:[#allocation2 + $0x1c] sm:$0xf]
        %v971 = vld [vmem:[#allocation2 + $0x20] sm:$0x1]
        %v972 = vld [vmem:[#allocation2 + $0x24] sm:$0xf]
        %v973 = vld [vmem:[#allocation2 + $0x28] sm:$0xf]
        %v974 = vld [vmem:[#allocation2 + $0x2c] sm:$0x1]
        %v975 = vld [vmem:[#allocation2 + $0x30] sm:$0xf]
        %v976 = vld [vmem:[#allocation2 + $0x34] sm:$0xf]
        %v977 = vld [vmem:[#allocation2 + $0x38] sm:$0x1]
        %v978 = vld [vmem:[#allocation2 + $0x3c] sm:$0xf]
        %v979 = vld [vmem:[#allocation2 + $0x40] sm:$0xf]
        %v980 = vld [vmem:[#allocation2 + $0x44] sm:$0x1]
        %v981 = vld [vmem:[#allocation2 + $0x48] sm:$0xf]
        %v982 = vld [vmem:[#allocation2 + $0x4c] sm:$0xf]
        %v983 = vld [vmem:[#allocation2 + $0x50] sm:$0x1]
        %v984 = vld [vmem:[#allocation2 + $0x54] sm:$0xf]
        %v985 = vld [vmem:[#allocation2 + $0x58] sm:$0xf]
        %v986 = vld [vmem:[#allocation2 + $0x5c] sm:$0x1]
        %v987 = vld [vmem:[#allocation2 + $0x60] sm:$0xf]
        %v988 = vld [vmem:[#allocation2 + $0x64] sm:$0xf]
        %v989 = vld [vmem:[#allocation2 + $0x68] sm:$0x1]
        %v990 = vld [vmem:[#allocation2 + $0x6c] sm:$0xf]
        %v991 = vld [vmem:[#allocation2 + $0x70] sm:$0xf]
        %v992 = vld [vmem:[#allocation2 + $0x74] sm:$0x1]
        %v993 = vld [vmem:[#allocation2 + $0x78] sm:$0xf]
        %v994 = vld [vmem:[#allocation2 + $0x7c] sm:$0xf]
        %v995 = vld [vmem:[#allocation2 + $0x80] sm:$0x1]
        %v996 = vld [vmem:[#allocation2 + $0x84] sm:$0xf]
        %v997 = vld [vmem:[#allocation2 + $0x88] sm:$0xf]
        %v998 = vld [vmem:[#allocation2 + $0x8c] sm:$0x1]
        %v999 = vld [vmem:[%s3] sm:$0xf]
        %v1000 = vld [vmem:[%s3 + $0x4] sm:$0xf]
        %v1001 = vld [vmem:[%s3 + $0x8] sm:$0xf]
        %v1002 = vld [vmem:[%s3 + $0xc] sm:$0xf]
        %v1003 = vld [vmem:[%s3 + $0x10] sm:$0xf]
        %v1004 = vld [vmem:[%s3 + $0x14] sm:$0xf]
        %v1005 = vld [vmem:[%s3 + $0x18] sm:$0xf]
        %v1006 = vld [vmem:[%s3 + $0x1c] sm:$0xf]
        %v1007 = vld [vmem:[%s3 + $0x20] sm:$0xf]
        %v1008 = vld [vmem:[%s3 + $0x24] sm:$0xf]
        %v1009 = vld [vmem:[%s3 + $0x28] sm:$0xf]
        %v1010 = vld [vmem:[%s3 + $0x2c] sm:$0xf]
        %v1011 = vld [vmem:[%s3 + $0x30] sm:$0xf]
        %v1012 = vld [vmem:[%s3 + $0x34] sm:$0xf]
        %v1013 = vld [vmem:[%s3 + $0x38] sm:$0xf]
        %v1014 = vld [vmem:[%s3 + $0x3c] sm:$0xf]
        %v1015 = vld [vmem:[%s3 + $0x40] sm:$0xf]
        %v1016 = vld [vmem:[%s3 + $0x44] sm:$0xf]
        %v1017 = vld [vmem:[%s3 + $0x48] sm:$0xf]
        %v1018 = vld [vmem:[%s3 + $0x4c] sm:$0xf]
        %v1019 = vld [vmem:[%s3 + $0x50] sm:$0xf]
        %v1020 = vld [vmem:[%s3 + $0x54] sm:$0xf]
        %v1021 = vld [vmem:[%s3 + $0x58] sm:$0xf]
        %v1022 = vld [vmem:[%s3 + $0x5c] sm:$0xf]
        %v1023 = vld [vmem:[%s3 + $0x60] sm:$0xf]
        %v1024 = vld [vmem:[%s3 + $0x64] sm:$0xf]
        %v1025 = vld [vmem:[%s3 + $0x68] sm:$0xf]
        %v1026 = vld [vmem:[%s3 + $0x6c] sm:$0xf]
        %v1027 = vld [vmem:[%s3 + $0x70] sm:$0xf]
        %v1028 = vld [vmem:[%s3 + $0x74] sm:$0xf]
        %v1029 = vld [vmem:[%s3 + $0x78] sm:$0xf]
        %v1030 = vld [vmem:[%s3 + $0x7c] sm:$0xf]
        %v1031 = vld [vmem:[%s3 + $0x80] sm:$0xf]
        %v1032 = vld [vmem:[%s3 + $0x84] sm:$0xf]
        %v1033 = vld [vmem:[%s3 + $0x88] sm:$0xf]
        %v1034 = vld [vmem:[%s3 + $0x8c] sm:$0xf]
        %v1035 = vld [vmem:[%s3 + $0x90] sm:$0xf]
        %v1036 = vld [vmem:[%s3 + $0x94] sm:$0xf]
        %v1037 = vld [vmem:[%s3 + $0x98] sm:$0xf]
        %v1038 = vld [vmem:[%s3 + $0x9c] sm:$0xf]
        %v1039 = vld [vmem:[%s3 + $0xa0] sm:$0xf]
        %v1040 = vld [vmem:[%s3 + $0xa4] sm:$0xf]
        %v1041 = vld [vmem:[%s3 + $0xa8] sm:$0xf]
        %v1042 = vld [vmem:[%s3 + $0xac] sm:$0xf]
        %v1043 = vld [vmem:[%s3 + $0xb0] sm:$0xf]
        %v1044 = vld [vmem:[%s3 + $0xb4] sm:$0xf]
        %v1045 = vld [vmem:[%s3 + $0xb8] sm:$0xf]
        %v1046 = vld [vmem:[%s3 + $0xbc] sm:$0xf]
        %v1047 = vld [vmem:[%s3 + $0xc0] sm:$0xf]
        %v1048 = vld [vmem:[%s3 + $0xc4] sm:$0xf]
        %v1049 = vld [vmem:[%s3 + $0xc8] sm:$0xf]
        %v1050 = vld [vmem:[%s3 + $0xcc] sm:$0xf]
        %v1051 = vld [vmem:[%s3 + $0xd0] sm:$0xf]
        %v1052 = vld [vmem:[%s3 + $0xd4] sm:$0xf]
        %v1053 = vld [vmem:[%s3 + $0xd8] sm:$0xf]
        %v1054 = vld [vmem:[%s3 + $0xdc] sm:$0xf]
        %v1055 = vld [vmem:[%s3 + $0xe0] sm:$0xf]
        %v1056 = vld [vmem:[%s3 + $0xe4] sm:$0xf]
        %v1057 = vld [vmem:[%s3 + $0xe8] sm:$0xf]
        %v1058 = vld [vmem:[%s3 + $0xec] sm:$0xf]
        %v1059 = vld [vmem:[%s3 + $0xf0] sm:$0xf]
        %v1060 = vld [vmem:[%s3 + $0xf4] sm:$0xf]
        %v1061 = vld [vmem:[%s3 + $0xf8] sm:$0xf]
        %v1062 = vld [vmem:[%s3 + $0xfc] sm:$0xf]
        %v1063 = vld [vmem:[%s3 + $0x100] sm:$0xf]
        %v1064 = vld [vmem:[%s3 + $0x104] sm:$0xf]
        %v1065 = vld [vmem:[%s3 + $0x108] sm:$0xf]
        %v1066 = vld [vmem:[%s3 + $0x10c] sm:$0xf]
        %v1067 = vld [vmem:[%s3 + $0x110] sm:$0xf]
        %v1068 = vld [vmem:[%s3 + $0x114] sm:$0xf]
        %v1069 = vld [vmem:[%s3 + $0x118] sm:$0xf]
        %v1070 = vld [vmem:[%s3 + $0x11c] sm:$0xf]
        %v1071 = vld [vmem:[%s3 + $0x120] sm:$0xf]
        %v1072 = vld [vmem:[%s3 + $0x124] sm:$0xf]
        %v1073 = vld [vmem:[%s3 + $0x128] sm:$0xf]
        %v1074 = vld [vmem:[%s3 + $0x12c] sm:$0xf]
        %v1075 = vld [vmem:[%s3 + $0x130] sm:$0xf]
        %v1076 = vld [vmem:[%s3 + $0x134] sm:$0xf]
        %v1077 = vld [vmem:[%s3 + $0x138] sm:$0xf]
        %v1078 = vld [vmem:[%s3 + $0x13c] sm:$0xf]
        %v1079 = vld [vmem:[%s3 + $0x140] sm:$0xf]
        %v1080 = vld [vmem:[%s3 + $0x144] sm:$0xf]
        %v1081 = vld [vmem:[%s3 + $0x148] sm:$0xf]
        %v1082 = vld [vmem:[%s3 + $0x14c] sm:$0xf]
        %v1083 = vld [vmem:[%s3 + $0x150] sm:$0xf]
        %v1084 = vld [vmem:[%s3 + $0x154] sm:$0xf]
        %v1085 = vld [vmem:[%s3 + $0x158] sm:$0xf]
        %v1086 = vld [vmem:[%s3 + $0x15c] sm:$0xf]
        %v1087 = vld [vmem:[%s3 + $0x160] sm:$0xf]
        %v1088 = vld [vmem:[%s3 + $0x164] sm:$0xf]
        %v1089 = vld [vmem:[%s3 + $0x168] sm:$0xf]
        %v1090 = vld [vmem:[%s3 + $0x16c] sm:$0xf]
        %v1091 = vld [vmem:[%s3 + $0x170] sm:$0xf]
        %v1092 = vld [vmem:[%s3 + $0x174] sm:$0xf]
        %v1093 = vld [vmem:[%s3 + $0x178] sm:$0xf]
        %v1094 = vld [vmem:[%s3 + $0x17c] sm:$0xf]
        %v1095 = vld [vmem:[%s3 + $0x180] sm:$0xf]
        %v1096 = vld [vmem:[%s3 + $0x184] sm:$0xf]
        %v1097 = vld [vmem:[%s3 + $0x188] sm:$0xf]
        %v1098 = vld [vmem:[%s3 + $0x18c] sm:$0xf]
        %v1099 = vld [vmem:[%s3 + $0x190] sm:$0xf]
        %v1100 = vld [vmem:[%s3 + $0x194] sm:$0xf]
        %v1101 = vld [vmem:[%s3 + $0x198] sm:$0xf]
        %v1102 = vld [vmem:[%s3 + $0x19c] sm:$0xf]
        %v1103 = vld [vmem:[%s3 + $0x1a0] sm:$0xf]
        %v1104 = vld [vmem:[%s3 + $0x1a4] sm:$0xf]
        %v1105 = vld [vmem:[%s3 + $0x1a8] sm:$0xf]
        %v1106 = vld [vmem:[%s3 + $0x1ac] sm:$0xf]
        %v1107 = vld [vmem:[%s3 + $0x1b0] sm:$0xf]
        %v1108 = vld [vmem:[%s3 + $0x1b4] sm:$0xf]
        %v1109 = vld [vmem:[%s3 + $0x1b8] sm:$0xf]
        %v1110 = vld [vmem:[%s3 + $0x1bc] sm:$0xf]
        %v1111 = vld [vmem:[%s3 + $0x1c0] sm:$0xf]
        %v1112 = vld [vmem:[%s3 + $0x1c4] sm:$0xf]
        %v1113 = vld [vmem:[%s3 + $0x1c8] sm:$0xf]
        %v1114 = vld [vmem:[%s3 + $0x1cc] sm:$0xf]
        %v1115 = vld [vmem:[%s3 + $0x1d0] sm:$0xf]
        %v1116 = vld [vmem:[%s3 + $0x1d4] sm:$0xf]
        %v1117 = vld [vmem:[%s3 + $0x1d8] sm:$0xf]
        %v1118 = vld [vmem:[%s3 + $0x1dc] sm:$0xf]
        %v1119 = vld [vmem:[%s3 + $0x1e0] sm:$0xf]
        %v1120 = vld [vmem:[%s3 + $0x1e4] sm:$0xf]
        %v1121 = vld [vmem:[%s3 + $0x1e8] sm:$0xf]
        %v1122 = vld [vmem:[%s3 + $0x1ec] sm:$0xf]
        %v1123 = vld [vmem:[%s3 + $0x1f0] sm:$0xf]
        %v1124 = vld [vmem:[%s3 + $0x1f4] sm:$0xf]
        %v1125 = vld [vmem:[%s3 + $0x1f8] sm:$0xf]
        %v1126 = vld [vmem:[%s3 + $0x1fc] sm:$0xf]
        %v1127 = vld [vmem:[%s3 + $0x200] sm:$0xf]
        %v1128 = vld [vmem:[%s3 + $0x204] sm:$0xf]
        %v1129 = vld [vmem:[%s3 + $0x208] sm:$0xf]
        %v1130 = vld [vmem:[%s3 + $0x20c] sm:$0xf]
        %v1131 = vld [vmem:[%s3 + $0x210] sm:$0xf]
        %v1132 = vld [vmem:[%s3 + $0x214] sm:$0xf]
        %v1133 = vld [vmem:[%s3 + $0x218] sm:$0xf]
        %v1134 = vld [vmem:[%s3 + $0x21c] sm:$0xf]
        %v1135 = vld [vmem:[%s3 + $0x220] sm:$0xf]
        %v1136 = vld [vmem:[%s3 + $0x224] sm:$0xf]
        %v1137 = vld [vmem:[%s3 + $0x228] sm:$0xf]
        %v1138 = vld [vmem:[%s3 + $0x22c] sm:$0xf]
        %v1139 = vld [vmem:[%s3 + $0x230] sm:$0xf]
        %v1140 = vld [vmem:[%s3 + $0x234] sm:$0xf]
        %v1141 = vld [vmem:[%s3 + $0x238] sm:$0xf]
        %v1142 = vld [vmem:[%s3 + $0x23c] sm:$0xf]
        %v1163 = vunpack.c.l.b16 %v963
        %v1164 = vunpack.c.l.b16 %v964
        %v1165 = vunpack.c.l.b16 %v966
        %v1166 = vunpack.c.l.b16 %v967
        %v1167 = vunpack.c.l.b16 %v969
        %v1168 = vunpack.c.l.b16 %v970
        %v1169 = vunpack.c.l.b16 %v972
        %v1170 = vunpack.c.l.b16 %v973
        %v1171 = vunpack.c.l.b16 %v975
        %v1172 = vunpack.c.l.b16 %v976
        %v1173 = vunpack.c.l.b16 %v978
        %v1174 = vunpack.c.l.b16 %v979
        %v1175 = vunpack.c.l.b16 %v981
        %v1176 = vunpack.c.l.b16 %v982
        %v1177 = vunpack.c.l.b16 %v984
        %v1178 = vunpack.c.l.b16 %v985
        %v1179 = vunpack.c.l.b16 %v987
        %v1180 = vunpack.c.l.b16 %v988
        %v1181 = vunpack.c.l.b16 %v990
        %v1182 = vunpack.c.l.b16 %v991
        %v1183 = vpack.c.b16 %v1164, %v1163
        %v1184 = vpack.c.b16 %v1166, %v1165
        %v1185 = vpack.c.b16 %v1168, %v1167
        %v1186 = vpack.c.b16 %v1170, %v1169
        %v1187 = vpack.c.b16 %v1172, %v1171
        %v1188 = vpack.c.b16 %v1174, %v1173
        %v1189 = vpack.c.b16 %v1176, %v1175
        %v1190 = vpack.c.b16 %v1178, %v1177
        %v1191 = vpack.c.b16 %v1180, %v1179
        %v1192 = vpack.c.b16 %v1182, %v1181
        %v1213 = vunpack.c.l.b16 %v965
        %v1214 = vunpack.c.l.b16 %v968
        %v1215 = vunpack.c.l.b16 %v971
        %v1216 = vunpack.c.l.b16 %v974
        %v1217 = vunpack.c.l.b16 %v977
        %v1218 = vunpack.c.l.b16 %v980
        %v1219 = vunpack.c.l.b16 %v983
        %v1220 = vunpack.c.l.b16 %v986
        %v1221 = vunpack.c.l.b16 %v989
        %v1222 = vunpack.c.l.b16 %v992
        %v1223 = vpack.c.b16 %v1213, %v1213
        %v1224 = vpack.c.b16 %v1214, %v1214
        %v1225 = vpack.c.b16 %v1215, %v1215
        %v1226 = vpack.c.b16 %v1216, %v1216
        %v1227 = vpack.c.b16 %v1217, %v1217
        %v1228 = vpack.c.b16 %v1218, %v1218
        %v1229 = vpack.c.b16 %v1219, %v1219
        %v1230 = vpack.c.b16 %v1220, %v1220
        %v1231 = vpack.c.b16 %v1221, %v1221
        %v1232 = vpack.c.b16 %v1222, %v1222
        %vm1233 = vsmask.f32 7424
        %v1235 = vshrl.u32 %v1183, 16
        %v1237 = vshll.u32 %v1183, 16
        %v1239 = vrot.slane %v1237, 1
        %v1240 = vor.u32 %v1235, %v1239
        %v1242 = vshll.u32 %v1223, 16
        %v1244 = vrot.slane %v1242, 1
        %v1245 = vsel %vm1233, %v1240, %v1244
        %v1247 = vshrl.u32 %v1184, 16
        %v1249 = vshll.u32 %v1184, 16
        %v1251 = vrot.slane %v1249, 1
        %v1252 = vor.u32 %v1247, %v1251
        %v1254 = vshll.u32 %v1224, 16
        %v1256 = vrot.slane %v1254, 1
        %v1257 = vsel %vm1233, %v1252, %v1256
        %v1259 = vshrl.u32 %v1185, 16
        %v1261 = vshll.u32 %v1185, 16
        %v1263 = vrot.slane %v1261, 1
        %v1264 = vor.u32 %v1259, %v1263
        %v1266 = vshll.u32 %v1225, 16
        %v1268 = vrot.slane %v1266, 1
        %v1269 = vsel %vm1233, %v1264, %v1268
        %v1271 = vshrl.u32 %v1186, 16
        %v1273 = vshll.u32 %v1186, 16
        %v1275 = vrot.slane %v1273, 1
        %v1276 = vor.u32 %v1271, %v1275
        %v1278 = vshll.u32 %v1226, 16
        %v1280 = vrot.slane %v1278, 1
        %v1281 = vsel %vm1233, %v1276, %v1280
        %v1283 = vshrl.u32 %v1187, 16
        %v1285 = vshll.u32 %v1187, 16
        %v1287 = vrot.slane %v1285, 1
        %v1288 = vor.u32 %v1283, %v1287
        %v1290 = vshll.u32 %v1227, 16
        %v1292 = vrot.slane %v1290, 1
        %v1293 = vsel %vm1233, %v1288, %v1292
        %v1295 = vshrl.u32 %v1188, 16
        %v1297 = vshll.u32 %v1188, 16
        %v1299 = vrot.slane %v1297, 1
        %v1300 = vor.u32 %v1295, %v1299
        %v1302 = vshll.u32 %v1228, 16
        %v1304 = vrot.slane %v1302, 1
        %v1305 = vsel %vm1233, %v1300, %v1304
        %v1307 = vshrl.u32 %v1189, 16
        %v1309 = vshll.u32 %v1189, 16
        %v1311 = vrot.slane %v1309, 1
        %v1312 = vor.u32 %v1307, %v1311
        %v1314 = vshll.u32 %v1229, 16
        %v1316 = vrot.slane %v1314, 1
        %v1317 = vsel %vm1233, %v1312, %v1316
        %v1319 = vshrl.u32 %v1190, 16
        %v1321 = vshll.u32 %v1190, 16
        %v1323 = vrot.slane %v1321, 1
        %v1324 = vor.u32 %v1319, %v1323
        %v1326 = vshll.u32 %v1230, 16
        %v1328 = vrot.slane %v1326, 1
        %v1329 = vsel %vm1233, %v1324, %v1328
        %v1331 = vshrl.u32 %v1191, 16
        %v1333 = vshll.u32 %v1191, 16
        %v1335 = vrot.slane %v1333, 1
        %v1336 = vor.u32 %v1331, %v1335
        %v1338 = vshll.u32 %v1231, 16
        %v1340 = vrot.slane %v1338, 1
        %v1341 = vsel %vm1233, %v1336, %v1340
        %v1343 = vshrl.u32 %v1192, 16
        %v1345 = vshll.u32 %v1192, 16
        %v1347 = vrot.slane %v1345, 1
        %v1348 = vor.u32 %v1343, %v1347
        %v1350 = vshll.u32 %v1232, 16
        %v1352 = vrot.slane %v1350, 1
        %v1353 = vsel %vm1233, %v1348, %v1352
        %vm1364 = vcmask 1046528
        %v1365 = vrot.slane %v1183, 1
        %v1366 = vrot.slane %v1223, 1
        %v1367 = vsel %vm1364, %v1365, %v1366
        %v1368 = vrot.slane %v1184, 1
        %v1369 = vrot.slane %v1224, 1
        %v1370 = vsel %vm1364, %v1368, %v1369
        %v1371 = vrot.slane %v1185, 1
        %v1372 = vrot.slane %v1225, 1
        %v1373 = vsel %vm1364, %v1371, %v1372
        %v1374 = vrot.slane %v1186, 1
        %v1375 = vrot.slane %v1226, 1
        %v1376 = vsel %vm1364, %v1374, %v1375
        %v1377 = vrot.slane %v1187, 1
        %v1378 = vrot.slane %v1227, 1
        %v1379 = vsel %vm1364, %v1377, %v1378
        %v1380 = vrot.slane %v1188, 1
        %v1381 = vrot.slane %v1228, 1
        %v1382 = vsel %vm1364, %v1380, %v1381
        %v1383 = vrot.slane %v1189, 1
        %v1384 = vrot.slane %v1229, 1
        %v1385 = vsel %vm1364, %v1383, %v1384
        %v1386 = vrot.slane %v1190, 1
        %v1387 = vrot.slane %v1230, 1
        %v1388 = vsel %vm1364, %v1386, %v1387
        %v1389 = vrot.slane %v1191, 1
        %v1390 = vrot.slane %v1231, 1
        %v1391 = vsel %vm1364, %v1389, %v1390
        %v1392 = vrot.slane %v1192, 1
        %v1393 = vrot.slane %v1232, 1
        %v1394 = vsel %vm1364, %v1392, %v1393
        %v1407 = vunpack.c.l.b16 %v993
        %v1408 = vunpack.c.l.b16 %v994
        %v1409 = vpack.c.b16 %v1408, %v1407
        %v1412 = vunpack.c.l.b16 %v995
        %v1413 = vpack.c.b16 %v1412, %v1412
        %v1415 = vshrl.u32 %v1409, 16
        %v1417 = vshll.u32 %v1409, 16
        %v1419 = vrot.slane %v1417, 1
        %v1420 = vor.u32 %v1415, %v1419
        %v1422 = vshll.u32 %v1413, 16
        %v1424 = vrot.slane %v1422, 1
        %v1425 = vsel %vm1233, %v1420, %v1424
        %v1427 = vrot.slane %v1409, 1
        %v1428 = vrot.slane %v1413, 1
        %v1429 = vsel %vm1364, %v1427, %v1428
        %v1433 = vunpack.c.l.b16 %v996
        %v1434 = vunpack.c.l.b16 %v997
        %v1435 = vpack.c.b16 %v1434, %v1433
        %v1438 = vunpack.c.l.b16 %v998
        %v1439 = vpack.c.b16 %v1438, %v1438
        %v1441 = vshrl.u32 %v1435, 16
        %v1443 = vshll.u32 %v1435, 16
        %v1445 = vrot.slane %v1443, 1
        %v1446 = vor.u32 %v1441, %v1445
        %v1448 = vshll.u32 %v1439, 16
        %v1450 = vrot.slane %v1448, 1
        %v1451 = vsel %vm1233, %v1446, %v1450
        %v1453 = vrot.slane %v1435, 1
        %v1454 = vrot.slane %v1439, 1
        %v1455 = vsel %vm1364, %v1453, %v1454
        %v1601 = vunpack.c.l.b16 %v999
        %v1602 = vunpack.c.l.b16 %v1000
        %v1603 = vunpack.c.l.b16 %v1001
        %v1604 = vunpack.c.l.b16 %v1002
        %v1605 = vunpack.c.l.b16 %v1003
        %v1606 = vunpack.c.l.b16 %v1004
        %v1607 = vunpack.c.l.b16 %v1005
        %v1608 = vunpack.c.l.b16 %v1006
        %v1609 = vunpack.c.l.b16 %v1007
        %v1610 = vunpack.c.l.b16 %v1008
        %v1611 = vunpack.c.l.b16 %v1009
        %v1612 = vunpack.c.l.b16 %v1010
        %v1613 = vunpack.c.l.b16 %v1011
        %v1614 = vunpack.c.l.b16 %v1012
        %v1615 = vunpack.c.l.b16 %v1013
        %v1616 = vunpack.c.l.b16 %v1014
        %v1617 = vunpack.c.l.b16 %v1015
        %v1618 = vunpack.c.l.b16 %v1016
        %v1619 = vunpack.c.l.b16 %v1017
        %v1620 = vunpack.c.l.b16 %v1018
        %v1621 = vunpack.c.l.b16 %v1019
        %v1622 = vunpack.c.l.b16 %v1020
        %v1623 = vunpack.c.l.b16 %v1021
        %v1624 = vunpack.c.l.b16 %v1022
        %v1625 = vunpack.c.l.b16 %v1023
        %v1626 = vunpack.c.l.b16 %v1024
        %v1627 = vunpack.c.l.b16 %v1025
        %v1628 = vunpack.c.l.b16 %v1026
        %v1629 = vunpack.c.l.b16 %v1027
        %v1630 = vunpack.c.l.b16 %v1028
        %v1631 = vunpack.c.l.b16 %v1029
        %v1632 = vunpack.c.l.b16 %v1030
        %v1633 = vunpack.c.l.b16 %v1031
        %v1634 = vunpack.c.l.b16 %v1032
        %v1635 = vunpack.c.l.b16 %v1033
        %v1636 = vunpack.c.l.b16 %v1034
        %v1637 = vunpack.c.l.b16 %v1035
        %v1638 = vunpack.c.l.b16 %v1036
        %v1639 = vunpack.c.l.b16 %v1037
        %v1640 = vunpack.c.l.b16 %v1038
        %v1641 = vunpack.c.l.b16 %v1039
        %v1642 = vunpack.c.l.b16 %v1040
        %v1643 = vunpack.c.l.b16 %v1041
        %v1644 = vunpack.c.l.b16 %v1042
        %v1645 = vunpack.c.l.b16 %v1043
        %v1646 = vunpack.c.l.b16 %v1044
        %v1647 = vunpack.c.l.b16 %v1045
        %v1648 = vunpack.c.l.b16 %v1046
        %v1649 = vunpack.c.l.b16 %v1047
        %v1650 = vunpack.c.l.b16 %v1048
        %v1651 = vunpack.c.l.b16 %v1049
        %v1652 = vunpack.c.l.b16 %v1050
        %v1653 = vunpack.c.l.b16 %v1051
        %v1654 = vunpack.c.l.b16 %v1052
        %v1655 = vunpack.c.l.b16 %v1053
        %v1656 = vunpack.c.l.b16 %v1054
        %v1657 = vunpack.c.l.b16 %v1055
        %v1658 = vunpack.c.l.b16 %v1056
        %v1659 = vunpack.c.l.b16 %v1057
        %v1660 = vunpack.c.l.b16 %v1058
        %v1661 = vunpack.c.l.b16 %v1059
        %v1662 = vunpack.c.l.b16 %v1060
        %v1663 = vunpack.c.l.b16 %v1061
        %v1664 = vunpack.c.l.b16 %v1062
        %v1665 = vunpack.c.l.b16 %v1063
        %v1666 = vunpack.c.l.b16 %v1064
        %v1667 = vunpack.c.l.b16 %v1065
        %v1668 = vunpack.c.l.b16 %v1066
        %v1669 = vunpack.c.l.b16 %v1067
        %v1670 = vunpack.c.l.b16 %v1068
        %v1671 = vunpack.c.l.b16 %v1069
        %v1672 = vunpack.c.l.b16 %v1070
        %v1673 = vunpack.c.l.b16 %v1071
        %v1674 = vunpack.c.l.b16 %v1072
        %v1675 = vunpack.c.l.b16 %v1073
        %v1676 = vunpack.c.l.b16 %v1074
        %v1677 = vunpack.c.l.b16 %v1075
        %v1678 = vunpack.c.l.b16 %v1076
        %v1679 = vunpack.c.l.b16 %v1077
        %v1680 = vunpack.c.l.b16 %v1078
        %v1681 = vunpack.c.l.b16 %v1079
        %v1682 = vunpack.c.l.b16 %v1080
        %v1683 = vunpack.c.l.b16 %v1081
        %v1684 = vunpack.c.l.b16 %v1082
        %v1685 = vunpack.c.l.b16 %v1083
        %v1686 = vunpack.c.l.b16 %v1084
        %v1687 = vunpack.c.l.b16 %v1085
        %v1688 = vunpack.c.l.b16 %v1086
        %v1689 = vunpack.c.l.b16 %v1087
        %v1690 = vunpack.c.l.b16 %v1088
        %v1691 = vunpack.c.l.b16 %v1089
        %v1692 = vunpack.c.l.b16 %v1090
        %v1693 = vunpack.c.l.b16 %v1091
        %v1694 = vunpack.c.l.b16 %v1092
        %v1695 = vunpack.c.l.b16 %v1093
        %v1696 = vunpack.c.l.b16 %v1094
        %v1697 = vunpack.c.l.b16 %v1095
        %v1698 = vunpack.c.l.b16 %v1096
        %v1699 = vunpack.c.l.b16 %v1097
        %v1700 = vunpack.c.l.b16 %v1098
        %v1701 = vunpack.c.l.b16 %v1099
        %v1702 = vunpack.c.l.b16 %v1100
        %v1703 = vunpack.c.l.b16 %v1101
        %v1704 = vunpack.c.l.b16 %v1102
        %v1705 = vunpack.c.l.b16 %v1103
        %v1706 = vunpack.c.l.b16 %v1104
        %v1707 = vunpack.c.l.b16 %v1105
        %v1708 = vunpack.c.l.b16 %v1106
        %v1709 = vunpack.c.l.b16 %v1107
        %v1710 = vunpack.c.l.b16 %v1108
        %v1711 = vunpack.c.l.b16 %v1109
        %v1712 = vunpack.c.l.b16 %v1110
        %v1713 = vunpack.c.l.b16 %v1111
        %v1714 = vunpack.c.l.b16 %v1112
        %v1715 = vunpack.c.l.b16 %v1113
        %v1716 = vunpack.c.l.b16 %v1114
        %v1717 = vunpack.c.l.b16 %v1115
        %v1718 = vunpack.c.l.b16 %v1116
        %v1719 = vunpack.c.l.b16 %v1117
        %v1720 = vunpack.c.l.b16 %v1118
        %v1721 = vunpack.c.l.b16 %v1119
        %v1722 = vunpack.c.l.b16 %v1120
        %v1723 = vunpack.c.l.b16 %v1121
        %v1724 = vunpack.c.l.b16 %v1122
        %v1725 = vunpack.c.l.b16 %v1123
        %v1726 = vunpack.c.l.b16 %v1124
        %v1727 = vunpack.c.l.b16 %v1125
        %v1728 = vunpack.c.l.b16 %v1126
        %v1729 = vunpack.c.l.b16 %v1127
        %v1730 = vunpack.c.l.b16 %v1128
        %v1731 = vunpack.c.l.b16 %v1129
        %v1732 = vunpack.c.l.b16 %v1130
        %v1733 = vunpack.c.l.b16 %v1131
        %v1734 = vunpack.c.l.b16 %v1132
        %v1735 = vunpack.c.l.b16 %v1133
        %v1736 = vunpack.c.l.b16 %v1134
        %v1737 = vunpack.c.l.b16 %v1135
        %v1738 = vunpack.c.l.b16 %v1136
        %v1739 = vunpack.c.l.b16 %v1137
        %v1740 = vunpack.c.l.b16 %v1138
        %v1741 = vunpack.c.l.b16 %v1139
        %v1742 = vunpack.c.l.b16 %v1140
        %v1743 = vunpack.c.l.b16 %v1141
        %v1744 = vunpack.c.l.b16 %v1142
        %v1745 = vpack.c.b16 %v1602, %v1601
        %v1746 = vpack.c.b16 %v1604, %v1603
        %v1747 = vpack.c.b16 %v1606, %v1605
        %v1748 = vpack.c.b16 %v1608, %v1607
        %v1749 = vpack.c.b16 %v1610, %v1609
        %v1750 = vpack.c.b16 %v1612, %v1611
        %v1751 = vpack.c.b16 %v1614, %v1613
        %v1752 = vpack.c.b16 %v1616, %v1615
        %v1753 = vpack.c.b16 %v1618, %v1617
        %v1754 = vpack.c.b16 %v1620, %v1619
        %v1755 = vpack.c.b16 %v1622, %v1621
        %v1756 = vpack.c.b16 %v1624, %v1623
        %v1757 = vpack.c.b16 %v1626, %v1625
        %v1758 = vpack.c.b16 %v1628, %v1627
        %v1759 = vpack.c.b16 %v1630, %v1629
        %v1760 = vpack.c.b16 %v1632, %v1631
        %v1761 = vpack.c.b16 %v1634, %v1633
        %v1762 = vpack.c.b16 %v1636, %v1635
        %v1763 = vpack.c.b16 %v1638, %v1637
        %v1764 = vpack.c.b16 %v1640, %v1639
        %v1765 = vpack.c.b16 %v1642, %v1641
        %v1766 = vpack.c.b16 %v1644, %v1643
        %v1767 = vpack.c.b16 %v1646, %v1645
        %v1768 = vpack.c.b16 %v1648, %v1647
        %v1769 = vpack.c.b16 %v1650, %v1649
        %v1770 = vpack.c.b16 %v1652, %v1651
        %v1771 = vpack.c.b16 %v1654, %v1653
        %v1772 = vpack.c.b16 %v1656, %v1655
        %v1773 = vpack.c.b16 %v1658, %v1657
        %v1774 = vpack.c.b16 %v1660, %v1659
        %v1775 = vpack.c.b16 %v1662, %v1661
        %v1776 = vpack.c.b16 %v1664, %v1663
        %v1777 = vpack.c.b16 %v1666, %v1665
        %v1778 = vpack.c.b16 %v1668, %v1667
        %v1779 = vpack.c.b16 %v1670, %v1669
        %v1780 = vpack.c.b16 %v1672, %v1671
        %v1781 = vpack.c.b16 %v1674, %v1673
        %v1782 = vpack.c.b16 %v1676, %v1675
        %v1783 = vpack.c.b16 %v1678, %v1677
        %v1784 = vpack.c.b16 %v1680, %v1679
        %v1785 = vpack.c.b16 %v1682, %v1681
        %v1786 = vpack.c.b16 %v1684, %v1683
        %v1787 = vpack.c.b16 %v1686, %v1685
        %v1788 = vpack.c.b16 %v1688, %v1687
        %v1789 = vpack.c.b16 %v1690, %v1689
        %v1790 = vpack.c.b16 %v1692, %v1691
        %v1791 = vpack.c.b16 %v1694, %v1693
        %v1792 = vpack.c.b16 %v1696, %v1695
        %v1793 = vpack.c.b16 %v1698, %v1697
        %v1794 = vpack.c.b16 %v1700, %v1699
        %v1795 = vpack.c.b16 %v1702, %v1701
        %v1796 = vpack.c.b16 %v1704, %v1703
        %v1797 = vpack.c.b16 %v1706, %v1705
        %v1798 = vpack.c.b16 %v1708, %v1707
        %v1799 = vpack.c.b16 %v1710, %v1709
        %v1800 = vpack.c.b16 %v1712, %v1711
        %v1801 = vpack.c.b16 %v1714, %v1713
        %v1802 = vpack.c.b16 %v1716, %v1715
        %v1803 = vpack.c.b16 %v1718, %v1717
        %v1804 = vpack.c.b16 %v1720, %v1719
        %v1805 = vpack.c.b16 %v1722, %v1721
        %v1806 = vpack.c.b16 %v1724, %v1723
        %v1807 = vpack.c.b16 %v1726, %v1725
        %v1808 = vpack.c.b16 %v1728, %v1727
        %v1809 = vpack.c.b16 %v1730, %v1729
        %v1810 = vpack.c.b16 %v1732, %v1731
        %v1811 = vpack.c.b16 %v1734, %v1733
        %v1812 = vpack.c.b16 %v1736, %v1735
        %v1813 = vpack.c.b16 %v1738, %v1737
        %v1814 = vpack.c.b16 %v1740, %v1739
        %v1815 = vpack.c.b16 %v1742, %v1741
        %v1816 = vpack.c.b16 %v1744, %v1743
        %1889 = vmatprep.subr.bf16.mxu0 0
        %1890 = vmatpush1.bf16.msra.mxu0 %v1745
        %1891 = vmatprep.subr.bf16.mxu0 0
        %1892 = vmatpush1.bf16.msra.mxu0 %v1746
        %1893 = vmatprep.subr.bf16.mxu0 0
        %1894 = vmatpush1.bf16.msra.mxu0 %v1747
        %1895 = vmatprep.subr.bf16.mxu0 0
        %1896 = vmatpush1.bf16.msra.mxu0 %v1748
        %1897 = vmatprep.subr.bf16.mxu0 0
        %1898 = vmatpush1.bf16.msra.mxu0 %v1749
        %1899 = vmatprep.subr.bf16.mxu0 0
        %1900 = vmatpush1.bf16.msra.mxu0 %v1750
        %1901 = vmatprep.subr.bf16.mxu0 0
        %1902 = vmatpush1.bf16.msra.mxu0 %v1751
        %1903 = vmatprep.subr.bf16.mxu0 0
        %1904 = vmatpush1.bf16.msra.mxu0 %v1752
        %1905 = vmatprep.subr.bf16.mxu0 0
        %1906 = vmatpush1.bf16.msra.mxu0 %v1753
        %1907 = vmatprep.subr.bf16.mxu0 0
        %1908 = vmatpush1.bf16.msra.mxu0 %v1754
        %1909 = vmatprep.subr.bf16.mxu0 0
        %1910 = vmatpush1.bf16.msra.mxu0 %v1755
        %1911 = vmatprep.subr.bf16.mxu0 0
        %1912 = vmatpush1.bf16.msra.mxu0 %v1756
        %1913 = vmatprep.subr.bf16.mxu0 0
        %1914 = vmatpush1.bf16.msra.mxu0 %v1757
        %1915 = vmatprep.subr.bf16.mxu0 0
        %1916 = vmatpush1.bf16.msra.mxu0 %v1758
        %1917 = vmatprep.subr.bf16.mxu0 0
        %1918 = vmatpush1.bf16.msra.mxu0 %v1759
        %1919 = vmatprep.subr.bf16.mxu0 0
        %1920 = vmatpush1.bf16.msra.mxu0 %v1760
        %1921 = vmatprep.mubr.bf16.mxu0 %v1245
        %1922 = vmatmul.mubr.bf16.gmra.mrb[0].mxu0 %v1183
        %v1923 = vpop.f32.mrb[0].mxu0
        %v1924 = vadd.f32 0.0, %v1923
        %v1925 = vpop.f32.mrb[0].mxu0
        %v1926 = vpop.f32.mrb[0].mxu0
        %v1927 = vadd.f32 0.0, %v1926
        %v1928 = vpop.f32.mrb[0].mxu0
        %1929 = vmatprep.mubr.bf16.mxu0 %v1257
        %1930 = vmatmul.mubr.bf16.gmra.mrb[0].mxu0 %v1184
        %v1931 = vpop.f32.mrb[0].mxu0
        %v1932 = vadd.f32 0.0, %v1931
        %v1933 = vpop.f32.mrb[0].mxu0
        %v1934 = vpop.f32.mrb[0].mxu0
        %v1935 = vadd.f32 0.0, %v1934
        %v1936 = vpop.f32.mrb[0].mxu0
        %1937 = vmatprep.mubr.bf16.mxu0 %v1269
        %1938 = vmatmul.mubr.bf16.gmra.mrb[0].mxu0 %v1185
        %v1939 = vpop.f32.mrb[0].mxu0
        %v1940 = vadd.f32 0.0, %v1939
        %v1941 = vpop.f32.mrb[0].mxu0
        %v1942 = vpop.f32.mrb[0].mxu0
        %v1943 = vadd.f32 0.0, %v1942
        %v1944 = vpop.f32.mrb[0].mxu0
        %1945 = vmatprep.mubr.bf16.mxu0 %v1281
        %1946 = vmatmul.mubr.bf16.gmra.mrb[0].mxu0 %v1186
        %v1947 = vpop.f32.mrb[0].mxu0
        %v1948 = vadd.f32 0.0, %v1947
        %v1949 = vpop.f32.mrb[0].mxu0
        %v1950 = vpop.f32.mrb[0].mxu0
        %v1951 = vadd.f32 0.0, %v1950
        %v1952 = vpop.f32.mrb[0].mxu0
        %1953 = vmatprep.mubr.bf16.mxu0 %v1293
        %1954 = vmatmul.mubr.bf16.gmra.mrb[0].mxu0 %v1187
        %v1955 = vpop.f32.mrb[0].mxu0
        %v1956 = vadd.f32 0.0, %v1955
        %v1957 = vpop.f32.mrb[0].mxu0
        %v1958 = vpop.f32.mrb[0].mxu0
        %v1959 = vadd.f32 0.0, %v1958
        %v1960 = vpop.f32.mrb[0].mxu0
        %1961 = vmatprep.mubr.bf16.mxu0 %v1305
        %1962 = vmatmul.mubr.bf16.gmra.mrb[0].mxu0 %v1188
        %v1963 = vpop.f32.mrb[0].mxu0
        %v1964 = vadd.f32 0.0, %v1963
        %v1965 = vpop.f32.mrb[0].mxu0
        %v1966 = vpop.f32.mrb[0].mxu0
        %v1967 = vadd.f32 0.0, %v1966
        %v1968 = vpop.f32.mrb[0].mxu0
        %1969 = vmatprep.mubr.bf16.mxu0 %v1317
        %1970 = vmatmul.mubr.bf16.gmra.mrb[0].mxu0 %v1189
        %v1971 = vpop.f32.mrb[0].mxu0
        %v1972 = vadd.f32 0.0, %v1971
        %v1973 = vpop.f32.mrb[0].mxu0
        %v1974 = vpop.f32.mrb[0].mxu0
        %v1975 = vadd.f32 0.0, %v1974
        %v1976 = vpop.f32.mrb[0].mxu0
        %1977 = vmatprep.mubr.bf16.mxu0 %v1329
        %1978 = vmatmul.mubr.bf16.gmra.mrb[0].mxu0 %v1190
        %v1979 = vpop.f32.mrb[0].mxu0
        %v1980 = vadd.f32 0.0, %v1979
        %v1981 = vpop.f32.mrb[0].mxu0
        %v1982 = vpop.f32.mrb[0].mxu0
        %v1983 = vadd.f32 0.0, %v1982
        %v1984 = vpop.f32.mrb[0].mxu0
        %1985 = vmatprep.mubr.bf16.mxu0 %v1341
        %1986 = vmatmul.mubr.bf16.gmra.mrb[0].mxu0 %v1191
        %v1987 = vpop.f32.mrb[0].mxu0
        %v1988 = vadd.f32 0.0, %v1987
        %v1989 = vpop.f32.mrb[0].mxu0
        %v1990 = vpop.f32.mrb[0].mxu0
        %v1991 = vadd.f32 0.0, %v1990
        %v1992 = vpop.f32.mrb[0].mxu0
        %1993 = vmatprep.mubr.bf16.mxu0 %v1353
        %1994 = vmatmul.mubr.bf16.gmra.mrb[0].mxu0 %v1192
        %v1995 = vpop.f32.mrb[0].mxu0
        %v1996 = vadd.f32 0.0, %v1995
        %v1997 = vpop.f32.mrb[0].mxu0
        %v1998 = vpop.f32.mrb[0].mxu0
        %v1999 = vadd.f32 0.0, %v1998
        %v2000 = vpop.f32.mrb[0].mxu0
        %2001 = vdwg.mxu0
        %2002 = vmatprep.subr.bf16.mxu0 0
        %2003 = vmatpush1.bf16.msra.mxu0 %v1761
        %2004 = vmatprep.subr.bf16.mxu0 0
        %2005 = vmatpush1.bf16.msra.mxu0 %v1762
        %2006 = vmatprep.subr.bf16.mxu0 0
        %2007 = vmatpush1.bf16.msra.mxu0 %v1763
        %2008 = vmatprep.subr.bf16.mxu0 0
        %2009 = vmatpush1.bf16.msra.mxu0 %v1764
        %2010 = vmatprep.subr.bf16.mxu0 0
        %2011 = vmatpush1.bf16.msra.mxu0 %v1765
        %2012 = vmatprep.subr.bf16.mxu0 0
        %2013 = vmatpush1.bf16.msra.mxu0 %v1766
        %2014 = vmatprep.subr.bf16.mxu0 0
        %2015 = vmatpush1.bf16.msra.mxu0 %v1767
        %2016 = vmatprep.subr.bf16.mxu0 0
        %2017 = vmatpush1.bf16.msra.mxu0 %v1768
        %2018 = vmatprep.subr.bf16.mxu0 0
        %2019 = vmatpush1.bf16.msra.mxu0 %v1769
        %2020 = vmatprep.subr.bf16.mxu0 0
        %2021 = vmatpush1.bf16.msra.mxu0 %v1770
        %2022 = vmatprep.subr.bf16.mxu0 0
        %2023 = vmatpush1.bf16.msra.mxu0 %v1771
        %2024 = vmatprep.subr.bf16.mxu0 0
        %2025 = vmatpush1.bf16.msra.mxu0 %v1772
        %2026 = vmatprep.subr.bf16.mxu0 0
        %2027 = vmatpush1.bf16.msra.mxu0 %v1773
        %2028 = vmatprep.subr.bf16.mxu0 0
        %2029 = vmatpush1.bf16.msra.mxu0 %v1774
        %2030 = vmatprep.subr.bf16.mxu0 0
        %2031 = vmatpush1.bf16.msra.mxu0 %v1775
        %2032 = vmatprep.subr.bf16.mxu0 0
        %2033 = vmatpush1.bf16.msra.mxu0 %v1776
        %2034 = vmatprep.mubr.bf16.mxu0 %v1184
        %2035 = vmatmul.mubr.bf16.gmra.mrb[0].mxu0 %v1367
        %v2036 = vpop.f32.mrb[0].mxu0
        %v2037 = vadd.f32 %v1924, %v2036
        %v2038 = vpop.f32.mrb[0].mxu0
        %v2039 = vpop.f32.mrb[0].mxu0
        %v2040 = vadd.f32 %v1927, %v2039
        %v2041 = vpop.f32.mrb[0].mxu0
        %2042 = vmatprep.mubr.bf16.mxu0 %v1185
        %2043 = vmatmul.mubr.bf16.gmra.mrb[0].mxu0 %v1370
        %v2044 = vpop.f32.mrb[0].mxu0
        %v2045 = vadd.f32 %v1932, %v2044
        %v2046 = vpop.f32.mrb[0].mxu0
        %v2047 = vpop.f32.mrb[0].mxu0
        %v2048 = vadd.f32 %v1935, %v2047
        %v2049 = vpop.f32.mrb[0].mxu0
        %2050 = vmatprep.mubr.bf16.mxu0 %v1186
        %2051 = vmatmul.mubr.bf16.gmra.mrb[0].mxu0 %v1373
        %v2052 = vpop.f32.mrb[0].mxu0
        %v2053 = vadd.f32 %v1940, %v2052
        %v2054 = vpop.f32.mrb[0].mxu0
        %v2055 = vpop.f32.mrb[0].mxu0
        %v2056 = vadd.f32 %v1943, %v2055
        %v2057 = vpop.f32.mrb[0].mxu0
        %2058 = vmatprep.mubr.bf16.mxu0 %v1187
        %2059 = vmatmul.mubr.bf16.gmra.mrb[0].mxu0 %v1376
        %v2060 = vpop.f32.mrb[0].mxu0
        %v2061 = vadd.f32 %v1948, %v2060
        %v2062 = vpop.f32.mrb[0].mxu0
        %v2063 = vpop.f32.mrb[0].mxu0
        %v2064 = vadd.f32 %v1951, %v2063
        %v2065 = vpop.f32.mrb[0].mxu0
        %2066 = vmatprep.mubr.bf16.mxu0 %v1188
        %2067 = vmatmul.mubr.bf16.gmra.mrb[0].mxu0 %v1379
        %v2068 = vpop.f32.mrb[0].mxu0
        %v2069 = vadd.f32 %v1956, %v2068
        %v2070 = vpop.f32.mrb[0].mxu0
        %v2071 = vpop.f32.mrb[0].mxu0
        %v2072 = vadd.f32 %v1959, %v2071
        %v2073 = vpop.f32.mrb[0].mxu0
        %2074 = vmatprep.mubr.bf16.mxu0 %v1189
        %2075 = vmatmul.mubr.bf16.gmra.mrb[0].mxu0 %v1382
        %v2076 = vpop.f32.mrb[0].mxu0
        %v2077 = vadd.f32 %v1964, %v2076
        %v2078 = vpop.f32.mrb[0].mxu0
        %v2079 = vpop.f32.mrb[0].mxu0
        %v2080 = vadd.f32 %v1967, %v2079
        %v2081 = vpop.f32.mrb[0].mxu0
        %2082 = vmatprep.mubr.bf16.mxu0 %v1190
        %2083 = vmatmul.mubr.bf16.gmra.mrb[0].mxu0 %v1385
        %v2084 = vpop.f32.mrb[0].mxu0
        %v2085 = vadd.f32 %v1972, %v2084
        %v2086 = vpop.f32.mrb[0].mxu0
        %v2087 = vpop.f32.mrb[0].mxu0
        %v2088 = vadd.f32 %v1975, %v2087
        %v2089 = vpop.f32.mrb[0].mxu0
        %2090 = vmatprep.mubr.bf16.mxu0 %v1191
        %2091 = vmatmul.mubr.bf16.gmra.mrb[0].mxu0 %v1388
        %v2092 = vpop.f32.mrb[0].mxu0
        %v2093 = vadd.f32 %v1980, %v2092
        %v2094 = vpop.f32.mrb[0].mxu0
        %v2095 = vpop.f32.mrb[0].mxu0
        %v2096 = vadd.f32 %v1983, %v2095
        %v2097 = vpop.f32.mrb[0].mxu0
        %2098 = vmatprep.mubr.bf16.mxu0 %v1192
        %2099 = vmatmul.mubr.bf16.gmra.mrb[0].mxu0 %v1391
        %v2100 = vpop.f32.mrb[0].mxu0
        %v2101 = vadd.f32 %v1988, %v2100
        %v2102 = vpop.f32.mrb[0].mxu0
        %v2103 = vpop.f32.mrb[0].mxu0
        %v2104 = vadd.f32 %v1991, %v2103
        %v2105 = vpop.f32.mrb[0].mxu0
        %2106 = vmatprep.mubr.bf16.mxu0 %v1409
        %2107 = vmatmul.mubr.bf16.gmra.mrb[0].mxu0 %v1394
        %v2108 = vpop.f32.mrb[0].mxu0
        %v2109 = vadd.f32 %v1996, %v2108
        %v2110 = vpop.f32.mrb[0].mxu0
        %v2111 = vpop.f32.mrb[0].mxu0
        %v2112 = vadd.f32 %v1999, %v2111
        %v2113 = vpop.f32.mrb[0].mxu0
        %2114 = vdwg.mxu0
        %2115 = vmatprep.subr.bf16.mxu0 0
        %2116 = vmatpush1.bf16.msra.mxu0 %v1777
        %2117 = vmatprep.subr.bf16.mxu0 0
        %2118 = vmatpush1.bf16.msra.mxu0 %v1778
        %2119 = vmatprep.subr.bf16.mxu0 0
        %2120 = vmatpush1.bf16.msra.mxu0 %v1779
        %2121 = vmatprep.subr.bf16.mxu0 0
        %2122 = vmatpush1.bf16.msra.mxu0 %v1780
        %2123 = vmatprep.subr.bf16.mxu0 0
        %2124 = vmatpush1.bf16.msra.mxu0 %v1781
        %2125 = vmatprep.subr.bf16.mxu0 0
        %2126 = vmatpush1.bf16.msra.mxu0 %v1782
        %2127 = vmatprep.subr.bf16.mxu0 0
        %2128 = vmatpush1.bf16.msra.mxu0 %v1783
        %2129 = vmatprep.subr.bf16.mxu0 0
        %2130 = vmatpush1.bf16.msra.mxu0 %v1784
        %2131 = vmatprep.subr.bf16.mxu0 0
        %2132 = vmatpush1.bf16.msra.mxu0 %v1785
        %2133 = vmatprep.subr.bf16.mxu0 0
        %2134 = vmatpush1.bf16.msra.mxu0 %v1786
        %2135 = vmatprep.subr.bf16.mxu0 0
        %2136 = vmatpush1.bf16.msra.mxu0 %v1787
        %2137 = vmatprep.subr.bf16.mxu0 0
        %2138 = vmatpush1.bf16.msra.mxu0 %v1788
        %2139 = vmatprep.subr.bf16.mxu0 0
        %2140 = vmatpush1.bf16.msra.mxu0 %v1789
        %2141 = vmatprep.subr.bf16.mxu0 0
        %2142 = vmatpush1.bf16.msra.mxu0 %v1790
        %2143 = vmatprep.subr.bf16.mxu0 0
        %2144 = vmatpush1.bf16.msra.mxu0 %v1791
        %2145 = vmatprep.subr.bf16.mxu0 0
        %2146 = vmatpush1.bf16.msra.mxu0 %v1792
        %2147 = vmatprep.mubr.bf16.mxu0 %v1370
        %2148 = vmatmul.mubr.bf16.gmra.mrb[0].mxu0 %v1257
        %v2149 = vpop.f32.mrb[0].mxu0
        %v2150 = vadd.f32 %v2037, %v2149
        %v2151 = vpop.f32.mrb[0].mxu0
        %v2152 = vpop.f32.mrb[0].mxu0
        %v2153 = vadd.f32 %v2040, %v2152
        %v2154 = vpop.f32.mrb[0].mxu0
        %2155 = vmatprep.mubr.bf16.mxu0 %v1373
        %2156 = vmatmul.mubr.bf16.gmra.mrb[0].mxu0 %v1269
        %v2157 = vpop.f32.mrb[0].mxu0
        %v2158 = vadd.f32 %v2045, %v2157
        %v2159 = vpop.f32.mrb[0].mxu0
        %v2160 = vpop.f32.mrb[0].mxu0
        %v2161 = vadd.f32 %v2048, %v2160
        %v2162 = vpop.f32.mrb[0].mxu0
        %2163 = vmatprep.mubr.bf16.mxu0 %v1376
        %2164 = vmatmul.mubr.bf16.gmra.mrb[0].mxu0 %v1281
        %v2165 = vpop.f32.mrb[0].mxu0
        %v2166 = vadd.f32 %v2053, %v2165
        %v2167 = vpop.f32.mrb[0].mxu0
        %v2168 = vpop.f32.mrb[0].mxu0
        %v2169 = vadd.f32 %v2056, %v2168
        %v2170 = vpop.f32.mrb[0].mxu0
        %2171 = vmatprep.mubr.bf16.mxu0 %v1379
        %2172 = vmatmul.mubr.bf16.gmra.mrb[0].mxu0 %v1293
        %v2173 = vpop.f32.mrb[0].mxu0
        %v2174 = vadd.f32 %v2061, %v2173
        %v2175 = vpop.f32.mrb[0].mxu0
        %v2176 = vpop.f32.mrb[0].mxu0
        %v2177 = vadd.f32 %v2064, %v2176
        %v2178 = vpop.f32.mrb[0].mxu0
        %2179 = vmatprep.mubr.bf16.mxu0 %v1382
        %2180 = vmatmul.mubr.bf16.gmra.mrb[0].mxu0 %v1305
        %v2181 = vpop.f32.mrb[0].mxu0
        %v2182 = vadd.f32 %v2069, %v2181
        %v2183 = vpop.f32.mrb[0].mxu0
        %v2184 = vpop.f32.mrb[0].mxu0
        %v2185 = vadd.f32 %v2072, %v2184
        %v2186 = vpop.f32.mrb[0].mxu0
        %2187 = vmatprep.mubr.bf16.mxu0 %v1385
        %2188 = vmatmul.mubr.bf16.gmra.mrb[0].mxu0 %v1317
        %v2189 = vpop.f32.mrb[0].mxu0
        %v2190 = vadd.f32 %v2077, %v2189
        %v2191 = vpop.f32.mrb[0].mxu0
        %v2192 = vpop.f32.mrb[0].mxu0
        %v2193 = vadd.f32 %v2080, %v2192
        %v2194 = vpop.f32.mrb[0].mxu0
        %2195 = vmatprep.mubr.bf16.mxu0 %v1388
        %2196 = vmatmul.mubr.bf16.gmra.mrb[0].mxu0 %v1329
        %v2197 = vpop.f32.mrb[0].mxu0
        %v2198 = vadd.f32 %v2085, %v2197
        %v2199 = vpop.f32.mrb[0].mxu0
        %v2200 = vpop.f32.mrb[0].mxu0
        %v2201 = vadd.f32 %v2088, %v2200
        %v2202 = vpop.f32.mrb[0].mxu0
        %2203 = vmatprep.mubr.bf16.mxu0 %v1391
        %2204 = vmatmul.mubr.bf16.gmra.mrb[0].mxu0 %v1341
        %v2205 = vpop.f32.mrb[0].mxu0
        %v2206 = vadd.f32 %v2093, %v2205
        %v2207 = vpop.f32.mrb[0].mxu0
        %v2208 = vpop.f32.mrb[0].mxu0
        %v2209 = vadd.f32 %v2096, %v2208
        %v2210 = vpop.f32.mrb[0].mxu0
        %2211 = vmatprep.mubr.bf16.mxu0 %v1394
        %2212 = vmatmul.mubr.bf16.gmra.mrb[0].mxu0 %v1353
        %v2213 = vpop.f32.mrb[0].mxu0
        %v2214 = vadd.f32 %v2101, %v2213
        %v2215 = vpop.f32.mrb[0].mxu0
        %v2216 = vpop.f32.mrb[0].mxu0
        %v2217 = vadd.f32 %v2104, %v2216
        %v2218 = vpop.f32.mrb[0].mxu0
        %2219 = vmatprep.mubr.bf16.mxu0 %v1429
        %2220 = vmatmul.mubr.bf16.gmra.mrb[0].mxu0 %v1425
        %v2221 = vpop.f32.mrb[0].mxu0
        %v2222 = vadd.f32 %v2109, %v2221
        %v2223 = vpop.f32.mrb[0].mxu0
        %v2224 = vpop.f32.mrb[0].mxu0
        %v2225 = vadd.f32 %v2112, %v2224
        %v2226 = vpop.f32.mrb[0].mxu0
        %2227 = vdwg.mxu0
        %2228 = vmatprep.subr.bf16.mxu0 0
        %2229 = vmatpush1.bf16.msra.mxu0 %v1793
        %2230 = vmatprep.subr.bf16.mxu0 0
        %2231 = vmatpush1.bf16.msra.mxu0 %v1794
        %2232 = vmatprep.subr.bf16.mxu0 0
        %2233 = vmatpush1.bf16.msra.mxu0 %v1795
        %2234 = vmatprep.subr.bf16.mxu0 0
        %2235 = vmatpush1.bf16.msra.mxu0 %v1796
        %2236 = vmatprep.subr.bf16.mxu0 0
        %2237 = vmatpush1.bf16.msra.mxu0 %v1797
        %2238 = vmatprep.subr.bf16.mxu0 0
        %2239 = vmatpush1.bf16.msra.mxu0 %v1798
        %2240 = vmatprep.subr.bf16.mxu0 0
        %2241 = vmatpush1.bf16.msra.mxu0 %v1799
        %2242 = vmatprep.subr.bf16.mxu0 0
        %2243 = vmatpush1.bf16.msra.mxu0 %v1800
        %2244 = vmatprep.subr.bf16.mxu0 0
        %2245 = vmatpush1.bf16.msra.mxu0 %v1801
        %2246 = vmatprep.subr.bf16.mxu0 0
        %2247 = vmatpush1.bf16.msra.mxu0 %v1802
        %2248 = vmatprep.subr.bf16.mxu0 0
        %2249 = vmatpush1.bf16.msra.mxu0 %v1803
        %2250 = vmatprep.subr.bf16.mxu0 0
        %2251 = vmatpush1.bf16.msra.mxu0 %v1804
        %2252 = vmatprep.subr.bf16.mxu0 0
        %2253 = vmatpush1.bf16.msra.mxu0 %v1805
        %2254 = vmatprep.subr.bf16.mxu0 0
        %2255 = vmatpush1.bf16.msra.mxu0 %v1806
        %2256 = vmatprep.subr.bf16.mxu0 0
        %2257 = vmatpush1.bf16.msra.mxu0 %v1807
        %2258 = vmatprep.subr.bf16.mxu0 0
        %2259 = vmatpush1.bf16.msra.mxu0 %v1808
        %2260 = vmatprep.mubr.bf16.mxu0 %v1269
        %2261 = vmatmul.mubr.bf16.gmra.mrb[0].mxu0 %v1185
        %v2262 = vpop.f32.mrb[0].mxu0
        %v2263 = vadd.f32 %v2150, %v2262
        %v2264 = vpop.f32.mrb[0].mxu0
        %v2265 = vpop.f32.mrb[0].mxu0
        %v2266 = vadd.f32 %v2153, %v2265
        %v2267 = vpop.f32.mrb[0].mxu0
        %2268 = vmatprep.mubr.bf16.mxu0 %v1281
        %2269 = vmatmul.mubr.bf16.gmra.mrb[0].mxu0 %v1186
        %v2270 = vpop.f32.mrb[0].mxu0
        %v2271 = vadd.f32 %v2158, %v2270
        %v2272 = vpop.f32.mrb[0].mxu0
        %v2273 = vpop.f32.mrb[0].mxu0
        %v2274 = vadd.f32 %v2161, %v2273
        %v2275 = vpop.f32.mrb[0].mxu0
        %2276 = vmatprep.mubr.bf16.mxu0 %v1293
        %2277 = vmatmul.mubr.bf16.gmra.mrb[0].mxu0 %v1187
        %v2278 = vpop.f32.mrb[0].mxu0
        %v2279 = vadd.f32 %v2166, %v2278
        %v2280 = vpop.f32.mrb[0].mxu0
        %v2281 = vpop.f32.mrb[0].mxu0
        %v2282 = vadd.f32 %v2169, %v2281
        %v2283 = vpop.f32.mrb[0].mxu0
        %2284 = vmatprep.mubr.bf16.mxu0 %v1305
        %2285 = vmatmul.mubr.bf16.gmra.mrb[0].mxu0 %v1188
        %v2286 = vpop.f32.mrb[0].mxu0
        %v2287 = vadd.f32 %v2174, %v2286
        %v2288 = vpop.f32.mrb[0].mxu0
        %v2289 = vpop.f32.mrb[0].mxu0
        %v2290 = vadd.f32 %v2177, %v2289
        %v2291 = vpop.f32.mrb[0].mxu0
        %2292 = vmatprep.mubr.bf16.mxu0 %v1317
        %2293 = vmatmul.mubr.bf16.gmra.mrb[0].mxu0 %v1189
        %v2294 = vpop.f32.mrb[0].mxu0
        %v2295 = vadd.f32 %v2182, %v2294
        %v2296 = vpop.f32.mrb[0].mxu0
        %v2297 = vpop.f32.mrb[0].mxu0
        %v2298 = vadd.f32 %v2185, %v2297
        %v2299 = vpop.f32.mrb[0].mxu0
        %2300 = vmatprep.mubr.bf16.mxu0 %v1329
        %2301 = vmatmul.mubr.bf16.gmra.mrb[0].mxu0 %v1190
        %v2302 = vpop.f32.mrb[0].mxu0
        %v2303 = vadd.f32 %v2190, %v2302
        %v2304 = vpop.f32.mrb[0].mxu0
        %v2305 = vpop.f32.mrb[0].mxu0
        %v2306 = vadd.f32 %v2193, %v2305
        %v2307 = vpop.f32.mrb[0].mxu0
        %2308 = vmatprep.mubr.bf16.mxu0 %v1341
        %2309 = vmatmul.mubr.bf16.gmra.mrb[0].mxu0 %v1191
        %v2310 = vpop.f32.mrb[0].mxu0
        %v2311 = vadd.f32 %v2198, %v2310
        %v2312 = vpop.f32.mrb[0].mxu0
        %v2313 = vpop.f32.mrb[0].mxu0
        %v2314 = vadd.f32 %v2201, %v2313
        %v2315 = vpop.f32.mrb[0].mxu0
        %2316 = vmatprep.mubr.bf16.mxu0 %v1353
        %2317 = vmatmul.mubr.bf16.gmra.mrb[0].mxu0 %v1192
        %v2318 = vpop.f32.mrb[0].mxu0
        %v2319 = vadd.f32 %v2206, %v2318
        %v2320 = vpop.f32.mrb[0].mxu0
        %v2321 = vpop.f32.mrb[0].mxu0
        %v2322 = vadd.f32 %v2209, %v2321
        %v2323 = vpop.f32.mrb[0].mxu0
        %2324 = vmatprep.mubr.bf16.mxu0 %v1425
        %2325 = vmatmul.mubr.bf16.gmra.mrb[0].mxu0 %v1409
        %v2326 = vpop.f32.mrb[0].mxu0
        %v2327 = vadd.f32 %v2214, %v2326
        %v2328 = vpop.f32.mrb[0].mxu0
        %v2329 = vpop.f32.mrb[0].mxu0
        %v2330 = vadd.f32 %v2217, %v2329
        %v2331 = vpop.f32.mrb[0].mxu0
        %2332 = vmatprep.mubr.bf16.mxu0 %v1451
        %2333 = vmatmul.mubr.bf16.gmra.mrb[0].mxu0 %v1435
        %v2334 = vpop.f32.mrb[0].mxu0
        %v2335 = vadd.f32 %v2222, %v2334
        %v2336 = vpop.f32.mrb[0].mxu0
        %v2337 = vpop.f32.mrb[0].mxu0
        %v2338 = vadd.f32 %v2225, %v2337
        %v2339 = vpop.f32.mrb[0].mxu0
        %2340 = vdwg.mxu0
        %2341 = vmatprep.subr.bf16.mxu0 0
        %2342 = vmatpush1.bf16.msra.mxu0 %v1809
        %2343 = vmatprep.subr.bf16.mxu0 0
        %2344 = vmatpush1.bf16.msra.mxu0 %v1810
        %2345 = vmatprep.subr.bf16.mxu0 0
        %2346 = vmatpush1.bf16.msra.mxu0 %v1811
        %2347 = vmatprep.subr.bf16.mxu0 0
        %2348 = vmatpush1.bf16.msra.mxu0 %v1812
        %2349 = vmatprep.subr.bf16.mxu0 0
        %2350 = vmatpush1.bf16.msra.mxu0 %v1813
        %2351 = vmatprep.subr.bf16.mxu0 0
        %2352 = vmatpush1.bf16.msra.mxu0 %v1814
        %2353 = vmatprep.subr.bf16.mxu0 0
        %2354 = vmatpush1.bf16.msra.mxu0 %v1815
        %2355 = vmatprep.subr.bf16.mxu0 0
        %2356 = vmatpush1.bf16.msra.mxu0 %v1816
        %2357 = vmatprep.subr.bf16.mxu0 0
        %2358 = vmatpush1.bf16.msra.mxu0 0
        %2359 = vmatprep.subr.bf16.mxu0 0
        %2360 = vmatpush1.bf16.msra.mxu0 0
        %2361 = vmatprep.subr.bf16.mxu0 0
        %2362 = vmatpush1.bf16.msra.mxu0 0
        %2363 = vmatprep.subr.bf16.mxu0 0
        %2364 = vmatpush1.bf16.msra.mxu0 0
        %2365 = vmatprep.subr.bf16.mxu0 0
        %2366 = vmatpush1.bf16.msra.mxu0 0
        %2367 = vmatprep.subr.bf16.mxu0 0
        %2368 = vmatpush1.bf16.msra.mxu0 0
        %2369 = vmatprep.subr.bf16.mxu0 0
        %2370 = vmatpush1.bf16.msra.mxu0 0
        %2371 = vmatprep.subr.bf16.mxu0 0
        %2372 = vmatpush1.bf16.msra.mxu0 0
        %2373 = vmatprep.mubr.bf16.mxu0 0
        %2374 = vmatmul.mubr.bf16.gmra.mrb[0].mxu0 %v1373
        %v2375 = vpop.f32.mrb[0].mxu0
        %v2376 = vadd.f32 %v2263, %v2375
        %v2377 = vpop.f32.mrb[0].mxu0
        %v2378 = vpop.f32.mrb[0].mxu0
        %v2379 = vadd.f32 %v2266, %v2378
        %v2380 = vpop.f32.mrb[0].mxu0
        %2381 = vmatprep.mubr.bf16.mxu0 0
        %2382 = vmatmul.mubr.bf16.gmra.mrb[0].mxu0 %v1376
        %v2383 = vpop.f32.mrb[0].mxu0
        %v2384 = vadd.f32 %v2271, %v2383
        %v2385 = vpop.f32.mrb[0].mxu0
        %v2386 = vpop.f32.mrb[0].mxu0
        %v2387 = vadd.f32 %v2274, %v2386
        %v2388 = vpop.f32.mrb[0].mxu0
        %2389 = vmatprep.mubr.bf16.mxu0 0
        %2390 = vmatmul.mubr.bf16.gmra.mrb[0].mxu0 %v1379
        %v2391 = vpop.f32.mrb[0].mxu0
        %v2392 = vadd.f32 %v2279, %v2391
        %v2393 = vpop.f32.mrb[0].mxu0
        %v2394 = vpop.f32.mrb[0].mxu0
        %v2395 = vadd.f32 %v2282, %v2394
        %v2396 = vpop.f32.mrb[0].mxu0
        %2397 = vmatprep.mubr.bf16.mxu0 0
        %2398 = vmatmul.mubr.bf16.gmra.mrb[0].mxu0 %v1382
        %v2399 = vpop.f32.mrb[0].mxu0
        %v2400 = vadd.f32 %v2287, %v2399
        %v2401 = vpop.f32.mrb[0].mxu0
        %v2402 = vpop.f32.mrb[0].mxu0
        %v2403 = vadd.f32 %v2290, %v2402
        %v2404 = vpop.f32.mrb[0].mxu0
        %2405 = vmatprep.mubr.bf16.mxu0 0
        %2406 = vmatmul.mubr.bf16.gmra.mrb[0].mxu0 %v1385
        %v2407 = vpop.f32.mrb[0].mxu0
        %v2408 = vadd.f32 %v2295, %v2407
        %v2409 = vpop.f32.mrb[0].mxu0
        %v2410 = vpop.f32.mrb[0].mxu0
        %v2411 = vadd.f32 %v2298, %v2410
        %v2412 = vpop.f32.mrb[0].mxu0
        %2413 = vmatprep.mubr.bf16.mxu0 0
        %2414 = vmatmul.mubr.bf16.gmra.mrb[0].mxu0 %v1388
        %v2415 = vpop.f32.mrb[0].mxu0
        %v2416 = vadd.f32 %v2303, %v2415
        %v2417 = vpop.f32.mrb[0].mxu0
        %v2418 = vpop.f32.mrb[0].mxu0
        %v2419 = vadd.f32 %v2306, %v2418
        %v2420 = vpop.f32.mrb[0].mxu0
        %2421 = vmatprep.mubr.bf16.mxu0 0
        %2422 = vmatmul.mubr.bf16.gmra.mrb[0].mxu0 %v1391
        %v2423 = vpop.f32.mrb[0].mxu0
        %v2424 = vadd.f32 %v2311, %v2423
        %v2425 = vpop.f32.mrb[0].mxu0
        %v2426 = vpop.f32.mrb[0].mxu0
        %v2427 = vadd.f32 %v2314, %v2426
        %v2428 = vpop.f32.mrb[0].mxu0
        %2429 = vmatprep.mubr.bf16.mxu0 0
        %2430 = vmatmul.mubr.bf16.gmra.mrb[0].mxu0 %v1394
        %v2431 = vpop.f32.mrb[0].mxu0
        %v2432 = vadd.f32 %v2319, %v2431
        %v2433 = vpop.f32.mrb[0].mxu0
        %v2434 = vpop.f32.mrb[0].mxu0
        %v2435 = vadd.f32 %v2322, %v2434
        %v2436 = vpop.f32.mrb[0].mxu0
        %2437 = vmatprep.mubr.bf16.mxu0 0
        %2438 = vmatmul.mubr.bf16.gmra.mrb[0].mxu0 %v1429
        %v2439 = vpop.f32.mrb[0].mxu0
        %v2440 = vadd.f32 %v2327, %v2439
        %v2441 = vpop.f32.mrb[0].mxu0
        %v2442 = vpop.f32.mrb[0].mxu0
        %v2443 = vadd.f32 %v2330, %v2442
        %v2444 = vpop.f32.mrb[0].mxu0
        %2445 = vmatprep.mubr.bf16.mxu0 0
        %2446 = vmatmul.mubr.bf16.gmra.mrb[0].mxu0 %v1455
        %v2447 = vpop.f32.mrb[0].mxu0
        %v2448 = vadd.f32 %v2335, %v2447
        %v2449 = vpop.f32.mrb[0].mxu0
        %v2450 = vpop.f32.mrb[0].mxu0
        %v2451 = vadd.f32 %v2338, %v2450
        %v2452 = vpop.f32.mrb[0].mxu0
        %2453 = vdwg.mxu0
        %v2454 = vld [vmem:[%s5] sm:$0x1]
        %v2456 = vlaneseq
        %v2457 = vshrl.u32 %v2456, 7
        %v2458 = vsub.s32 0, %v2457
        %v2459 = vrot.slane %v2454, %v2458
        %v2461 = vadd.f32 %v2376, %v2459
        %v2462 = vadd.f32 %v2379, %v2459
        %v2463 = vadd.f32 %v2384, %v2459
        %v2464 = vadd.f32 %v2387, %v2459
        %v2465 = vadd.f32 %v2392, %v2459
        %v2466 = vadd.f32 %v2395, %v2459
        %v2467 = vadd.f32 %v2400, %v2459
        %v2468 = vadd.f32 %v2403, %v2459
        %v2469 = vadd.f32 %v2408, %v2459
        %v2470 = vadd.f32 %v2411, %v2459
        %v2471 = vadd.f32 %v2416, %v2459
        %v2472 = vadd.f32 %v2419, %v2459
        %v2473 = vadd.f32 %v2424, %v2459
        %v2474 = vadd.f32 %v2427, %v2459
        %v2475 = vadd.f32 %v2432, %v2459
        %v2476 = vadd.f32 %v2435, %v2459
        %v2477 = vadd.f32 %v2440, %v2459
        %v2478 = vadd.f32 %v2443, %v2459
        %v2479 = vadd.f32 %v2448, %v2459
        %v2480 = vadd.f32 %v2451, %v2459
        %v2481 = vmax.f32 %v2461, 0.0
        %v2482 = vmax.f32 %v2462, 0.0
        %v2483 = vmax.f32 %v2463, 0.0
        %v2484 = vmax.f32 %v2464, 0.0
        %v2485 = vmax.f32 %v2465, 0.0
        %v2486 = vmax.f32 %v2466, 0.0
        %v2487 = vmax.f32 %v2467, 0.0
        %v2488 = vmax.f32 %v2468, 0.0
        %v2489 = vmax.f32 %v2469, 0.0
        %v2490 = vmax.f32 %v2470, 0.0
        %v2491 = vmax.f32 %v2471, 0.0
        %v2492 = vmax.f32 %v2472, 0.0
        %v2493 = vmax.f32 %v2473, 0.0
        %v2494 = vmax.f32 %v2474, 0.0
        %v2495 = vmax.f32 %v2475, 0.0
        %v2496 = vmax.f32 %v2476, 0.0
        %v2497 = vmax.f32 %v2477, 0.0
        %v2498 = vmax.f32 %v2478, 0.0
        %v2499 = vmax.f32 %v2479, 0.0
        %v2500 = vmax.f32 %v2480, 0.0
        %p2501 = scmp.gt.s32.totalorder %s26, 0
        %s2502 = scalar_select %p2501, 1, 0
        %v2503 = vstv %s2502
        %vm2504 = vcmp.eq.s32.totalorder %v2503, 1
        %p2505 = scmp.lt.s32.totalorder %s26, 1
        %s2506 = scalar_select %p2505, 1, 0
        %v2507 = vstv %s2506
        %vm2508 = vcmp.eq.s32.totalorder %v2507, 1
        %v2509 = vsel %vm2504, 1, 0
        %v2510 = vsel %vm2508, 1, 0
        %vm2511 = vcmp.eq.s32.totalorder %v2509, 1
        %vm2512 = vcmp.eq.s32.totalorder %v2510, 1
        %v2513 = vsel %vm2511, %v2481, 0.0
        %v2514 = vsel %vm2511, %v2482, 0.0
        %v2515 = vsel 1, %v2483, 0.0
        %v2516 = vsel 1, %v2484, 0.0
        %v2517 = vsel 1, %v2485, 0.0
        %v2518 = vsel 1, %v2486, 0.0
        %v2519 = vsel 1, %v2487, 0.0
        %v2520 = vsel 1, %v2488, 0.0
        %v2521 = vsel 1, %v2489, 0.0
        %v2522 = vsel 1, %v2490, 0.0
        %v2523 = vsel 1, %v2491, 0.0
        %v2524 = vsel 1, %v2492, 0.0
        %v2525 = vsel 1, %v2493, 0.0
        %v2526 = vsel 1, %v2494, 0.0
        %v2527 = vsel 1, %v2495, 0.0
        %v2528 = vsel 1, %v2496, 0.0
        %v2529 = vsel 1, %v2497, 0.0
        %v2530 = vsel 1, %v2498, 0.0
        %v2531 = vsel %vm2512, %v2499, 0.0
        %v2532 = vsel %vm2512, %v2500, 0.0
        %v2533 = vpack.c.bf16 %v2514, %v2513
        %v2534 = vpack.c.bf16 %v2516, %v2515
        %v2535 = vpack.c.bf16 %v2518, %v2517
        %v2536 = vpack.c.bf16 %v2520, %v2519
        %v2537 = vpack.c.bf16 %v2522, %v2521
        %v2538 = vpack.c.bf16 %v2524, %v2523
        %v2539 = vpack.c.bf16 %v2526, %v2525
        %v2540 = vpack.c.bf16 %v2528, %v2527
        %v2541 = vpack.c.bf16 %v2530, %v2529
        %v2542 = vpack.c.bf16 %v2532, %v2531
        %v2543 = vld [vmem:[#allocation3] sm:$0x1]
        %v2544 = vsel %vm464, 0, %v2543
        %2545 = vst [vmem:[#allocation3] sm:$0x1] %v2544
        %v2546 = vld [vmem:[#allocation3 + $0xc] sm:$0x1]
        %v2547 = vsel %vm464, 0, %v2546
        %2548 = vst [vmem:[#allocation3 + $0xc] sm:$0x1] %v2547
        %v2549 = vld [vmem:[#allocation3 + $0x18] sm:$0x1]
        %v2550 = vsel %vm464, 0, %v2549
        %2551 = vst [vmem:[#allocation3 + $0x18] sm:$0x1] %v2550
        %v2552 = vld [vmem:[#allocation3 + $0x24] sm:$0x1]
        %v2553 = vsel %vm464, 0, %v2552
        %2554 = vst [vmem:[#allocation3 + $0x24] sm:$0x1] %v2553
        %v2555 = vld [vmem:[#allocation3 + $0x30] sm:$0x1]
        %v2556 = vsel %vm464, 0, %v2555
        %2557 = vst [vmem:[#allocation3 + $0x30] sm:$0x1] %v2556
        %v2558 = vld [vmem:[#allocation3 + $0x3c] sm:$0x1]
        %v2559 = vsel %vm464, 0, %v2558
        %2560 = vst [vmem:[#allocation3 + $0x3c] sm:$0x1] %v2559
        %v2561 = vld [vmem:[#allocation3 + $0x48] sm:$0x1]
        %v2562 = vsel %vm464, 0, %v2561
        %2563 = vst [vmem:[#allocation3 + $0x48] sm:$0x1] %v2562
        %v2564 = vld [vmem:[#allocation3 + $0x54] sm:$0x1]
        %v2565 = vsel %vm464, 0, %v2564
        %2566 = vst [vmem:[#allocation3 + $0x54] sm:$0x1] %v2565
        %v2567 = vld [vmem:[#allocation3 + $0x60] sm:$0x1]
        %v2568 = vsel %vm464, 0, %v2567
        %2569 = vst [vmem:[#allocation3 + $0x60] sm:$0x1] %v2568
        %v2570 = vld [vmem:[#allocation3 + $0x6c] sm:$0x1]
        %v2571 = vsel %vm464, 0, %v2570
        %2572 = vst [vmem:[#allocation3 + $0x6c] sm:$0x1] %v2571
        %v2573 = vld [vmem:[#allocation3 + $0x8] sm:$0x1]
        %v2574 = vsel %vm502, 0, %v2573
        %2575 = vst [vmem:[#allocation3 + $0x8] sm:$0x1] %v2574
        %v2576 = vld [vmem:[#allocation3 + $0x14] sm:$0x1]
        %v2577 = vsel %vm502, 0, %v2576
        %2578 = vst [vmem:[#allocation3 + $0x14] sm:$0x1] %v2577
        %v2579 = vld [vmem:[#allocation3 + $0x20] sm:$0x1]
        %v2580 = vsel %vm502, 0, %v2579
        %2581 = vst [vmem:[#allocation3 + $0x20] sm:$0x1] %v2580
        %v2582 = vld [vmem:[#allocation3 + $0x2c] sm:$0x1]
        %v2583 = vsel %vm502, 0, %v2582
        %2584 = vst [vmem:[#allocation3 + $0x2c] sm:$0x1] %v2583
        %v2585 = vld [vmem:[#allocation3 + $0x38] sm:$0x1]
        %v2586 = vsel %vm502, 0, %v2585
        %2587 = vst [vmem:[#allocation3 + $0x38] sm:$0x1] %v2586
        %v2588 = vld [vmem:[#allocation3 + $0x44] sm:$0x1]
        %v2589 = vsel %vm502, 0, %v2588
        %2590 = vst [vmem:[#allocation3 + $0x44] sm:$0x1] %v2589
        %v2591 = vld [vmem:[#allocation3 + $0x50] sm:$0x1]
        %v2592 = vsel %vm502, 0, %v2591
        %2593 = vst [vmem:[#allocation3 + $0x50] sm:$0x1] %v2592
        %v2594 = vld [vmem:[#allocation3 + $0x5c] sm:$0x1]
        %v2595 = vsel %vm502, 0, %v2594
        %2596 = vst [vmem:[#allocation3 + $0x5c] sm:$0x1] %v2595
        %v2597 = vld [vmem:[#allocation3 + $0x68] sm:$0x1]
        %v2598 = vsel %vm502, 0, %v2597
        %2599 = vst [vmem:[#allocation3 + $0x68] sm:$0x1] %v2598
        %v2600 = vld [vmem:[#allocation3 + $0x74] sm:$0x1]
        %v2601 = vsel %vm502, 0, %v2600
        %2602 = vst [vmem:[#allocation3 + $0x74] sm:$0x1] %v2601
        %v2613 = vunpack.c.l.b16 %v2533
        %v2614 = vunpack.c.h.b16 %v2533
        %v2615 = vunpack.c.l.b16 %v2534
        %v2616 = vunpack.c.h.b16 %v2534
        %v2617 = vunpack.c.l.b16 %v2535
        %v2618 = vunpack.c.h.b16 %v2535
        %v2619 = vunpack.c.l.b16 %v2536
        %v2620 = vunpack.c.h.b16 %v2536
        %v2621 = vunpack.c.l.b16 %v2537
        %v2622 = vunpack.c.h.b16 %v2537
        %v2623 = vunpack.c.l.b16 %v2538
        %v2624 = vunpack.c.h.b16 %v2538
        %v2625 = vunpack.c.l.b16 %v2539
        %v2626 = vunpack.c.h.b16 %v2539
        %v2627 = vunpack.c.l.b16 %v2540
        %v2628 = vunpack.c.h.b16 %v2540
        %v2629 = vunpack.c.l.b16 %v2541
        %v2630 = vunpack.c.h.b16 %v2541
        %v2631 = vunpack.c.l.b16 %v2542
        %v2632 = vunpack.c.h.b16 %v2542
        %v2633 = vpack.c.b16 %v2613, %v2613
        %v2634 = vpack.c.b16 %v2614, %v2614
        %v2635 = vpack.c.b16 %v2615, %v2615
        %v2636 = vpack.c.b16 %v2616, %v2616
        %v2637 = vpack.c.b16 %v2617, %v2617
        %v2638 = vpack.c.b16 %v2618, %v2618
        %v2639 = vpack.c.b16 %v2619, %v2619
        %v2640 = vpack.c.b16 %v2620, %v2620
        %v2641 = vpack.c.b16 %v2621, %v2621
        %v2642 = vpack.c.b16 %v2622, %v2622
        %v2643 = vpack.c.b16 %v2623, %v2623
        %v2644 = vpack.c.b16 %v2624, %v2624
        %v2645 = vpack.c.b16 %v2625, %v2625
        %v2646 = vpack.c.b16 %v2626, %v2626
        %v2647 = vpack.c.b16 %v2627, %v2627
        %v2648 = vpack.c.b16 %v2628, %v2628
        %v2649 = vpack.c.b16 %v2629, %v2629
        %v2650 = vpack.c.b16 %v2630, %v2630
        %v2651 = vpack.c.b16 %v2631, %v2631
        %v2652 = vpack.c.b16 %v2632, %v2632
        %v2654 = vshrl.u32 %v2633, 16
        %v2656 = vrot.slane %v2654, 7
        %v2657 = vshll.u32 %v2633, 16
        %v2659 = vor.u32 %v2656, %v2657
        %v2660 = vrot.slane %v2656, 4
        %v2662 = vshrl.u32 %v2634, 16
        %v2664 = vrot.slane %v2662, 7
        %v2665 = vshll.u32 %v2634, 16
        %v2667 = vor.u32 %v2664, %v2665
        %v2668 = vsel %vm574, %v2660, %v2667
        %v2669 = vrot.slane %v2664, 4
        %v2671 = vshrl.u32 %v2635, 16
        %v2673 = vrot.slane %v2671, 7
        %v2674 = vshll.u32 %v2635, 16
        %v2676 = vor.u32 %v2673, %v2674
        %v2677 = vrot.slane %v2673, 4
        %v2679 = vshrl.u32 %v2636, 16
        %v2681 = vrot.slane %v2679, 7
        %v2682 = vshll.u32 %v2636, 16
        %v2684 = vor.u32 %v2681, %v2682
        %v2685 = vsel %vm574, %v2677, %v2684
        %v2686 = vrot.slane %v2681, 4
        %v2688 = vshrl.u32 %v2637, 16
        %v2690 = vrot.slane %v2688, 7
        %v2691 = vshll.u32 %v2637, 16
        %v2693 = vor.u32 %v2690, %v2691
        %v2694 = vrot.slane %v2690, 4
        %v2696 = vshrl.u32 %v2638, 16
        %v2698 = vrot.slane %v2696, 7
        %v2699 = vshll.u32 %v2638, 16
        %v2701 = vor.u32 %v2698, %v2699
        %v2702 = vsel %vm574, %v2694, %v2701
        %v2703 = vrot.slane %v2698, 4
        %v2705 = vshrl.u32 %v2639, 16
        %v2707 = vrot.slane %v2705, 7
        %v2708 = vshll.u32 %v2639, 16
        %v2710 = vor.u32 %v2707, %v2708
        %v2711 = vrot.slane %v2707, 4
        %v2713 = vshrl.u32 %v2640, 16
        %v2715 = vrot.slane %v2713, 7
        %v2716 = vshll.u32 %v2640, 16
        %v2718 = vor.u32 %v2715, %v2716
        %v2719 = vsel %vm574, %v2711, %v2718
        %v2720 = vrot.slane %v2715, 4
        %v2722 = vshrl.u32 %v2641, 16
        %v2724 = vrot.slane %v2722, 7
        %v2725 = vshll.u32 %v2641, 16
        %v2727 = vor.u32 %v2724, %v2725
        %v2728 = vrot.slane %v2724, 4
        %v2730 = vshrl.u32 %v2642, 16
        %v2732 = vrot.slane %v2730, 7
        %v2733 = vshll.u32 %v2642, 16
        %v2735 = vor.u32 %v2732, %v2733
        %v2736 = vsel %vm574, %v2728, %v2735
        %v2737 = vrot.slane %v2732, 4
        %v2739 = vshrl.u32 %v2643, 16
        %v2741 = vrot.slane %v2739, 7
        %v2742 = vshll.u32 %v2643, 16
        %v2744 = vor.u32 %v2741, %v2742
        %v2745 = vrot.slane %v2741, 4
        %v2747 = vshrl.u32 %v2644, 16
        %v2749 = vrot.slane %v2747, 7
        %v2750 = vshll.u32 %v2644, 16
        %v2752 = vor.u32 %v2749, %v2750
        %v2753 = vsel %vm574, %v2745, %v2752
        %v2754 = vrot.slane %v2749, 4
        %v2756 = vshrl.u32 %v2645, 16
        %v2758 = vrot.slane %v2756, 7
        %v2759 = vshll.u32 %v2645, 16
        %v2761 = vor.u32 %v2758, %v2759
        %v2762 = vrot.slane %v2758, 4
        %v2764 = vshrl.u32 %v2646, 16
        %v2766 = vrot.slane %v2764, 7
        %v2767 = vshll.u32 %v2646, 16
        %v2769 = vor.u32 %v2766, %v2767
        %v2770 = vsel %vm574, %v2762, %v2769
        %v2771 = vrot.slane %v2766, 4
        %v2773 = vshrl.u32 %v2647, 16
        %v2775 = vrot.slane %v2773, 7
        %v2776 = vshll.u32 %v2647, 16
        %v2778 = vor.u32 %v2775, %v2776
        %v2779 = vrot.slane %v2775, 4
        %v2781 = vshrl.u32 %v2648, 16
        %v2783 = vrot.slane %v2781, 7
        %v2784 = vshll.u32 %v2648, 16
        %v2786 = vor.u32 %v2783, %v2784
        %v2787 = vsel %vm574, %v2779, %v2786
        %v2788 = vrot.slane %v2783, 4
        %v2790 = vshrl.u32 %v2649, 16
        %v2792 = vrot.slane %v2790, 7
        %v2793 = vshll.u32 %v2649, 16
        %v2795 = vor.u32 %v2792, %v2793
        %v2796 = vrot.slane %v2792, 4
        %v2798 = vshrl.u32 %v2650, 16
        %v2800 = vrot.slane %v2798, 7
        %v2801 = vshll.u32 %v2650, 16
        %v2803 = vor.u32 %v2800, %v2801
        %v2804 = vsel %vm574, %v2796, %v2803
        %v2805 = vrot.slane %v2800, 4
        %v2807 = vshrl.u32 %v2651, 16
        %v2809 = vrot.slane %v2807, 7
        %v2810 = vshll.u32 %v2651, 16
        %v2812 = vor.u32 %v2809, %v2810
        %v2813 = vrot.slane %v2809, 4
        %v2815 = vshrl.u32 %v2652, 16
        %v2817 = vrot.slane %v2815, 7
        %v2818 = vshll.u32 %v2652, 16
        %v2820 = vor.u32 %v2817, %v2818
        %v2821 = vsel %vm574, %v2813, %v2820
        %v2822 = vrot.slane %v2817, 4
        %v2853 = vld [vmem:[#allocation3] sm:$0xf]
        %v2854 = vsel %vm616, %v2659, %v2853
        %2855 = vst [vmem:[#allocation3] sm:$0xf] %v2854
        %2856 = vst [vmem:[#allocation3 + $0x4] sm:$0xf] %v2668
        %v2857 = vld [vmem:[#allocation3 + $0x8] sm:$0x1]
        %v2858 = vsel %vm464, %v2669, %v2857
        %2859 = vst [vmem:[#allocation3 + $0x8] sm:$0x1] %v2858
        %v2860 = vld [vmem:[#allocation3 + $0xc] sm:$0xf]
        %v2861 = vsel %vm616, %v2676, %v2860
        %2862 = vst [vmem:[#allocation3 + $0xc] sm:$0xf] %v2861
        %2863 = vst [vmem:[#allocation3 + $0x10] sm:$0xf] %v2685
        %v2864 = vld [vmem:[#allocation3 + $0x14] sm:$0x1]
        %v2865 = vsel %vm464, %v2686, %v2864
        %2866 = vst [vmem:[#allocation3 + $0x14] sm:$0x1] %v2865
        %v2867 = vld [vmem:[#allocation3 + $0x18] sm:$0xf]
        %v2868 = vsel %vm616, %v2693, %v2867
        %2869 = vst [vmem:[#allocation3 + $0x18] sm:$0xf] %v2868
        %2870 = vst [vmem:[#allocation3 + $0x1c] sm:$0xf] %v2702
        %v2871 = vld [vmem:[#allocation3 + $0x20] sm:$0x1]
        %v2872 = vsel %vm464, %v2703, %v2871
        %2873 = vst [vmem:[#allocation3 + $0x20] sm:$0x1] %v2872
        %v2874 = vld [vmem:[#allocation3 + $0x24] sm:$0xf]
        %v2875 = vsel %vm616, %v2710, %v2874
        %2876 = vst [vmem:[#allocation3 + $0x24] sm:$0xf] %v2875
        %2877 = vst [vmem:[#allocation3 + $0x28] sm:$0xf] %v2719
        %v2878 = vld [vmem:[#allocation3 + $0x2c] sm:$0x1]
        %v2879 = vsel %vm464, %v2720, %v2878
        %2880 = vst [vmem:[#allocation3 + $0x2c] sm:$0x1] %v2879
        %v2881 = vld [vmem:[#allocation3 + $0x30] sm:$0xf]
        %v2882 = vsel %vm616, %v2727, %v2881
        %2883 = vst [vmem:[#allocation3 + $0x30] sm:$0xf] %v2882
        %2884 = vst [vmem:[#allocation3 + $0x34] sm:$0xf] %v2736
        %v2885 = vld [vmem:[#allocation3 + $0x38] sm:$0x1]
        %v2886 = vsel %vm464, %v2737, %v2885
        %2887 = vst [vmem:[#allocation3 + $0x38] sm:$0x1] %v2886
        %v2888 = vld [vmem:[#allocation3 + $0x3c] sm:$0xf]
        %v2889 = vsel %vm616, %v2744, %v2888
        %2890 = vst [vmem:[#allocation3 + $0x3c] sm:$0xf] %v2889
        %2891 = vst [vmem:[#allocation3 + $0x40] sm:$0xf] %v2753
        %v2892 = vld [vmem:[#allocation3 + $0x44] sm:$0x1]
        %v2893 = vsel %vm464, %v2754, %v2892
        %2894 = vst [vmem:[#allocation3 + $0x44] sm:$0x1] %v2893
        %v2895 = vld [vmem:[#allocation3 + $0x48] sm:$0xf]
        %v2896 = vsel %vm616, %v2761, %v2895
        %2897 = vst [vmem:[#allocation3 + $0x48] sm:$0xf] %v2896
        %2898 = vst [vmem:[#allocation3 + $0x4c] sm:$0xf] %v2770
        %v2899 = vld [vmem:[#allocation3 + $0x50] sm:$0x1]
        %v2900 = vsel %vm464, %v2771, %v2899
        %2901 = vst [vmem:[#allocation3 + $0x50] sm:$0x1] %v2900
        %v2902 = vld [vmem:[#allocation3 + $0x54] sm:$0xf]
        %v2903 = vsel %vm616, %v2778, %v2902
        %2904 = vst [vmem:[#allocation3 + $0x54] sm:$0xf] %v2903
        %2905 = vst [vmem:[#allocation3 + $0x58] sm:$0xf] %v2787
        %v2906 = vld [vmem:[#allocation3 + $0x5c] sm:$0x1]
        %v2907 = vsel %vm464, %v2788, %v2906
        %2908 = vst [vmem:[#allocation3 + $0x5c] sm:$0x1] %v2907
        %v2909 = vld [vmem:[#allocation3 + $0x60] sm:$0xf]
        %v2910 = vsel %vm616, %v2795, %v2909
        %2911 = vst [vmem:[#allocation3 + $0x60] sm:$0xf] %v2910
        %2912 = vst [vmem:[#allocation3 + $0x64] sm:$0xf] %v2804
        %v2913 = vld [vmem:[#allocation3 + $0x68] sm:$0x1]
        %v2914 = vsel %vm464, %v2805, %v2913
        %2915 = vst [vmem:[#allocation3 + $0x68] sm:$0x1] %v2914
        %v2916 = vld [vmem:[#allocation3 + $0x6c] sm:$0xf]
        %v2917 = vsel %vm616, %v2812, %v2916
        %2918 = vst [vmem:[#allocation3 + $0x6c] sm:$0xf] %v2917
        %2919 = vst [vmem:[#allocation3 + $0x70] sm:$0xf] %v2821
        %v2920 = vld [vmem:[#allocation3 + $0x74] sm:$0x1]
        %v2921 = vsel %vm464, %v2822, %v2920
        %2922 = vst [vmem:[#allocation3 + $0x74] sm:$0x1] %v2921
        %v2923 = vld [vmem:[#allocation3] sm:$0xf]
        %v2924 = vld [vmem:[#allocation3 + $0x4] sm:$0xf]
        %v2925 = vld [vmem:[#allocation3 + $0x8] sm:$0x1]
        %v2926 = vld [vmem:[#allocation3 + $0xc] sm:$0xf]
        %v2927 = vld [vmem:[#allocation3 + $0x10] sm:$0xf]
        %v2928 = vld [vmem:[#allocation3 + $0x14] sm:$0x1]
        %v2929 = vld [vmem:[#allocation3 + $0x18] sm:$0xf]
        %v2930 = vld [vmem:[#allocation3 + $0x1c] sm:$0xf]
        %v2931 = vld [vmem:[#allocation3 + $0x20] sm:$0x1]
        %v2932 = vld [vmem:[#allocation3 + $0x24] sm:$0xf]
        %v2933 = vld [vmem:[#allocation3 + $0x28] sm:$0xf]
        %v2934 = vld [vmem:[#allocation3 + $0x2c] sm:$0x1]
        %v2935 = vld [vmem:[#allocation3 + $0x30] sm:$0xf]
        %v2936 = vld [vmem:[#allocation3 + $0x34] sm:$0xf]
        %v2937 = vld [vmem:[#allocation3 + $0x38] sm:$0x1]
        %v2938 = vld [vmem:[#allocation3 + $0x3c] sm:$0xf]
        %v2939 = vld [vmem:[#allocation3 + $0x40] sm:$0xf]
        %v2940 = vld [vmem:[#allocation3 + $0x44] sm:$0x1]
        %v2941 = vld [vmem:[#allocation3 + $0x48] sm:$0xf]
        %v2942 = vld [vmem:[#allocation3 + $0x4c] sm:$0xf]
        %v2943 = vld [vmem:[#allocation3 + $0x50] sm:$0x1]
        %v2944 = vld [vmem:[#allocation3 + $0x54] sm:$0xf]
        %v2945 = vld [vmem:[#allocation3 + $0x58] sm:$0xf]
        %v2946 = vld [vmem:[#allocation3 + $0x5c] sm:$0x1]
        %v2947 = vld [vmem:[#allocation3 + $0x60] sm:$0xf]
        %v2948 = vld [vmem:[#allocation3 + $0x64] sm:$0xf]
        %v2949 = vld [vmem:[#allocation3 + $0x68] sm:$0x1]
        %v2950 = vld [vmem:[#allocation3 + $0x6c] sm:$0xf]
        %v2951 = vld [vmem:[#allocation3 + $0x70] sm:$0xf]
        %v2952 = vld [vmem:[#allocation3 + $0x74] sm:$0x1]
        %v2953 = vld [vmem:[%s4] sm:$0xf]
        %v2954 = vld [vmem:[%s4 + $0x4] sm:$0xf]
        %v2955 = vld [vmem:[%s4 + $0x8] sm:$0xf]
        %v2956 = vld [vmem:[%s4 + $0xc] sm:$0xf]
        %v2957 = vld [vmem:[%s4 + $0x10] sm:$0xf]
        %v2958 = vld [vmem:[%s4 + $0x14] sm:$0xf]
        %v2959 = vld [vmem:[%s4 + $0x18] sm:$0xf]
        %v2960 = vld [vmem:[%s4 + $0x1c] sm:$0xf]
        %v2961 = vld [vmem:[%s4 + $0x20] sm:$0xf]
        %v2962 = vld [vmem:[%s4 + $0x24] sm:$0xf]
        %v2963 = vld [vmem:[%s4 + $0x28] sm:$0xf]
        %v2964 = vld [vmem:[%s4 + $0x2c] sm:$0xf]
        %v2965 = vld [vmem:[%s4 + $0x30] sm:$0xf]
        %v2966 = vld [vmem:[%s4 + $0x34] sm:$0xf]
        %v2967 = vld [vmem:[%s4 + $0x38] sm:$0xf]
        %v2968 = vld [vmem:[%s4 + $0x3c] sm:$0xf]
        %v2969 = vld [vmem:[%s4 + $0x40] sm:$0xf]
        %v2970 = vld [vmem:[%s4 + $0x44] sm:$0xf]
        %v2971 = vld [vmem:[%s4 + $0x48] sm:$0xf]
        %v2972 = vld [vmem:[%s4 + $0x4c] sm:$0xf]
        %v2973 = vld [vmem:[%s4 + $0x50] sm:$0xf]
        %v2974 = vld [vmem:[%s4 + $0x54] sm:$0xf]
        %v2975 = vld [vmem:[%s4 + $0x58] sm:$0xf]
        %v2976 = vld [vmem:[%s4 + $0x5c] sm:$0xf]
        %v2977 = vld [vmem:[%s4 + $0x60] sm:$0xf]
        %v2978 = vld [vmem:[%s4 + $0x64] sm:$0xf]
        %v2979 = vld [vmem:[%s4 + $0x68] sm:$0xf]
        %v2980 = vld [vmem:[%s4 + $0x6c] sm:$0xf]
        %v2981 = vld [vmem:[%s4 + $0x70] sm:$0xf]
        %v2982 = vld [vmem:[%s4 + $0x74] sm:$0xf]
        %v2983 = vld [vmem:[%s4 + $0x78] sm:$0xf]
        %v2984 = vld [vmem:[%s4 + $0x7c] sm:$0xf]
        %v2985 = vld [vmem:[%s4 + $0x80] sm:$0xf]
        %v2986 = vld [vmem:[%s4 + $0x84] sm:$0xf]
        %v2987 = vld [vmem:[%s4 + $0x88] sm:$0xf]
        %v2988 = vld [vmem:[%s4 + $0x8c] sm:$0xf]
        %v2989 = vld [vmem:[%s4 + $0x90] sm:$0xf]
        %v2990 = vld [vmem:[%s4 + $0x94] sm:$0xf]
        %v2991 = vld [vmem:[%s4 + $0x98] sm:$0xf]
        %v2992 = vld [vmem:[%s4 + $0x9c] sm:$0xf]
        %v2993 = vld [vmem:[%s4 + $0xa0] sm:$0xf]
        %v2994 = vld [vmem:[%s4 + $0xa4] sm:$0xf]
        %v2995 = vld [vmem:[%s4 + $0xa8] sm:$0xf]
        %v2996 = vld [vmem:[%s4 + $0xac] sm:$0xf]
        %v2997 = vld [vmem:[%s4 + $0xb0] sm:$0xf]
        %v2998 = vld [vmem:[%s4 + $0xb4] sm:$0xf]
        %v2999 = vld [vmem:[%s4 + $0xb8] sm:$0xf]
        %v3000 = vld [vmem:[%s4 + $0xbc] sm:$0xf]
        %v3001 = vld [vmem:[%s4 + $0xc0] sm:$0xf]
        %v3002 = vld [vmem:[%s4 + $0xc4] sm:$0xf]
        %v3003 = vld [vmem:[%s4 + $0xc8] sm:$0xf]
        %v3004 = vld [vmem:[%s4 + $0xcc] sm:$0xf]
        %v3005 = vld [vmem:[%s4 + $0xd0] sm:$0xf]
        %v3006 = vld [vmem:[%s4 + $0xd4] sm:$0xf]
        %v3007 = vld [vmem:[%s4 + $0xd8] sm:$0xf]
        %v3008 = vld [vmem:[%s4 + $0xdc] sm:$0xf]
        %v3009 = vld [vmem:[%s4 + $0xe0] sm:$0xf]
        %v3010 = vld [vmem:[%s4 + $0xe4] sm:$0xf]
        %v3011 = vld [vmem:[%s4 + $0xe8] sm:$0xf]
        %v3012 = vld [vmem:[%s4 + $0xec] sm:$0xf]
        %v3013 = vld [vmem:[%s4 + $0xf0] sm:$0xf]
        %v3014 = vld [vmem:[%s4 + $0xf4] sm:$0xf]
        %v3015 = vld [vmem:[%s4 + $0xf8] sm:$0xf]
        %v3016 = vld [vmem:[%s4 + $0xfc] sm:$0xf]
        %v3017 = vld [vmem:[%s4 + $0x100] sm:$0xf]
        %v3018 = vld [vmem:[%s4 + $0x104] sm:$0xf]
        %v3019 = vld [vmem:[%s4 + $0x108] sm:$0xf]
        %v3020 = vld [vmem:[%s4 + $0x10c] sm:$0xf]
        %v3021 = vld [vmem:[%s4 + $0x110] sm:$0xf]
        %v3022 = vld [vmem:[%s4 + $0x114] sm:$0xf]
        %v3023 = vld [vmem:[%s4 + $0x118] sm:$0xf]
        %v3024 = vld [vmem:[%s4 + $0x11c] sm:$0xf]
        %v3025 = vld [vmem:[%s4 + $0x120] sm:$0xf]
        %v3026 = vld [vmem:[%s4 + $0x124] sm:$0xf]
        %v3027 = vld [vmem:[%s4 + $0x128] sm:$0xf]
        %v3028 = vld [vmem:[%s4 + $0x12c] sm:$0xf]
        %v3029 = vld [vmem:[%s4 + $0x130] sm:$0xf]
        %v3030 = vld [vmem:[%s4 + $0x134] sm:$0xf]
        %v3031 = vld [vmem:[%s4 + $0x138] sm:$0xf]
        %v3032 = vld [vmem:[%s4 + $0x13c] sm:$0xf]
        %v3033 = vld [vmem:[%s4 + $0x140] sm:$0xf]
        %v3034 = vld [vmem:[%s4 + $0x144] sm:$0xf]
        %v3035 = vld [vmem:[%s4 + $0x148] sm:$0xf]
        %v3036 = vld [vmem:[%s4 + $0x14c] sm:$0xf]
        %v3037 = vld [vmem:[%s4 + $0x150] sm:$0xf]
        %v3038 = vld [vmem:[%s4 + $0x154] sm:$0xf]
        %v3039 = vld [vmem:[%s4 + $0x158] sm:$0xf]
        %v3040 = vld [vmem:[%s4 + $0x15c] sm:$0xf]
        %v3041 = vld [vmem:[%s4 + $0x160] sm:$0xf]
        %v3042 = vld [vmem:[%s4 + $0x164] sm:$0xf]
        %v3043 = vld [vmem:[%s4 + $0x168] sm:$0xf]
        %v3044 = vld [vmem:[%s4 + $0x16c] sm:$0xf]
        %v3045 = vld [vmem:[%s4 + $0x170] sm:$0xf]
        %v3046 = vld [vmem:[%s4 + $0x174] sm:$0xf]
        %v3047 = vld [vmem:[%s4 + $0x178] sm:$0xf]
        %v3048 = vld [vmem:[%s4 + $0x17c] sm:$0xf]
        %v3049 = vld [vmem:[%s4 + $0x180] sm:$0xf]
        %v3050 = vld [vmem:[%s4 + $0x184] sm:$0xf]
        %v3051 = vld [vmem:[%s4 + $0x188] sm:$0xf]
        %v3052 = vld [vmem:[%s4 + $0x18c] sm:$0xf]
        %v3053 = vld [vmem:[%s4 + $0x190] sm:$0xf]
        %v3054 = vld [vmem:[%s4 + $0x194] sm:$0xf]
        %v3055 = vld [vmem:[%s4 + $0x198] sm:$0xf]
        %v3056 = vld [vmem:[%s4 + $0x19c] sm:$0xf]
        %v3057 = vld [vmem:[%s4 + $0x1a0] sm:$0xf]
        %v3058 = vld [vmem:[%s4 + $0x1a4] sm:$0xf]
        %v3059 = vld [vmem:[%s4 + $0x1a8] sm:$0xf]
        %v3060 = vld [vmem:[%s4 + $0x1ac] sm:$0xf]
        %v3061 = vld [vmem:[%s4 + $0x1b0] sm:$0xf]
        %v3062 = vld [vmem:[%s4 + $0x1b4] sm:$0xf]
        %v3063 = vld [vmem:[%s4 + $0x1b8] sm:$0xf]
        %v3064 = vld [vmem:[%s4 + $0x1bc] sm:$0xf]
        %v3065 = vld [vmem:[%s4 + $0x1c0] sm:$0xf]
        %v3066 = vld [vmem:[%s4 + $0x1c4] sm:$0xf]
        %v3067 = vld [vmem:[%s4 + $0x1c8] sm:$0xf]
        %v3068 = vld [vmem:[%s4 + $0x1cc] sm:$0xf]
        %v3069 = vld [vmem:[%s4 + $0x1d0] sm:$0xf]
        %v3070 = vld [vmem:[%s4 + $0x1d4] sm:$0xf]
        %v3071 = vld [vmem:[%s4 + $0x1d8] sm:$0xf]
        %v3072 = vld [vmem:[%s4 + $0x1dc] sm:$0xf]
        %v3073 = vld [vmem:[%s4 + $0x1e0] sm:$0xf]
        %v3074 = vld [vmem:[%s4 + $0x1e4] sm:$0xf]
        %v3075 = vld [vmem:[%s4 + $0x1e8] sm:$0xf]
        %v3076 = vld [vmem:[%s4 + $0x1ec] sm:$0xf]
        %v3077 = vld [vmem:[%s4 + $0x1f0] sm:$0xf]
        %v3078 = vld [vmem:[%s4 + $0x1f4] sm:$0xf]
        %v3079 = vld [vmem:[%s4 + $0x1f8] sm:$0xf]
        %v3080 = vld [vmem:[%s4 + $0x1fc] sm:$0xf]
        %v3081 = vld [vmem:[%s4 + $0x200] sm:$0xf]
        %v3082 = vld [vmem:[%s4 + $0x204] sm:$0xf]
        %v3083 = vld [vmem:[%s4 + $0x208] sm:$0xf]
        %v3084 = vld [vmem:[%s4 + $0x20c] sm:$0xf]
        %v3085 = vld [vmem:[%s4 + $0x210] sm:$0xf]
        %v3086 = vld [vmem:[%s4 + $0x214] sm:$0xf]
        %v3087 = vld [vmem:[%s4 + $0x218] sm:$0xf]
        %v3088 = vld [vmem:[%s4 + $0x21c] sm:$0xf]
        %v3089 = vld [vmem:[%s4 + $0x220] sm:$0xf]
        %v3090 = vld [vmem:[%s4 + $0x224] sm:$0xf]
        %v3091 = vld [vmem:[%s4 + $0x228] sm:$0xf]
        %v3092 = vld [vmem:[%s4 + $0x22c] sm:$0xf]
        %v3093 = vld [vmem:[%s4 + $0x230] sm:$0xf]
        %v3094 = vld [vmem:[%s4 + $0x234] sm:$0xf]
        %v3095 = vld [vmem:[%s4 + $0x238] sm:$0xf]
        %v3096 = vld [vmem:[%s4 + $0x23c] sm:$0xf]
        %v3113 = vunpack.c.l.b16 %v2923
        %v3114 = vunpack.c.l.b16 %v2924
        %v3115 = vunpack.c.l.b16 %v2926
        %v3116 = vunpack.c.l.b16 %v2927
        %v3117 = vunpack.c.l.b16 %v2929
        %v3118 = vunpack.c.l.b16 %v2930
        %v3119 = vunpack.c.l.b16 %v2932
        %v3120 = vunpack.c.l.b16 %v2933
        %v3121 = vunpack.c.l.b16 %v2935
        %v3122 = vunpack.c.l.b16 %v2936
        %v3123 = vunpack.c.l.b16 %v2938
        %v3124 = vunpack.c.l.b16 %v2939
        %v3125 = vunpack.c.l.b16 %v2941
        %v3126 = vunpack.c.l.b16 %v2942
        %v3127 = vunpack.c.l.b16 %v2944
        %v3128 = vunpack.c.l.b16 %v2945
        %v3129 = vpack.c.b16 %v3114, %v3113
        %v3130 = vpack.c.b16 %v3116, %v3115
        %v3131 = vpack.c.b16 %v3118, %v3117
        %v3132 = vpack.c.b16 %v3120, %v3119
        %v3133 = vpack.c.b16 %v3122, %v3121
        %v3134 = vpack.c.b16 %v3124, %v3123
        %v3135 = vpack.c.b16 %v3126, %v3125
        %v3136 = vpack.c.b16 %v3128, %v3127
        %v3153 = vunpack.c.l.b16 %v2925
        %v3154 = vunpack.c.l.b16 %v2928
        %v3155 = vunpack.c.l.b16 %v2931
        %v3156 = vunpack.c.l.b16 %v2934
        %v3157 = vunpack.c.l.b16 %v2937
        %v3158 = vunpack.c.l.b16 %v2940
        %v3159 = vunpack.c.l.b16 %v2943
        %v3160 = vunpack.c.l.b16 %v2946
        %v3161 = vpack.c.b16 %v3153, %v3153
        %v3162 = vpack.c.b16 %v3154, %v3154
        %v3163 = vpack.c.b16 %v3155, %v3155
        %v3164 = vpack.c.b16 %v3156, %v3156
        %v3165 = vpack.c.b16 %v3157, %v3157
        %v3166 = vpack.c.b16 %v3158, %v3158
        %v3167 = vpack.c.b16 %v3159, %v3159
        %v3168 = vpack.c.b16 %v3160, %v3160
        %v3170 = vshrl.u32 %v3129, 16
        %v3172 = vshll.u32 %v3129, 16
        %v3174 = vrot.slane %v3172, 1
        %v3175 = vor.u32 %v3170, %v3174
        %v3177 = vshll.u32 %v3161, 16
        %v3179 = vrot.slane %v3177, 1
        %v3180 = vsel %vm1233, %v3175, %v3179
        %v3182 = vshrl.u32 %v3130, 16
        %v3184 = vshll.u32 %v3130, 16
        %v3186 = vrot.slane %v3184, 1
        %v3187 = vor.u32 %v3182, %v3186
        %v3189 = vshll.u32 %v3162, 16
        %v3191 = vrot.slane %v3189, 1
        %v3192 = vsel %vm1233, %v3187, %v3191
        %v3194 = vshrl.u32 %v3131, 16
        %v3196 = vshll.u32 %v3131, 16
        %v3198 = vrot.slane %v3196, 1
        %v3199 = vor.u32 %v3194, %v3198
        %v3201 = vshll.u32 %v3163, 16
        %v3203 = vrot.slane %v3201, 1
        %v3204 = vsel %vm1233, %v3199, %v3203
        %v3206 = vshrl.u32 %v3132, 16
        %v3208 = vshll.u32 %v3132, 16
        %v3210 = vrot.slane %v3208, 1
        %v3211 = vor.u32 %v3206, %v3210
        %v3213 = vshll.u32 %v3164, 16
        %v3215 = vrot.slane %v3213, 1
        %v3216 = vsel %vm1233, %v3211, %v3215
        %v3218 = vshrl.u32 %v3133, 16
        %v3220 = vshll.u32 %v3133, 16
        %v3222 = vrot.slane %v3220, 1
        %v3223 = vor.u32 %v3218, %v3222
        %v3225 = vshll.u32 %v3165, 16
        %v3227 = vrot.slane %v3225, 1
        %v3228 = vsel %vm1233, %v3223, %v3227
        %v3230 = vshrl.u32 %v3134, 16
        %v3232 = vshll.u32 %v3134, 16
        %v3234 = vrot.slane %v3232, 1
        %v3235 = vor.u32 %v3230, %v3234
        %v3237 = vshll.u32 %v3166, 16
        %v3239 = vrot.slane %v3237, 1
        %v3240 = vsel %vm1233, %v3235, %v3239
        %v3242 = vshrl.u32 %v3135, 16
        %v3244 = vshll.u32 %v3135, 16
        %v3246 = vrot.slane %v3244, 1
        %v3247 = vor.u32 %v3242, %v3246
        %v3249 = vshll.u32 %v3167, 16
        %v3251 = vrot.slane %v3249, 1
        %v3252 = vsel %vm1233, %v3247, %v3251
        %v3254 = vshrl.u32 %v3136, 16
        %v3256 = vshll.u32 %v3136, 16
        %v3258 = vrot.slane %v3256, 1
        %v3259 = vor.u32 %v3254, %v3258
        %v3261 = vshll.u32 %v3168, 16
        %v3263 = vrot.slane %v3261, 1
        %v3264 = vsel %vm1233, %v3259, %v3263
        %v3273 = vrot.slane %v3129, 1
        %v3274 = vrot.slane %v3161, 1
        %v3275 = vsel %vm1364, %v3273, %v3274
        %v3276 = vrot.slane %v3130, 1
        %v3277 = vrot.slane %v3162, 1
        %v3278 = vsel %vm1364, %v3276, %v3277
        %v3279 = vrot.slane %v3131, 1
        %v3280 = vrot.slane %v3163, 1
        %v3281 = vsel %vm1364, %v3279, %v3280
        %v3282 = vrot.slane %v3132, 1
        %v3283 = vrot.slane %v3164, 1
        %v3284 = vsel %vm1364, %v3282, %v3283
        %v3285 = vrot.slane %v3133, 1
        %v3286 = vrot.slane %v3165, 1
        %v3287 = vsel %vm1364, %v3285, %v3286
        %v3288 = vrot.slane %v3134, 1
        %v3289 = vrot.slane %v3166, 1
        %v3290 = vsel %vm1364, %v3288, %v3289
        %v3291 = vrot.slane %v3135, 1
        %v3292 = vrot.slane %v3167, 1
        %v3293 = vsel %vm1364, %v3291, %v3292
        %v3294 = vrot.slane %v3136, 1
        %v3295 = vrot.slane %v3168, 1
        %v3296 = vsel %vm1364, %v3294, %v3295
        %v3307 = vunpack.c.l.b16 %v2947
        %v3308 = vunpack.c.l.b16 %v2948
        %v3309 = vpack.c.b16 %v3308, %v3307
        %v3312 = vunpack.c.l.b16 %v2949
        %v3313 = vpack.c.b16 %v3312, %v3312
        %v3315 = vshrl.u32 %v3309, 16
        %v3317 = vshll.u32 %v3309, 16
        %v3319 = vrot.slane %v3317, 1
        %v3320 = vor.u32 %v3315, %v3319
        %v3322 = vshll.u32 %v3313, 16
        %v3324 = vrot.slane %v3322, 1
        %v3325 = vsel %vm1233, %v3320, %v3324
        %v3327 = vrot.slane %v3309, 1
        %v3328 = vrot.slane %v3313, 1
        %v3329 = vsel %vm1364, %v3327, %v3328
        %v3333 = vunpack.c.l.b16 %v2950
        %v3334 = vunpack.c.l.b16 %v2951
        %v3335 = vpack.c.b16 %v3334, %v3333
        %v3338 = vunpack.c.l.b16 %v2952
        %v3339 = vpack.c.b16 %v3338, %v3338
        %v3341 = vshrl.u32 %v3335, 16
        %v3343 = vshll.u32 %v3335, 16
        %v3345 = vrot.slane %v3343, 1
        %v3346 = vor.u32 %v3341, %v3345
        %v3348 = vshll.u32 %v3339, 16
        %v3350 = vrot.slane %v3348, 1
        %v3351 = vsel %vm1233, %v3346, %v3350
        %v3353 = vrot.slane %v3335, 1
        %v3354 = vrot.slane %v3339, 1
        %v3355 = vsel %vm1364, %v3353, %v3354
        %v3501 = vunpack.c.l.b16 %v2953
        %v3502 = vunpack.c.l.b16 %v2954
        %v3503 = vunpack.c.l.b16 %v2955
        %v3504 = vunpack.c.l.b16 %v2956
        %v3505 = vunpack.c.l.b16 %v2957
        %v3506 = vunpack.c.l.b16 %v2958
        %v3507 = vunpack.c.l.b16 %v2959
        %v3508 = vunpack.c.l.b16 %v2960
        %v3509 = vunpack.c.l.b16 %v2961
        %v3510 = vunpack.c.l.b16 %v2962
        %v3511 = vunpack.c.l.b16 %v2963
        %v3512 = vunpack.c.l.b16 %v2964
        %v3513 = vunpack.c.l.b16 %v2965
        %v3514 = vunpack.c.l.b16 %v2966
        %v3515 = vunpack.c.l.b16 %v2967
        %v3516 = vunpack.c.l.b16 %v2968
        %v3517 = vunpack.c.l.b16 %v2969
        %v3518 = vunpack.c.l.b16 %v2970
        %v3519 = vunpack.c.l.b16 %v2971
        %v3520 = vunpack.c.l.b16 %v2972
        %v3521 = vunpack.c.l.b16 %v2973
        %v3522 = vunpack.c.l.b16 %v2974
        %v3523 = vunpack.c.l.b16 %v2975
        %v3524 = vunpack.c.l.b16 %v2976
        %v3525 = vunpack.c.l.b16 %v2977
        %v3526 = vunpack.c.l.b16 %v2978
        %v3527 = vunpack.c.l.b16 %v2979
        %v3528 = vunpack.c.l.b16 %v2980
        %v3529 = vunpack.c.l.b16 %v2981
        %v3530 = vunpack.c.l.b16 %v2982
        %v3531 = vunpack.c.l.b16 %v2983
        %v3532 = vunpack.c.l.b16 %v2984
        %v3533 = vunpack.c.l.b16 %v2985
        %v3534 = vunpack.c.l.b16 %v2986
        %v3535 = vunpack.c.l.b16 %v2987
        %v3536 = vunpack.c.l.b16 %v2988
        %v3537 = vunpack.c.l.b16 %v2989
        %v3538 = vunpack.c.l.b16 %v2990
        %v3539 = vunpack.c.l.b16 %v2991
        %v3540 = vunpack.c.l.b16 %v2992
        %v3541 = vunpack.c.l.b16 %v2993
        %v3542 = vunpack.c.l.b16 %v2994
        %v3543 = vunpack.c.l.b16 %v2995
        %v3544 = vunpack.c.l.b16 %v2996
        %v3545 = vunpack.c.l.b16 %v2997
        %v3546 = vunpack.c.l.b16 %v2998
        %v3547 = vunpack.c.l.b16 %v2999
        %v3548 = vunpack.c.l.b16 %v3000
        %v3549 = vunpack.c.l.b16 %v3001
        %v3550 = vunpack.c.l.b16 %v3002
        %v3551 = vunpack.c.l.b16 %v3003
        %v3552 = vunpack.c.l.b16 %v3004
        %v3553 = vunpack.c.l.b16 %v3005
        %v3554 = vunpack.c.l.b16 %v3006
        %v3555 = vunpack.c.l.b16 %v3007
        %v3556 = vunpack.c.l.b16 %v3008
        %v3557 = vunpack.c.l.b16 %v3009
        %v3558 = vunpack.c.l.b16 %v3010
        %v3559 = vunpack.c.l.b16 %v3011
        %v3560 = vunpack.c.l.b16 %v3012
        %v3561 = vunpack.c.l.b16 %v3013
        %v3562 = vunpack.c.l.b16 %v3014
        %v3563 = vunpack.c.l.b16 %v3015
        %v3564 = vunpack.c.l.b16 %v3016
        %v3565 = vunpack.c.l.b16 %v3017
        %v3566 = vunpack.c.l.b16 %v3018
        %v3567 = vunpack.c.l.b16 %v3019
        %v3568 = vunpack.c.l.b16 %v3020
        %v3569 = vunpack.c.l.b16 %v3021
        %v3570 = vunpack.c.l.b16 %v3022
        %v3571 = vunpack.c.l.b16 %v3023
        %v3572 = vunpack.c.l.b16 %v3024
        %v3573 = vunpack.c.l.b16 %v3025
        %v3574 = vunpack.c.l.b16 %v3026
        %v3575 = vunpack.c.l.b16 %v3027
        %v3576 = vunpack.c.l.b16 %v3028
        %v3577 = vunpack.c.l.b16 %v3029
        %v3578 = vunpack.c.l.b16 %v3030
        %v3579 = vunpack.c.l.b16 %v3031
        %v3580 = vunpack.c.l.b16 %v3032
        %v3581 = vunpack.c.l.b16 %v3033
        %v3582 = vunpack.c.l.b16 %v3034
        %v3583 = vunpack.c.l.b16 %v3035
        %v3584 = vunpack.c.l.b16 %v3036
        %v3585 = vunpack.c.l.b16 %v3037
        %v3586 = vunpack.c.l.b16 %v3038
        %v3587 = vunpack.c.l.b16 %v3039
        %v3588 = vunpack.c.l.b16 %v3040
        %v3589 = vunpack.c.l.b16 %v3041
        %v3590 = vunpack.c.l.b16 %v3042
        %v3591 = vunpack.c.l.b16 %v3043
        %v3592 = vunpack.c.l.b16 %v3044
        %v3593 = vunpack.c.l.b16 %v3045
        %v3594 = vunpack.c.l.b16 %v3046
        %v3595 = vunpack.c.l.b16 %v3047
        %v3596 = vunpack.c.l.b16 %v3048
        %v3597 = vunpack.c.l.b16 %v3049
        %v3598 = vunpack.c.l.b16 %v3050
        %v3599 = vunpack.c.l.b16 %v3051
        %v3600 = vunpack.c.l.b16 %v3052
        %v3601 = vunpack.c.l.b16 %v3053
        %v3602 = vunpack.c.l.b16 %v3054
        %v3603 = vunpack.c.l.b16 %v3055
        %v3604 = vunpack.c.l.b16 %v3056
        %v3605 = vunpack.c.l.b16 %v3057
        %v3606 = vunpack.c.l.b16 %v3058
        %v3607 = vunpack.c.l.b16 %v3059
        %v3608 = vunpack.c.l.b16 %v3060
        %v3609 = vunpack.c.l.b16 %v3061
        %v3610 = vunpack.c.l.b16 %v3062
        %v3611 = vunpack.c.l.b16 %v3063
        %v3612 = vunpack.c.l.b16 %v3064
        %v3613 = vunpack.c.l.b16 %v3065
        %v3614 = vunpack.c.l.b16 %v3066
        %v3615 = vunpack.c.l.b16 %v3067
        %v3616 = vunpack.c.l.b16 %v3068
        %v3617 = vunpack.c.l.b16 %v3069
        %v3618 = vunpack.c.l.b16 %v3070
        %v3619 = vunpack.c.l.b16 %v3071
        %v3620 = vunpack.c.l.b16 %v3072
        %v3621 = vunpack.c.l.b16 %v3073
        %v3622 = vunpack.c.l.b16 %v3074
        %v3623 = vunpack.c.l.b16 %v3075
        %v3624 = vunpack.c.l.b16 %v3076
        %v3625 = vunpack.c.l.b16 %v3077
        %v3626 = vunpack.c.l.b16 %v3078
        %v3627 = vunpack.c.l.b16 %v3079
        %v3628 = vunpack.c.l.b16 %v3080
        %v3629 = vunpack.c.l.b16 %v3081
        %v3630 = vunpack.c.l.b16 %v3082
        %v3631 = vunpack.c.l.b16 %v3083
        %v3632 = vunpack.c.l.b16 %v3084
        %v3633 = vunpack.c.l.b16 %v3085
        %v3634 = vunpack.c.l.b16 %v3086
        %v3635 = vunpack.c.l.b16 %v3087
        %v3636 = vunpack.c.l.b16 %v3088
        %v3637 = vunpack.c.l.b16 %v3089
        %v3638 = vunpack.c.l.b16 %v3090
        %v3639 = vunpack.c.l.b16 %v3091
        %v3640 = vunpack.c.l.b16 %v3092
        %v3641 = vunpack.c.l.b16 %v3093
        %v3642 = vunpack.c.l.b16 %v3094
        %v3643 = vunpack.c.l.b16 %v3095
        %v3644 = vunpack.c.l.b16 %v3096
        %v3645 = vpack.c.b16 %v3502, %v3501
        %v3646 = vpack.c.b16 %v3504, %v3503
        %v3647 = vpack.c.b16 %v3506, %v3505
        %v3648 = vpack.c.b16 %v3508, %v3507
        %v3649 = vpack.c.b16 %v3510, %v3509
        %v3650 = vpack.c.b16 %v3512, %v3511
        %v3651 = vpack.c.b16 %v3514, %v3513
        %v3652 = vpack.c.b16 %v3516, %v3515
        %v3653 = vpack.c.b16 %v3518, %v3517
        %v3654 = vpack.c.b16 %v3520, %v3519
        %v3655 = vpack.c.b16 %v3522, %v3521
        %v3656 = vpack.c.b16 %v3524, %v3523
        %v3657 = vpack.c.b16 %v3526, %v3525
        %v3658 = vpack.c.b16 %v3528, %v3527
        %v3659 = vpack.c.b16 %v3530, %v3529
        %v3660 = vpack.c.b16 %v3532, %v3531
        %v3661 = vpack.c.b16 %v3534, %v3533
        %v3662 = vpack.c.b16 %v3536, %v3535
        %v3663 = vpack.c.b16 %v3538, %v3537
        %v3664 = vpack.c.b16 %v3540, %v3539
        %v3665 = vpack.c.b16 %v3542, %v3541
        %v3666 = vpack.c.b16 %v3544, %v3543
        %v3667 = vpack.c.b16 %v3546, %v3545
        %v3668 = vpack.c.b16 %v3548, %v3547
        %v3669 = vpack.c.b16 %v3550, %v3549
        %v3670 = vpack.c.b16 %v3552, %v3551
        %v3671 = vpack.c.b16 %v3554, %v3553
        %v3672 = vpack.c.b16 %v3556, %v3555
        %v3673 = vpack.c.b16 %v3558, %v3557
        %v3674 = vpack.c.b16 %v3560, %v3559
        %v3675 = vpack.c.b16 %v3562, %v3561
        %v3676 = vpack.c.b16 %v3564, %v3563
        %v3677 = vpack.c.b16 %v3566, %v3565
        %v3678 = vpack.c.b16 %v3568, %v3567
        %v3679 = vpack.c.b16 %v3570, %v3569
        %v3680 = vpack.c.b16 %v3572, %v3571
        %v3681 = vpack.c.b16 %v3574, %v3573
        %v3682 = vpack.c.b16 %v3576, %v3575
        %v3683 = vpack.c.b16 %v3578, %v3577
        %v3684 = vpack.c.b16 %v3580, %v3579
        %v3685 = vpack.c.b16 %v3582, %v3581
        %v3686 = vpack.c.b16 %v3584, %v3583
        %v3687 = vpack.c.b16 %v3586, %v3585
        %v3688 = vpack.c.b16 %v3588, %v3587
        %v3689 = vpack.c.b16 %v3590, %v3589
        %v3690 = vpack.c.b16 %v3592, %v3591
        %v3691 = vpack.c.b16 %v3594, %v3593
        %v3692 = vpack.c.b16 %v3596, %v3595
        %v3693 = vpack.c.b16 %v3598, %v3597
        %v3694 = vpack.c.b16 %v3600, %v3599
        %v3695 = vpack.c.b16 %v3602, %v3601
        %v3696 = vpack.c.b16 %v3604, %v3603
        %v3697 = vpack.c.b16 %v3606, %v3605
        %v3698 = vpack.c.b16 %v3608, %v3607
        %v3699 = vpack.c.b16 %v3610, %v3609
        %v3700 = vpack.c.b16 %v3612, %v3611
        %v3701 = vpack.c.b16 %v3614, %v3613
        %v3702 = vpack.c.b16 %v3616, %v3615
        %v3703 = vpack.c.b16 %v3618, %v3617
        %v3704 = vpack.c.b16 %v3620, %v3619
        %v3705 = vpack.c.b16 %v3622, %v3621
        %v3706 = vpack.c.b16 %v3624, %v3623
        %v3707 = vpack.c.b16 %v3626, %v3625
        %v3708 = vpack.c.b16 %v3628, %v3627
        %v3709 = vpack.c.b16 %v3630, %v3629
        %v3710 = vpack.c.b16 %v3632, %v3631
        %v3711 = vpack.c.b16 %v3634, %v3633
        %v3712 = vpack.c.b16 %v3636, %v3635
        %v3713 = vpack.c.b16 %v3638, %v3637
        %v3714 = vpack.c.b16 %v3640, %v3639
        %v3715 = vpack.c.b16 %v3642, %v3641
        %v3716 = vpack.c.b16 %v3644, %v3643
        %3789 = vmatprep.subr.bf16.mxu0 0
        %3790 = vmatpush1.bf16.msra.mxu0 %v3645
        %3791 = vmatprep.subr.bf16.mxu0 0
        %3792 = vmatpush1.bf16.msra.mxu0 %v3646
        %3793 = vmatprep.subr.bf16.mxu0 0
        %3794 = vmatpush1.bf16.msra.mxu0 %v3647
        %3795 = vmatprep.subr.bf16.mxu0 0
        %3796 = vmatpush1.bf16.msra.mxu0 %v3648
        %3797 = vmatprep.subr.bf16.mxu0 0
        %3798 = vmatpush1.bf16.msra.mxu0 %v3649
        %3799 = vmatprep.subr.bf16.mxu0 0
        %3800 = vmatpush1.bf16.msra.mxu0 %v3650
        %3801 = vmatprep.subr.bf16.mxu0 0
        %3802 = vmatpush1.bf16.msra.mxu0 %v3651
        %3803 = vmatprep.subr.bf16.mxu0 0
        %3804 = vmatpush1.bf16.msra.mxu0 %v3652
        %3805 = vmatprep.subr.bf16.mxu0 0
        %3806 = vmatpush1.bf16.msra.mxu0 %v3653
        %3807 = vmatprep.subr.bf16.mxu0 0
        %3808 = vmatpush1.bf16.msra.mxu0 %v3654
        %3809 = vmatprep.subr.bf16.mxu0 0
        %3810 = vmatpush1.bf16.msra.mxu0 %v3655
        %3811 = vmatprep.subr.bf16.mxu0 0
        %3812 = vmatpush1.bf16.msra.mxu0 %v3656
        %3813 = vmatprep.subr.bf16.mxu0 0
        %3814 = vmatpush1.bf16.msra.mxu0 %v3657
        %3815 = vmatprep.subr.bf16.mxu0 0
        %3816 = vmatpush1.bf16.msra.mxu0 %v3658
        %3817 = vmatprep.subr.bf16.mxu0 0
        %3818 = vmatpush1.bf16.msra.mxu0 %v3659
        %3819 = vmatprep.subr.bf16.mxu0 0
        %3820 = vmatpush1.bf16.msra.mxu0 %v3660
        %3821 = vmatprep.mubr.bf16.mxu0 %v3180
        %3822 = vmatmul.mubr.bf16.gmra.mrb[0].mxu0 %v3129
        %v3823 = vpop.f32.mrb[0].mxu0
        %v3824 = vadd.f32 0.0, %v3823
        %v3825 = vpop.f32.mrb[0].mxu0
        %v3826 = vpop.f32.mrb[0].mxu0
        %v3827 = vadd.f32 0.0, %v3826
        %v3828 = vpop.f32.mrb[0].mxu0
        %3829 = vmatprep.mubr.bf16.mxu0 %v3192
        %3830 = vmatmul.mubr.bf16.gmra.mrb[0].mxu0 %v3130
        %v3831 = vpop.f32.mrb[0].mxu0
        %v3832 = vadd.f32 0.0, %v3831
        %v3833 = vpop.f32.mrb[0].mxu0
        %v3834 = vpop.f32.mrb[0].mxu0
        %v3835 = vadd.f32 0.0, %v3834
        %v3836 = vpop.f32.mrb[0].mxu0
        %3837 = vmatprep.mubr.bf16.mxu0 %v3204
        %3838 = vmatmul.mubr.bf16.gmra.mrb[0].mxu0 %v3131
        %v3839 = vpop.f32.mrb[0].mxu0
        %v3840 = vadd.f32 0.0, %v3839
        %v3841 = vpop.f32.mrb[0].mxu0
        %v3842 = vpop.f32.mrb[0].mxu0
        %v3843 = vadd.f32 0.0, %v3842
        %v3844 = vpop.f32.mrb[0].mxu0
        %3845 = vmatprep.mubr.bf16.mxu0 %v3216
        %3846 = vmatmul.mubr.bf16.gmra.mrb[0].mxu0 %v3132
        %v3847 = vpop.f32.mrb[0].mxu0
        %v3848 = vadd.f32 0.0, %v3847
        %v3849 = vpop.f32.mrb[0].mxu0
        %v3850 = vpop.f32.mrb[0].mxu0
        %v3851 = vadd.f32 0.0, %v3850
        %v3852 = vpop.f32.mrb[0].mxu0
        %3853 = vmatprep.mubr.bf16.mxu0 %v3228
        %3854 = vmatmul.mubr.bf16.gmra.mrb[0].mxu0 %v3133
        %v3855 = vpop.f32.mrb[0].mxu0
        %v3856 = vadd.f32 0.0, %v3855
        %v3857 = vpop.f32.mrb[0].mxu0
        %v3858 = vpop.f32.mrb[0].mxu0
        %v3859 = vadd.f32 0.0, %v3858
        %v3860 = vpop.f32.mrb[0].mxu0
        %3861 = vmatprep.mubr.bf16.mxu0 %v3240
        %3862 = vmatmul.mubr.bf16.gmra.mrb[0].mxu0 %v3134
        %v3863 = vpop.f32.mrb[0].mxu0
        %v3864 = vadd.f32 0.0, %v3863
        %v3865 = vpop.f32.mrb[0].mxu0
        %v3866 = vpop.f32.mrb[0].mxu0
        %v3867 = vadd.f32 0.0, %v3866
        %v3868 = vpop.f32.mrb[0].mxu0
        %3869 = vmatprep.mubr.bf16.mxu0 %v3252
        %3870 = vmatmul.mubr.bf16.gmra.mrb[0].mxu0 %v3135
        %v3871 = vpop.f32.mrb[0].mxu0
        %v3872 = vadd.f32 0.0, %v3871
        %v3873 = vpop.f32.mrb[0].mxu0
        %v3874 = vpop.f32.mrb[0].mxu0
        %v3875 = vadd.f32 0.0, %v3874
        %v3876 = vpop.f32.mrb[0].mxu0
        %3877 = vmatprep.mubr.bf16.mxu0 %v3264
        %3878 = vmatmul.mubr.bf16.gmra.mrb[0].mxu0 %v3136
        %v3879 = vpop.f32.mrb[0].mxu0
        %v3880 = vadd.f32 0.0, %v3879
        %v3881 = vpop.f32.mrb[0].mxu0
        %v3882 = vpop.f32.mrb[0].mxu0
        %v3883 = vadd.f32 0.0, %v3882
        %v3884 = vpop.f32.mrb[0].mxu0
        %3885 = vdwg.mxu0
        %3886 = vmatprep.subr.bf16.mxu0 0
        %3887 = vmatpush1.bf16.msra.mxu0 %v3661
        %3888 = vmatprep.subr.bf16.mxu0 0
        %3889 = vmatpush1.bf16.msra.mxu0 %v3662
        %3890 = vmatprep.subr.bf16.mxu0 0
        %3891 = vmatpush1.bf16.msra.mxu0 %v3663
        %3892 = vmatprep.subr.bf16.mxu0 0
        %3893 = vmatpush1.bf16.msra.mxu0 %v3664
        %3894 = vmatprep.subr.bf16.mxu0 0
        %3895 = vmatpush1.bf16.msra.mxu0 %v3665
        %3896 = vmatprep.subr.bf16.mxu0 0
        %3897 = vmatpush1.bf16.msra.mxu0 %v3666
        %3898 = vmatprep.subr.bf16.mxu0 0
        %3899 = vmatpush1.bf16.msra.mxu0 %v3667
        %3900 = vmatprep.subr.bf16.mxu0 0
        %3901 = vmatpush1.bf16.msra.mxu0 %v3668
        %3902 = vmatprep.subr.bf16.mxu0 0
        %3903 = vmatpush1.bf16.msra.mxu0 %v3669
        %3904 = vmatprep.subr.bf16.mxu0 0
        %3905 = vmatpush1.bf16.msra.mxu0 %v3670
        %3906 = vmatprep.subr.bf16.mxu0 0
        %3907 = vmatpush1.bf16.msra.mxu0 %v3671
        %3908 = vmatprep.subr.bf16.mxu0 0
        %3909 = vmatpush1.bf16.msra.mxu0 %v3672
        %3910 = vmatprep.subr.bf16.mxu0 0
        %3911 = vmatpush1.bf16.msra.mxu0 %v3673
        %3912 = vmatprep.subr.bf16.mxu0 0
        %3913 = vmatpush1.bf16.msra.mxu0 %v3674
        %3914 = vmatprep.subr.bf16.mxu0 0
        %3915 = vmatpush1.bf16.msra.mxu0 %v3675
        %3916 = vmatprep.subr.bf16.mxu0 0
        %3917 = vmatpush1.bf16.msra.mxu0 %v3676
        %3918 = vmatprep.mubr.bf16.mxu0 %v3130
        %3919 = vmatmul.mubr.bf16.gmra.mrb[0].mxu0 %v3275
        %v3920 = vpop.f32.mrb[0].mxu0
        %v3921 = vadd.f32 %v3824, %v3920
        %v3922 = vpop.f32.mrb[0].mxu0
        %v3923 = vpop.f32.mrb[0].mxu0
        %v3924 = vadd.f32 %v3827, %v3923
        %v3925 = vpop.f32.mrb[0].mxu0
        %3926 = vmatprep.mubr.bf16.mxu0 %v3131
        %3927 = vmatmul.mubr.bf16.gmra.mrb[0].mxu0 %v3278
        %v3928 = vpop.f32.mrb[0].mxu0
        %v3929 = vadd.f32 %v3832, %v3928
        %v3930 = vpop.f32.mrb[0].mxu0
        %v3931 = vpop.f32.mrb[0].mxu0
        %v3932 = vadd.f32 %v3835, %v3931
        %v3933 = vpop.f32.mrb[0].mxu0
        %3934 = vmatprep.mubr.bf16.mxu0 %v3132
        %3935 = vmatmul.mubr.bf16.gmra.mrb[0].mxu0 %v3281
        %v3936 = vpop.f32.mrb[0].mxu0
        %v3937 = vadd.f32 %v3840, %v3936
        %v3938 = vpop.f32.mrb[0].mxu0
        %v3939 = vpop.f32.mrb[0].mxu0
        %v3940 = vadd.f32 %v3843, %v3939
        %v3941 = vpop.f32.mrb[0].mxu0
        %3942 = vmatprep.mubr.bf16.mxu0 %v3133
        %3943 = vmatmul.mubr.bf16.gmra.mrb[0].mxu0 %v3284
        %v3944 = vpop.f32.mrb[0].mxu0
        %v3945 = vadd.f32 %v3848, %v3944
        %v3946 = vpop.f32.mrb[0].mxu0
        %v3947 = vpop.f32.mrb[0].mxu0
        %v3948 = vadd.f32 %v3851, %v3947
        %v3949 = vpop.f32.mrb[0].mxu0
        %3950 = vmatprep.mubr.bf16.mxu0 %v3134
        %3951 = vmatmul.mubr.bf16.gmra.mrb[0].mxu0 %v3287
        %v3952 = vpop.f32.mrb[0].mxu0
        %v3953 = vadd.f32 %v3856, %v3952
        %v3954 = vpop.f32.mrb[0].mxu0
        %v3955 = vpop.f32.mrb[0].mxu0
        %v3956 = vadd.f32 %v3859, %v3955
        %v3957 = vpop.f32.mrb[0].mxu0
        %3958 = vmatprep.mubr.bf16.mxu0 %v3135
        %3959 = vmatmul.mubr.bf16.gmra.mrb[0].mxu0 %v3290
        %v3960 = vpop.f32.mrb[0].mxu0
        %v3961 = vadd.f32 %v3864, %v3960
        %v3962 = vpop.f32.mrb[0].mxu0
        %v3963 = vpop.f32.mrb[0].mxu0
        %v3964 = vadd.f32 %v3867, %v3963
        %v3965 = vpop.f32.mrb[0].mxu0
        %3966 = vmatprep.mubr.bf16.mxu0 %v3136
        %3967 = vmatmul.mubr.bf16.gmra.mrb[0].mxu0 %v3293
        %v3968 = vpop.f32.mrb[0].mxu0
        %v3969 = vadd.f32 %v3872, %v3968
        %v3970 = vpop.f32.mrb[0].mxu0
        %v3971 = vpop.f32.mrb[0].mxu0
        %v3972 = vadd.f32 %v3875, %v3971
        %v3973 = vpop.f32.mrb[0].mxu0
        %3974 = vmatprep.mubr.bf16.mxu0 %v3309
        %3975 = vmatmul.mubr.bf16.gmra.mrb[0].mxu0 %v3296
        %v3976 = vpop.f32.mrb[0].mxu0
        %v3977 = vadd.f32 %v3880, %v3976
        %v3978 = vpop.f32.mrb[0].mxu0
        %v3979 = vpop.f32.mrb[0].mxu0
        %v3980 = vadd.f32 %v3883, %v3979
        %v3981 = vpop.f32.mrb[0].mxu0
        %3982 = vdwg.mxu0
        %3983 = vmatprep.subr.bf16.mxu0 0
        %3984 = vmatpush1.bf16.msra.mxu0 %v3677
        %3985 = vmatprep.subr.bf16.mxu0 0
        %3986 = vmatpush1.bf16.msra.mxu0 %v3678
        %3987 = vmatprep.subr.bf16.mxu0 0
        %3988 = vmatpush1.bf16.msra.mxu0 %v3679
        %3989 = vmatprep.subr.bf16.mxu0 0
        %3990 = vmatpush1.bf16.msra.mxu0 %v3680
        %3991 = vmatprep.subr.bf16.mxu0 0
        %3992 = vmatpush1.bf16.msra.mxu0 %v3681
        %3993 = vmatprep.subr.bf16.mxu0 0
        %3994 = vmatpush1.bf16.msra.mxu0 %v3682
        %3995 = vmatprep.subr.bf16.mxu0 0
        %3996 = vmatpush1.bf16.msra.mxu0 %v3683
        %3997 = vmatprep.subr.bf16.mxu0 0
        %3998 = vmatpush1.bf16.msra.mxu0 %v3684
        %3999 = vmatprep.subr.bf16.mxu0 0
        %4000 = vmatpush1.bf16.msra.mxu0 %v3685
        %4001 = vmatprep.subr.bf16.mxu0 0
        %4002 = vmatpush1.bf16.msra.mxu0 %v3686
        %4003 = vmatprep.subr.bf16.mxu0 0
        %4004 = vmatpush1.bf16.msra.mxu0 %v3687
        %4005 = vmatprep.subr.bf16.mxu0 0
        %4006 = vmatpush1.bf16.msra.mxu0 %v3688
        %4007 = vmatprep.subr.bf16.mxu0 0
        %4008 = vmatpush1.bf16.msra.mxu0 %v3689
        %4009 = vmatprep.subr.bf16.mxu0 0
        %4010 = vmatpush1.bf16.msra.mxu0 %v3690
        %4011 = vmatprep.subr.bf16.mxu0 0
        %4012 = vmatpush1.bf16.msra.mxu0 %v3691
        %4013 = vmatprep.subr.bf16.mxu0 0
        %4014 = vmatpush1.bf16.msra.mxu0 %v3692
        %4015 = vmatprep.mubr.bf16.mxu0 %v3278
        %4016 = vmatmul.mubr.bf16.gmra.mrb[0].mxu0 %v3192
        %v4017 = vpop.f32.mrb[0].mxu0
        %v4018 = vadd.f32 %v3921, %v4017
        %v4019 = vpop.f32.mrb[0].mxu0
        %v4020 = vpop.f32.mrb[0].mxu0
        %v4021 = vadd.f32 %v3924, %v4020
        %v4022 = vpop.f32.mrb[0].mxu0
        %4023 = vmatprep.mubr.bf16.mxu0 %v3281
        %4024 = vmatmul.mubr.bf16.gmra.mrb[0].mxu0 %v3204
        %v4025 = vpop.f32.mrb[0].mxu0
        %v4026 = vadd.f32 %v3929, %v4025
        %v4027 = vpop.f32.mrb[0].mxu0
        %v4028 = vpop.f32.mrb[0].mxu0
        %v4029 = vadd.f32 %v3932, %v4028
        %v4030 = vpop.f32.mrb[0].mxu0
        %4031 = vmatprep.mubr.bf16.mxu0 %v3284
        %4032 = vmatmul.mubr.bf16.gmra.mrb[0].mxu0 %v3216
        %v4033 = vpop.f32.mrb[0].mxu0
        %v4034 = vadd.f32 %v3937, %v4033
        %v4035 = vpop.f32.mrb[0].mxu0
        %v4036 = vpop.f32.mrb[0].mxu0
        %v4037 = vadd.f32 %v3940, %v4036
        %v4038 = vpop.f32.mrb[0].mxu0
        %4039 = vmatprep.mubr.bf16.mxu0 %v3287
        %4040 = vmatmul.mubr.bf16.gmra.mrb[0].mxu0 %v3228
        %v4041 = vpop.f32.mrb[0].mxu0
        %v4042 = vadd.f32 %v3945, %v4041
        %v4043 = vpop.f32.mrb[0].mxu0
        %v4044 = vpop.f32.mrb[0].mxu0
        %v4045 = vadd.f32 %v3948, %v4044
        %v4046 = vpop.f32.mrb[0].mxu0
        %4047 = vmatprep.mubr.bf16.mxu0 %v3290
        %4048 = vmatmul.mubr.bf16.gmra.mrb[0].mxu0 %v3240
        %v4049 = vpop.f32.mrb[0].mxu0
        %v4050 = vadd.f32 %v3953, %v4049
        %v4051 = vpop.f32.mrb[0].mxu0
        %v4052 = vpop.f32.mrb[0].mxu0
        %v4053 = vadd.f32 %v3956, %v4052
        %v4054 = vpop.f32.mrb[0].mxu0
        %4055 = vmatprep.mubr.bf16.mxu0 %v3293
        %4056 = vmatmul.mubr.bf16.gmra.mrb[0].mxu0 %v3252
        %v4057 = vpop.f32.mrb[0].mxu0
        %v4058 = vadd.f32 %v3961, %v4057
        %v4059 = vpop.f32.mrb[0].mxu0
        %v4060 = vpop.f32.mrb[0].mxu0
        %v4061 = vadd.f32 %v3964, %v4060
        %v4062 = vpop.f32.mrb[0].mxu0
        %4063 = vmatprep.mubr.bf16.mxu0 %v3296
        %4064 = vmatmul.mubr.bf16.gmra.mrb[0].mxu0 %v3264
        %v4065 = vpop.f32.mrb[0].mxu0
        %v4066 = vadd.f32 %v3969, %v4065
        %v4067 = vpop.f32.mrb[0].mxu0
        %v4068 = vpop.f32.mrb[0].mxu0
        %v4069 = vadd.f32 %v3972, %v4068
        %v4070 = vpop.f32.mrb[0].mxu0
        %4071 = vmatprep.mubr.bf16.mxu0 %v3329
        %4072 = vmatmul.mubr.bf16.gmra.mrb[0].mxu0 %v3325
        %v4073 = vpop.f32.mrb[0].mxu0
        %v4074 = vadd.f32 %v3977, %v4073
        %v4075 = vpop.f32.mrb[0].mxu0
        %v4076 = vpop.f32.mrb[0].mxu0
        %v4077 = vadd.f32 %v3980, %v4076
        %v4078 = vpop.f32.mrb[0].mxu0
        %4079 = vdwg.mxu0
        %4080 = vmatprep.subr.bf16.mxu0 0
        %4081 = vmatpush1.bf16.msra.mxu0 %v3693
        %4082 = vmatprep.subr.bf16.mxu0 0
        %4083 = vmatpush1.bf16.msra.mxu0 %v3694
        %4084 = vmatprep.subr.bf16.mxu0 0
        %4085 = vmatpush1.bf16.msra.mxu0 %v3695
        %4086 = vmatprep.subr.bf16.mxu0 0
        %4087 = vmatpush1.bf16.msra.mxu0 %v3696
        %4088 = vmatprep.subr.bf16.mxu0 0
        %4089 = vmatpush1.bf16.msra.mxu0 %v3697
        %4090 = vmatprep.subr.bf16.mxu0 0
        %4091 = vmatpush1.bf16.msra.mxu0 %v3698
        %4092 = vmatprep.subr.bf16.mxu0 0
        %4093 = vmatpush1.bf16.msra.mxu0 %v3699
        %4094 = vmatprep.subr.bf16.mxu0 0
        %4095 = vmatpush1.bf16.msra.mxu0 %v3700
        %4096 = vmatprep.subr.bf16.mxu0 0
        %4097 = vmatpush1.bf16.msra.mxu0 %v3701
        %4098 = vmatprep.subr.bf16.mxu0 0
        %4099 = vmatpush1.bf16.msra.mxu0 %v3702
        %4100 = vmatprep.subr.bf16.mxu0 0
        %4101 = vmatpush1.bf16.msra.mxu0 %v3703
        %4102 = vmatprep.subr.bf16.mxu0 0
        %4103 = vmatpush1.bf16.msra.mxu0 %v3704
        %4104 = vmatprep.subr.bf16.mxu0 0
        %4105 = vmatpush1.bf16.msra.mxu0 %v3705
        %4106 = vmatprep.subr.bf16.mxu0 0
        %4107 = vmatpush1.bf16.msra.mxu0 %v3706
        %4108 = vmatprep.subr.bf16.mxu0 0
        %4109 = vmatpush1.bf16.msra.mxu0 %v3707
        %4110 = vmatprep.subr.bf16.mxu0 0
        %4111 = vmatpush1.bf16.msra.mxu0 %v3708
        %4112 = vmatprep.mubr.bf16.mxu0 %v3204
        %4113 = vmatmul.mubr.bf16.gmra.mrb[0].mxu0 %v3131
        %v4114 = vpop.f32.mrb[0].mxu0
        %v4115 = vadd.f32 %v4018, %v4114
        %v4116 = vpop.f32.mrb[0].mxu0
        %v4117 = vpop.f32.mrb[0].mxu0
        %v4118 = vadd.f32 %v4021, %v4117
        %v4119 = vpop.f32.mrb[0].mxu0
        %4120 = vmatprep.mubr.bf16.mxu0 %v3216
        %4121 = vmatmul.mubr.bf16.gmra.mrb[0].mxu0 %v3132
        %v4122 = vpop.f32.mrb[0].mxu0
        %v4123 = vadd.f32 %v4026, %v4122
        %v4124 = vpop.f32.mrb[0].mxu0
        %v4125 = vpop.f32.mrb[0].mxu0
        %v4126 = vadd.f32 %v4029, %v4125
        %v4127 = vpop.f32.mrb[0].mxu0
        %4128 = vmatprep.mubr.bf16.mxu0 %v3228
        %4129 = vmatmul.mubr.bf16.gmra.mrb[0].mxu0 %v3133
        %v4130 = vpop.f32.mrb[0].mxu0
        %v4131 = vadd.f32 %v4034, %v4130
        %v4132 = vpop.f32.mrb[0].mxu0
        %v4133 = vpop.f32.mrb[0].mxu0
        %v4134 = vadd.f32 %v4037, %v4133
        %v4135 = vpop.f32.mrb[0].mxu0
        %4136 = vmatprep.mubr.bf16.mxu0 %v3240
        %4137 = vmatmul.mubr.bf16.gmra.mrb[0].mxu0 %v3134
        %v4138 = vpop.f32.mrb[0].mxu0
        %v4139 = vadd.f32 %v4042, %v4138
        %v4140 = vpop.f32.mrb[0].mxu0
        %v4141 = vpop.f32.mrb[0].mxu0
        %v4142 = vadd.f32 %v4045, %v4141
        %v4143 = vpop.f32.mrb[0].mxu0
        %4144 = vmatprep.mubr.bf16.mxu0 %v3252
        %4145 = vmatmul.mubr.bf16.gmra.mrb[0].mxu0 %v3135
        %v4146 = vpop.f32.mrb[0].mxu0
        %v4147 = vadd.f32 %v4050, %v4146
        %v4148 = vpop.f32.mrb[0].mxu0
        %v4149 = vpop.f32.mrb[0].mxu0
        %v4150 = vadd.f32 %v4053, %v4149
        %v4151 = vpop.f32.mrb[0].mxu0
        %4152 = vmatprep.mubr.bf16.mxu0 %v3264
        %4153 = vmatmul.mubr.bf16.gmra.mrb[0].mxu0 %v3136
        %v4154 = vpop.f32.mrb[0].mxu0
        %v4155 = vadd.f32 %v4058, %v4154
        %v4156 = vpop.f32.mrb[0].mxu0
        %v4157 = vpop.f32.mrb[0].mxu0
        %v4158 = vadd.f32 %v4061, %v4157
        %v4159 = vpop.f32.mrb[0].mxu0
        %4160 = vmatprep.mubr.bf16.mxu0 %v3325
        %4161 = vmatmul.mubr.bf16.gmra.mrb[0].mxu0 %v3309
        %v4162 = vpop.f32.mrb[0].mxu0
        %v4163 = vadd.f32 %v4066, %v4162
        %v4164 = vpop.f32.mrb[0].mxu0
        %v4165 = vpop.f32.mrb[0].mxu0
        %v4166 = vadd.f32 %v4069, %v4165
        %v4167 = vpop.f32.mrb[0].mxu0
        %4168 = vmatprep.mubr.bf16.mxu0 %v3351
        %4169 = vmatmul.mubr.bf16.gmra.mrb[0].mxu0 %v3335
        %v4170 = vpop.f32.mrb[0].mxu0
        %v4171 = vadd.f32 %v4074, %v4170
        %v4172 = vpop.f32.mrb[0].mxu0
        %v4173 = vpop.f32.mrb[0].mxu0
        %v4174 = vadd.f32 %v4077, %v4173
        %v4175 = vpop.f32.mrb[0].mxu0
        %4176 = vdwg.mxu0
        %4177 = vmatprep.subr.bf16.mxu0 0
        %4178 = vmatpush1.bf16.msra.mxu0 %v3709
        %4179 = vmatprep.subr.bf16.mxu0 0
        %4180 = vmatpush1.bf16.msra.mxu0 %v3710
        %4181 = vmatprep.subr.bf16.mxu0 0
        %4182 = vmatpush1.bf16.msra.mxu0 %v3711
        %4183 = vmatprep.subr.bf16.mxu0 0
        %4184 = vmatpush1.bf16.msra.mxu0 %v3712
        %4185 = vmatprep.subr.bf16.mxu0 0
        %4186 = vmatpush1.bf16.msra.mxu0 %v3713
        %4187 = vmatprep.subr.bf16.mxu0 0
        %4188 = vmatpush1.bf16.msra.mxu0 %v3714
        %4189 = vmatprep.subr.bf16.mxu0 0
        %4190 = vmatpush1.bf16.msra.mxu0 %v3715
        %4191 = vmatprep.subr.bf16.mxu0 0
        %4192 = vmatpush1.bf16.msra.mxu0 %v3716
        %4193 = vmatprep.subr.bf16.mxu0 0
        %4194 = vmatpush1.bf16.msra.mxu0 0
        %4195 = vmatprep.subr.bf16.mxu0 0
        %4196 = vmatpush1.bf16.msra.mxu0 0
        %4197 = vmatprep.subr.bf16.mxu0 0
        %4198 = vmatpush1.bf16.msra.mxu0 0
        %4199 = vmatprep.subr.bf16.mxu0 0
        %4200 = vmatpush1.bf16.msra.mxu0 0
        %4201 = vmatprep.subr.bf16.mxu0 0
        %4202 = vmatpush1.bf16.msra.mxu0 0
        %4203 = vmatprep.subr.bf16.mxu0 0
        %4204 = vmatpush1.bf16.msra.mxu0 0
        %4205 = vmatprep.subr.bf16.mxu0 0
        %4206 = vmatpush1.bf16.msra.mxu0 0
        %4207 = vmatprep.subr.bf16.mxu0 0
        %4208 = vmatpush1.bf16.msra.mxu0 0
        %4209 = vmatprep.mubr.bf16.mxu0 0
        %4210 = vmatmul.mubr.bf16.gmra.mrb[0].mxu0 %v3281
        %v4211 = vpop.f32.mrb[0].mxu0
        %v4212 = vadd.f32 %v4115, %v4211
        %v4213 = vpop.f32.mrb[0].mxu0
        %v4214 = vpop.f32.mrb[0].mxu0
        %v4215 = vadd.f32 %v4118, %v4214
        %v4216 = vpop.f32.mrb[0].mxu0
        %4217 = vmatprep.mubr.bf16.mxu0 0
        %4218 = vmatmul.mubr.bf16.gmra.mrb[0].mxu0 %v3284
        %v4219 = vpop.f32.mrb[0].mxu0
        %v4220 = vadd.f32 %v4123, %v4219
        %v4221 = vpop.f32.mrb[0].mxu0
        %v4222 = vpop.f32.mrb[0].mxu0
        %v4223 = vadd.f32 %v4126, %v4222
        %v4224 = vpop.f32.mrb[0].mxu0
        %4225 = vmatprep.mubr.bf16.mxu0 0
        %4226 = vmatmul.mubr.bf16.gmra.mrb[0].mxu0 %v3287
        %v4227 = vpop.f32.mrb[0].mxu0
        %v4228 = vadd.f32 %v4131, %v4227
        %v4229 = vpop.f32.mrb[0].mxu0
        %v4230 = vpop.f32.mrb[0].mxu0
        %v4231 = vadd.f32 %v4134, %v4230
        %v4232 = vpop.f32.mrb[0].mxu0
        %4233 = vmatprep.mubr.bf16.mxu0 0
        %4234 = vmatmul.mubr.bf16.gmra.mrb[0].mxu0 %v3290
        %v4235 = vpop.f32.mrb[0].mxu0
        %v4236 = vadd.f32 %v4139, %v4235
        %v4237 = vpop.f32.mrb[0].mxu0
        %v4238 = vpop.f32.mrb[0].mxu0
        %v4239 = vadd.f32 %v4142, %v4238
        %v4240 = vpop.f32.mrb[0].mxu0
        %4241 = vmatprep.mubr.bf16.mxu0 0
        %4242 = vmatmul.mubr.bf16.gmra.mrb[0].mxu0 %v3293
        %v4243 = vpop.f32.mrb[0].mxu0
        %v4244 = vadd.f32 %v4147, %v4243
        %v4245 = vpop.f32.mrb[0].mxu0
        %v4246 = vpop.f32.mrb[0].mxu0
        %v4247 = vadd.f32 %v4150, %v4246
        %v4248 = vpop.f32.mrb[0].mxu0
        %4249 = vmatprep.mubr.bf16.mxu0 0
        %4250 = vmatmul.mubr.bf16.gmra.mrb[0].mxu0 %v3296
        %v4251 = vpop.f32.mrb[0].mxu0
        %v4252 = vadd.f32 %v4155, %v4251
        %v4253 = vpop.f32.mrb[0].mxu0
        %v4254 = vpop.f32.mrb[0].mxu0
        %v4255 = vadd.f32 %v4158, %v4254
        %v4256 = vpop.f32.mrb[0].mxu0
        %4257 = vmatprep.mubr.bf16.mxu0 0
        %4258 = vmatmul.mubr.bf16.gmra.mrb[0].mxu0 %v3329
        %v4259 = vpop.f32.mrb[0].mxu0
        %v4260 = vadd.f32 %v4163, %v4259
        %v4261 = vpop.f32.mrb[0].mxu0
        %v4262 = vpop.f32.mrb[0].mxu0
        %v4263 = vadd.f32 %v4166, %v4262
        %v4264 = vpop.f32.mrb[0].mxu0
        %4265 = vmatprep.mubr.bf16.mxu0 0
        %4266 = vmatmul.mubr.bf16.gmra.mrb[0].mxu0 %v3355
        %v4267 = vpop.f32.mrb[0].mxu0
        %v4268 = vadd.f32 %v4171, %v4267
        %v4269 = vpop.f32.mrb[0].mxu0
        %v4270 = vpop.f32.mrb[0].mxu0
        %v4271 = vadd.f32 %v4174, %v4270
        %v4272 = vpop.f32.mrb[0].mxu0
        %4273 = vdwg.mxu0
        %v4274 = vld [vmem:[%s6] sm:$0x1]
        %v4276 = vlaneseq
        %v4277 = vshrl.u32 %v4276, 7
        %v4278 = vsub.s32 0, %v4277
        %v4279 = vrot.slane %v4274, %v4278
        %v4281 = vadd.f32 %v4212, %v4279
        %v4282 = vadd.f32 %v4215, %v4279
        %v4283 = vadd.f32 %v4220, %v4279
        %v4284 = vadd.f32 %v4223, %v4279
        %v4285 = vadd.f32 %v4228, %v4279
        %v4286 = vadd.f32 %v4231, %v4279
        %v4287 = vadd.f32 %v4236, %v4279
        %v4288 = vadd.f32 %v4239, %v4279
        %v4289 = vadd.f32 %v4244, %v4279
        %v4290 = vadd.f32 %v4247, %v4279
        %v4291 = vadd.f32 %v4252, %v4279
        %v4292 = vadd.f32 %v4255, %v4279
        %v4293 = vadd.f32 %v4260, %v4279
        %v4294 = vadd.f32 %v4263, %v4279
        %v4295 = vadd.f32 %v4268, %v4279
        %v4296 = vadd.f32 %v4271, %v4279
        %v4297 = vadd.f32 %v4281, %v446
        %v4298 = vadd.f32 %v4282, %v447
        %v4299 = vadd.f32 %v4283, %v448
        %v4300 = vadd.f32 %v4284, %v449
        %v4301 = vadd.f32 %v4285, %v450
        %v4302 = vadd.f32 %v4286, %v451
        %v4303 = vadd.f32 %v4287, %v452
        %v4304 = vadd.f32 %v4288, %v453
        %v4305 = vadd.f32 %v4289, %v454
        %v4306 = vadd.f32 %v4290, %v455
        %v4307 = vadd.f32 %v4291, %v456
        %v4308 = vadd.f32 %v4292, %v457
        %v4309 = vadd.f32 %v4293, %v458
        %v4310 = vadd.f32 %v4294, %v459
        %v4311 = vadd.f32 %v4295, %v460
        %v4312 = vadd.f32 %v4296, %v461
        %v4313 = vmax.f32 %v4297, 0.0
        %v4314 = vmax.f32 %v4298, 0.0
        %v4315 = vmax.f32 %v4299, 0.0
        %v4316 = vmax.f32 %v4300, 0.0
        %v4317 = vmax.f32 %v4301, 0.0
        %v4318 = vmax.f32 %v4302, 0.0
        %v4319 = vmax.f32 %v4303, 0.0
        %v4320 = vmax.f32 %v4304, 0.0
        %v4321 = vmax.f32 %v4305, 0.0
        %v4322 = vmax.f32 %v4306, 0.0
        %v4323 = vmax.f32 %v4307, 0.0
        %v4324 = vmax.f32 %v4308, 0.0
        %v4325 = vmax.f32 %v4309, 0.0
        %v4326 = vmax.f32 %v4310, 0.0
        %v4327 = vmax.f32 %v4311, 0.0
        %v4328 = vmax.f32 %v4312, 0.0
        %4329 = vst [vmem:[%s394] sm:$0xff] %v4313
        %4330 = vst [vmem:[%s394 + $0x8] sm:$0xff] %v4314
        %4331 = vst [vmem:[%s394 + $0x10] sm:$0xff] %v4315
        %4332 = vst [vmem:[%s394 + $0x18] sm:$0xff] %v4316
        %4333 = vst [vmem:[%s394 + $0x20] sm:$0xff] %v4317
        %4334 = vst [vmem:[%s394 + $0x28] sm:$0xff] %v4318
        %4335 = vst [vmem:[%s394 + $0x30] sm:$0xff] %v4319
        %4336 = vst [vmem:[%s394 + $0x38] sm:$0xff] %v4320
        %4337 = vst [vmem:[%s394 + $0x40] sm:$0xff] %v4321
        %4338 = vst [vmem:[%s394 + $0x48] sm:$0xff] %v4322
        %4339 = vst [vmem:[%s394 + $0x50] sm:$0xff] %v4323
        %4340 = vst [vmem:[%s394 + $0x58] sm:$0xff] %v4324
        %4341 = vst [vmem:[%s394 + $0x60] sm:$0xff] %v4325
        %4342 = vst [vmem:[%s394 + $0x68] sm:$0xff] %v4326
        %4343 = vst [vmem:[%s394 + $0x70] sm:$0xff] %v4327
        %4344 = vst [vmem:[%s394 + $0x78] sm:$0xff] %v4328
        %s4345 = sand.u32 %s227, 1
        %s4346 = scalar_lea.sflag [#allocation5], %s4345
        %s4347 = sand.u32 %s227, 1
        %s4348 = smul.addr %s4347, 128
        %s4349 = scalar_lea.vmem [#allocation4], %s4348
        // Predicated region
        $region49: #{basic_block_pallas.1} parent=47 // pred_check
          %p4350 = pneg %p237
        $region50: #{basic_block_pallas.1} parent=47 // pred_check_branch
          %4352 = sbr.rel (%p4350) target = $region52
        $region51: #{basic_block_pallas.1} parent=47 // pred_region
          %s4353 = smul.u32 8, %s26
          %s4355 = ssub.s32 2048, 2048
          %4356 = vsyncadd %s4346, %s4355
          %s4357 = smul.addr %s4353, 2
          %s4358 = smul.addr %s25, 32
          %s4359 = sadd.s32 %s4357, %s4358
          %s4360 = smul.addr %s4359, 128
          %s4361 = scalar_lea.hbm %s7, %s4360
          %s4362 = sshll.u32 %s4349, 4
          %s4363 = int_to_ptr.vmem [resolvable:$true] %s4362
          %4368 = dma.vmem_to_hbm [thread:$0]  %s4363, 2048, %s4361, %s4346, 128, 128, 8
        $region52: #{basic_block_pallas.1} parent=47 // pred_fallthru
          _
      $region48: #{basic_block_pallas.1} parent=5 // pred_fallthru
        _
      %p4369 = scmp.le.s32.totalorder 2, %s16
      // Predicated region
      $region53: #{basic_block_pallas.1} parent=5 // pred_check
        %p4370 = pneg %p4369
      $region54: #{basic_block_pallas.1} parent=5 // pred_check_branch
        %4372 = sbr.rel (%p4370) target = $region56
      $region55: #{basic_block_pallas.1} parent=5 // pred_region
        %s4373 = ssub.s32 %s16, 2
        // Predicated region
        $region57: #{basic_block_pallas.1} parent=55 // pred_check
          %p4374 = pneg %p243
        $region58: #{basic_block_pallas.1} parent=55 // pred_check_branch
          %4376 = sbr.rel (%p4374) target = $region60
        $region59: #{basic_block_pallas.1} parent=55 // pred_region
          %s4377 = sand.u32 %s228, 1
          %s4378 = scalar_lea.sflag [#allocation5], %s4377
          %s4379 = sand.u32 %s228, 1
          %s4380 = smul.addr %s4379, 128
          %s4381 = scalar_lea.vmem [#allocation4], %s4380
          %4382 = dma.done %s4378, 2048
        $region60: #{basic_block_pallas.1} parent=55 // pred_fallthru
          _
      $region56: #{basic_block_pallas.1} parent=5 // pred_fallthru
        _
    $region6: #{basic_block_pallas.1} parent=1 // loop_footer
      %s20 = sadd.s32 1, %s16
    $region7: #{basic_block_pallas.1} parent=1 // loop_footer_branch
      %15 = sbr.rel target = $region3
    $region8: #{basic_block_pallas.1} parent=1 // loop_exit
      _
    %4383 = vsyncpa [#allocation5], 1
    %s4384 = scalar_lea.sflag [#allocation5], 1
    %4385 = vsyncpa %s4384, 1

</llo_original>
